<compile_context>
chip_gen: v7x
topology: tpu7x:2x2x1
jax: 0.10.0
libtpu: 0.0.40
codegen_flags: <defaults>
</compile_context>

<pallas_src>
import jax
import jax.numpy as jnp
from jax.experimental import pallas as pl
from jax.experimental.pallas import tpu as pltpu
import numpy as np

ENCODER_SIZES = [12, 10, 8, 6, 4]
DECODER_SIZES = ENCODER_SIZES[::-1]          # [4, 6, 8, 10, 12]

IN_DIM = ENCODER_SIZES[0]                    # 12
OUT_DIM = DECODER_SIZES[-1]                  # 12
PAD = 16                                     # uniform padded feature width


def _layer_plan():
    """Returns list of (in_dim, out_dim, has_prelu) for encoder then decoder."""
    plan = []
    for sizes in (ENCODER_SIZES, DECODER_SIZES):
        pairs = list(zip(sizes[:-1], sizes[1:]))
        for idx, (m, n) in enumerate(pairs):
            has_prelu = idx < len(pairs) - 1   # last PReLU of each stack popped
            plan.append((m, n, has_prelu))
    return plan


LAYER_PLAN = _layer_plan()
NUM_LAYERS = len(LAYER_PLAN)                 # 8 linear layers, 6 PReLUs


# -----------------------------------------------------------------------------
# Kernel
# -----------------------------------------------------------------------------
def autoencoder_kernel(x_ref, w_ref, b_ref, a_ref, o_ref):
    """One batch tile (batch on the LANE axis) through all 8 Linear(+PReLU) layers.

    x_ref : (PAD, TILE_B)               f32  zero-padded features (rows 12..15 = 0)
    w_ref : (NUM_LAYERS, PAD, PAD)      f32  zero-padded (out, in) weights
    b_ref : (NUM_LAYERS, PAD, 1)        f32  zero-padded biases
    a_ref : (NUM_LAYERS, PAD, 1)        f32  zero-padded PReLU alphas
    o_ref : (OUT_DIM, TILE_B)           f32
    """
    h = x_ref[...]                                            # (PAD, TILE_B)

    # Unrolled, fully homogeneous layer chain: padded weight rows/cols, biases
    # and alphas are zero, so padding rows of h stay exactly 0 throughout.
    for l, (_, _, has_prelu) in enumerate(LAYER_PLAN):
        w = w_ref[l]                                          # (PAD, PAD) (out,in)
        b = b_ref[l]                                          # (PAD, 1) lane bcast
        h = jnp.dot(w, h, preferred_element_type=jnp.float32) + b
        if has_prelu:
            alpha = a_ref[l]                                  # (PAD, 1) lane bcast
            h = jnp.where(h >= 0.0, h, alpha * h)

    o_ref[...] = h[:OUT_DIM, :].astype(o_ref.dtype)


# -----------------------------------------------------------------------------
# Parameter construction / packing
# -----------------------------------------------------------------------------
def init_params(key):
    """Deterministic synthetic init (torch-style (out, in) weights)."""
    ws, bs, als = [], [], []
    for (m, n, has_prelu) in LAYER_PLAN:
        key, wk, bk, ak = jax.random.split(key, 4)
        w = 0.02 * jax.random.normal(wk, (n, m), dtype=jnp.float32)   # (out, in)
        b = 0.02 * jax.random.normal(bk, (n,), dtype=jnp.float32)
        if has_prelu:
            a = 0.25 + 0.05 * jax.random.normal(ak, (n,), dtype=jnp.float32)
        else:
            a = None
        ws.append(w)
        bs.append(b)
        als.append(a)
    return ws, bs, als


def pack_params(ws, bs, als):
    """Pack per-layer params into three zero-padded slabs (VMEM-resident)."""
    w_packed = np.zeros((NUM_LAYERS, PAD, PAD), dtype=np.float32)
    b_packed = np.zeros((NUM_LAYERS, PAD, 1), dtype=np.float32)
    a_packed = np.zeros((NUM_LAYERS, PAD, 1), dtype=np.float32)
    for l, ((m, n, has_prelu), w, b, a) in enumerate(zip(LAYER_PLAN, ws, bs, als)):
        w_packed[l, :n, :m] = np.asarray(w)                  # (out, in)
        b_packed[l, :n, 0] = np.asarray(b)
        if has_prelu:
            a_packed[l, :n, 0] = np.asarray(a)
    return jnp.asarray(w_packed), jnp.asarray(b_packed), jnp.asarray(a_packed)


# -----------------------------------------------------------------------------
# Wrapper
# -----------------------------------------------------------------------------
def autoencoder_forward(x, w_packed, b_packed, a_packed, *, tile_b=4096):
    """x: (B, 12) f32  ->  (B, 12) f32.  Layout plumbing done here, not in-kernel."""
    B = x.shape[0]
    if tile_b >= B:
        tile_b = B                               # single step; block == full dim
    else:
        tile_b = max(128, (tile_b // 128) * 128)  # lane-dense block constraint

    grid = (pl.cdiv(B, tile_b),)

    # One-time transpose + zero-pad: features -> sublanes, batch -> lanes.
    x_t = jnp.pad(x.astype(jnp.float32).T, ((0, PAD - IN_DIM), (0, 0)))  # (PAD, B)

    flops = 2 * B * sum(m * n for (m, n, _) in LAYER_PLAN)
    bytes_accessed = 4 * (B * PAD + B * OUT_DIM
                          + w_packed.size + b_packed.size + a_packed.size)

    out_t = pl.pallas_call(
        autoencoder_kernel,
        out_shape=jax.ShapeDtypeStruct((OUT_DIM, B), jnp.float32),
        grid_spec=pltpu.PrefetchScalarGridSpec(
            num_scalar_prefetch=0,
            grid=grid,
            in_specs=[
                # Batch-tiled input, batch on lanes: new block each grid step.
                pl.BlockSpec((PAD, tile_b), lambda i: (0, i)),
                # Params: constant block index -> loaded once, VMEM-resident.
                pl.BlockSpec((NUM_LAYERS, PAD, PAD), lambda i: (0, 0, 0)),
                pl.BlockSpec((NUM_LAYERS, PAD, 1), lambda i: (0, 0, 0)),
                pl.BlockSpec((NUM_LAYERS, PAD, 1), lambda i: (0, 0, 0)),
            ],
            # Lane-dense output: unmasked full-width stores.
            out_specs=pl.BlockSpec((OUT_DIM, tile_b), lambda i: (0, i)),
        ),
        compiler_params=pltpu.CompilerParams(
            # Batch steps are independent -> megacore-shardable (v7x: 2 TCs).
            dimension_semantics=("parallel",),
            vmem_limit_bytes=32 * 1024 * 1024,
        ),
        cost_estimate=pl.CostEstimate(
            flops=flops, transcendentals=0, bytes_accessed=bytes_accessed),
    )(x_t, w_packed, b_packed, a_packed)

    return out_t.T                                           # back to (B, OUT_DIM)


# -----------------------------------------------------------------------------
# Pure-JAX reference (unpadded) for correctness check
# -----------------------------------------------------------------------------
def autoencoder_reference(x, ws, bs, als):
    h = x.astype(jnp.float32)
    for (_, _, has_prelu), w, b, a in zip(LAYER_PLAN, ws, bs, als):
        h = h @ w.T + b                                      # w is (out, in)
        if has_prelu:
            h = jnp.where(h >= 0.0, h, a * h)
    return h


if __name__ == "__main__":
    key = jax.random.PRNGKey(0)
    key, xk = jax.random.split(key)

    # Demo: 4096 rows / 12 features, 2048 rows per grid step -> 2 grid steps,
    # so the batch pipeline and the "parallel" (megacore) axis are exercised.
    B = 4096
    TILE_B = 2048
    x = jax.random.normal(xk, (B, IN_DIM), dtype=jnp.float32)

    ws, bs, als = init_params(key)
    w_packed, b_packed, a_packed = pack_params(ws, bs, als)

    out = autoencoder_forward(x, w_packed, b_packed, a_packed, tile_b=TILE_B)
    out = jax.block_until_ready(out)

    ref = autoencoder_reference(x, ws, bs, als)
    np.testing.assert_allclose(np.asarray(out), np.asarray(ref),
                               rtol=1e-5, atol=1e-5)

    print("KERNEL_OK")
</pallas_src>

<mosaic_0001>
module attributes {stable_mosaic.version = 11 : i64} {
  func.func @autoencoder_kernel(%arg0: i32, %arg1: memref<16x2048xf32, #tpu.memory_space<vmem>>, %arg2: memref<8x16x16xf32, #tpu.memory_space<vmem>>, %arg3: memref<8x16x1xf32, #tpu.memory_space<vmem>>, %arg4: memref<8x16x1xf32, #tpu.memory_space<vmem>>, %arg5: memref<12x2048xf32, #tpu.memory_space<vmem>>) attributes {dimension_semantics = [#tpu.dimension_semantics<parallel>], iteration_bounds = array<i64: 2>, scalar_prefetch = 0 : i64, scratch_operands = 0 : i64, tpu.core_type = #tpu.core_type<tc>, window_params = [{transform_indices = @transform_0, window_bounds = array<i64: 16, 2048>}, {pipeline_mode = #tpu.pipeline_mode<synchronous>, transform_indices = @transform_1, window_bounds = array<i64: 8, 16, 16>}, {pipeline_mode = #tpu.pipeline_mode<synchronous>, transform_indices = @transform_2, window_bounds = array<i64: 8, 16, 1>}, {pipeline_mode = #tpu.pipeline_mode<synchronous>, transform_indices = @transform_3, window_bounds = array<i64: 8, 16, 1>}, {transform_indices = @transform_4, window_bounds = array<i64: 12, 2048>}]} {
    %c0 = arith.constant 0 : index
    %c0_0 = arith.constant 0 : index
    %0 = vector.load %arg1[%c0, %c0_0] : memref<16x2048xf32, #tpu.memory_space<vmem>>, vector<16x2048xf32>
    %c0_1 = arith.constant 0 : index
    %c0_2 = arith.constant 0 : index
    %c0_3 = arith.constant 0 : index
    %1 = vector.load %arg2[%c0_1, %c0_2, %c0_3] : memref<8x16x16xf32, #tpu.memory_space<vmem>>, vector<1x16x16xf32>
    %2 = vector.shape_cast %1 : vector<1x16x16xf32> to vector<16x16xf32>
    %c0_4 = arith.constant 0 : index
    %c0_5 = arith.constant 0 : index
    %c0_6 = arith.constant 0 : index
    %3 = vector.load %arg3[%c0_4, %c0_5, %c0_6] : memref<8x16x1xf32, #tpu.memory_space<vmem>>, vector<1x16x1xf32>
    %4 = vector.shape_cast %3 : vector<1x16x1xf32> to vector<16x1xf32>
    %cst = arith.constant dense<0.000000e+00> : vector<16x2048xf32>
    %5 = tpu.matmul %2, %0, %cst {dimension_numbers = #tpu.dot_dimension_numbers<[1], [0], [0], [1], [0, 0, 1, 1], [], []>} : vector<16x16xf32>, vector<16x2048xf32>, vector<16x2048xf32> -> vector<16x2048xf32>
    %6 = vector.broadcast %4 : vector<16x1xf32> to vector<16x2048xf32>
    %7 = arith.addf %5, %6 : vector<16x2048xf32>
    %c0_7 = arith.constant 0 : index
    %c0_8 = arith.constant 0 : index
    %c0_9 = arith.constant 0 : index
    %8 = vector.load %arg4[%c0_7, %c0_8, %c0_9] : memref<8x16x1xf32, #tpu.memory_space<vmem>>, vector<1x16x1xf32>
    %9 = vector.shape_cast %8 : vector<1x16x1xf32> to vector<16x1xf32>
    %cst_10 = arith.constant 0.000000e+00 : f32
    %10 = vector.broadcast %cst_10 : f32 to vector<16x2048xf32>
    %11 = arith.cmpf oge, %7, %10 : vector<16x2048xf32>
    %12 = vector.broadcast %9 : vector<16x1xf32> to vector<16x2048xf32>
    %13 = arith.mulf %12, %7 : vector<16x2048xf32>
    %14 = arith.select %11, %7, %13 : vector<16x2048xi1>, vector<16x2048xf32>
    %c1 = arith.constant 1 : index
    %c0_11 = arith.constant 0 : index
    %c0_12 = arith.constant 0 : index
    %15 = vector.load %arg2[%c1, %c0_11, %c0_12] : memref<8x16x16xf32, #tpu.memory_space<vmem>>, vector<1x16x16xf32>
    %16 = vector.shape_cast %15 : vector<1x16x16xf32> to vector<16x16xf32>
    %c1_13 = arith.constant 1 : index
    %c0_14 = arith.constant 0 : index
    %c0_15 = arith.constant 0 : index
    %17 = vector.load %arg3[%c1_13, %c0_14, %c0_15] : memref<8x16x1xf32, #tpu.memory_space<vmem>>, vector<1x16x1xf32>
    %18 = vector.shape_cast %17 : vector<1x16x1xf32> to vector<16x1xf32>
    %cst_16 = arith.constant dense<0.000000e+00> : vector<16x2048xf32>
    %19 = tpu.matmul %16, %14, %cst_16 {dimension_numbers = #tpu.dot_dimension_numbers<[1], [0], [0], [1], [0, 0, 1, 1], [], []>} : vector<16x16xf32>, vector<16x2048xf32>, vector<16x2048xf32> -> vector<16x2048xf32>
    %20 = vector.broadcast %18 : vector<16x1xf32> to vector<16x2048xf32>
    %21 = arith.addf %19, %20 : vector<16x2048xf32>
    %c1_17 = arith.constant 1 : index
    %c0_18 = arith.constant 0 : index
    %c0_19 = arith.constant 0 : index
    %22 = vector.load %arg4[%c1_17, %c0_18, %c0_19] : memref<8x16x1xf32, #tpu.memory_space<vmem>>, vector<1x16x1xf32>
    %23 = vector.shape_cast %22 : vector<1x16x1xf32> to vector<16x1xf32>
    %cst_20 = arith.constant 0.000000e+00 : f32
    %24 = vector.broadcast %cst_20 : f32 to vector<16x2048xf32>
    %25 = arith.cmpf oge, %21, %24 : vector<16x2048xf32>
    %26 = vector.broadcast %23 : vector<16x1xf32> to vector<16x2048xf32>
    %27 = arith.mulf %26, %21 : vector<16x2048xf32>
    %28 = arith.select %25, %21, %27 : vector<16x2048xi1>, vector<16x2048xf32>
    %c2 = arith.constant 2 : index
    %c0_21 = arith.constant 0 : index
    %c0_22 = arith.constant 0 : index
    %29 = vector.load %arg2[%c2, %c0_21, %c0_22] : memref<8x16x16xf32, #tpu.memory_space<vmem>>, vector<1x16x16xf32>
    %30 = vector.shape_cast %29 : vector<1x16x16xf32> to vector<16x16xf32>
    %c2_23 = arith.constant 2 : index
    %c0_24 = arith.constant 0 : index
    %c0_25 = arith.constant 0 : index
    %31 = vector.load %arg3[%c2_23, %c0_24, %c0_25] : memref<8x16x1xf32, #tpu.memory_space<vmem>>, vector<1x16x1xf32>
    %32 = vector.shape_cast %31 : vector<1x16x1xf32> to vector<16x1xf32>
    %cst_26 = arith.constant dense<0.000000e+00> : vector<16x2048xf32>
    %33 = tpu.matmul %30, %28, %cst_26 {dimension_numbers = #tpu.dot_dimension_numbers<[1], [0], [0], [1], [0, 0, 1, 1], [], []>} : vector<16x16xf32>, vector<16x2048xf32>, vector<16x2048xf32> -> vector<16x2048xf32>
    %34 = vector.broadcast %32 : vector<16x1xf32> to vector<16x2048xf32>
    %35 = arith.addf %33, %34 : vector<16x2048xf32>
    %c2_27 = arith.constant 2 : index
    %c0_28 = arith.constant 0 : index
    %c0_29 = arith.constant 0 : index
    %36 = vector.load %arg4[%c2_27, %c0_28, %c0_29] : memref<8x16x1xf32, #tpu.memory_space<vmem>>, vector<1x16x1xf32>
    %37 = vector.shape_cast %36 : vector<1x16x1xf32> to vector<16x1xf32>
    %cst_30 = arith.constant 0.000000e+00 : f32
    %38 = vector.broadcast %cst_30 : f32 to vector<16x2048xf32>
    %39 = arith.cmpf oge, %35, %38 : vector<16x2048xf32>
    %40 = vector.broadcast %37 : vector<16x1xf32> to vector<16x2048xf32>
    %41 = arith.mulf %40, %35 : vector<16x2048xf32>
    %42 = arith.select %39, %35, %41 : vector<16x2048xi1>, vector<16x2048xf32>
    %c3 = arith.constant 3 : index
    %c0_31 = arith.constant 0 : index
    %c0_32 = arith.constant 0 : index
    %43 = vector.load %arg2[%c3, %c0_31, %c0_32] : memref<8x16x16xf32, #tpu.memory_space<vmem>>, vector<1x16x16xf32>
    %44 = vector.shape_cast %43 : vector<1x16x16xf32> to vector<16x16xf32>
    %c3_33 = arith.constant 3 : index
    %c0_34 = arith.constant 0 : index
    %c0_35 = arith.constant 0 : index
    %45 = vector.load %arg3[%c3_33, %c0_34, %c0_35] : memref<8x16x1xf32, #tpu.memory_space<vmem>>, vector<1x16x1xf32>
    %46 = vector.shape_cast %45 : vector<1x16x1xf32> to vector<16x1xf32>
    %cst_36 = arith.constant dense<0.000000e+00> : vector<16x2048xf32>
    %47 = tpu.matmul %44, %42, %cst_36 {dimension_numbers = #tpu.dot_dimension_numbers<[1], [0], [0], [1], [0, 0, 1, 1], [], []>} : vector<16x16xf32>, vector<16x2048xf32>, vector<16x2048xf32> -> vector<16x2048xf32>
    %48 = vector.broadcast %46 : vector<16x1xf32> to vector<16x2048xf32>
    %49 = arith.addf %47, %48 : vector<16x2048xf32>
    %c4 = arith.constant 4 : index
    %c0_37 = arith.constant 0 : index
    %c0_38 = arith.constant 0 : index
    %50 = vector.load %arg2[%c4, %c0_37, %c0_38] : memref<8x16x16xf32, #tpu.memory_space<vmem>>, vector<1x16x16xf32>
    %51 = vector.shape_cast %50 : vector<1x16x16xf32> to vector<16x16xf32>
    %c4_39 = arith.constant 4 : index
    %c0_40 = arith.constant 0 : index
    %c0_41 = arith.constant 0 : index
    %52 = vector.load %arg3[%c4_39, %c0_40, %c0_41] : memref<8x16x1xf32, #tpu.memory_space<vmem>>, vector<1x16x1xf32>
    %53 = vector.shape_cast %52 : vector<1x16x1xf32> to vector<16x1xf32>
    %cst_42 = arith.constant dense<0.000000e+00> : vector<16x2048xf32>
    %54 = tpu.matmul %51, %49, %cst_42 {dimension_numbers = #tpu.dot_dimension_numbers<[1], [0], [0], [1], [0, 0, 1, 1], [], []>} : vector<16x16xf32>, vector<16x2048xf32>, vector<16x2048xf32> -> vector<16x2048xf32>
    %55 = vector.broadcast %53 : vector<16x1xf32> to vector<16x2048xf32>
    %56 = arith.addf %54, %55 : vector<16x2048xf32>
    %c4_43 = arith.constant 4 : index
    %c0_44 = arith.constant 0 : index
    %c0_45 = arith.constant 0 : index
    %57 = vector.load %arg4[%c4_43, %c0_44, %c0_45] : memref<8x16x1xf32, #tpu.memory_space<vmem>>, vector<1x16x1xf32>
    %58 = vector.shape_cast %57 : vector<1x16x1xf32> to vector<16x1xf32>
    %cst_46 = arith.constant 0.000000e+00 : f32
    %59 = vector.broadcast %cst_46 : f32 to vector<16x2048xf32>
    %60 = arith.cmpf oge, %56, %59 : vector<16x2048xf32>
    %61 = vector.broadcast %58 : vector<16x1xf32> to vector<16x2048xf32>
    %62 = arith.mulf %61, %56 : vector<16x2048xf32>
    %63 = arith.select %60, %56, %62 : vector<16x2048xi1>, vector<16x2048xf32>
    %c5 = arith.constant 5 : index
    %c0_47 = arith.constant 0 : index
    %c0_48 = arith.constant 0 : index
    %64 = vector.load %arg2[%c5, %c0_47, %c0_48] : memref<8x16x16xf32, #tpu.memory_space<vmem>>, vector<1x16x16xf32>
    %65 = vector.shape_cast %64 : vector<1x16x16xf32> to vector<16x16xf32>
    %c5_49 = arith.constant 5 : index
    %c0_50 = arith.constant 0 : index
    %c0_51 = arith.constant 0 : index
    %66 = vector.load %arg3[%c5_49, %c0_50, %c0_51] : memref<8x16x1xf32, #tpu.memory_space<vmem>>, vector<1x16x1xf32>
    %67 = vector.shape_cast %66 : vector<1x16x1xf32> to vector<16x1xf32>
    %cst_52 = arith.constant dense<0.000000e+00> : vector<16x2048xf32>
    %68 = tpu.matmul %65, %63, %cst_52 {dimension_numbers = #tpu.dot_dimension_numbers<[1], [0], [0], [1], [0, 0, 1, 1], [], []>} : vector<16x16xf32>, vector<16x2048xf32>, vector<16x2048xf32> -> vector<16x2048xf32>
    %69 = vector.broadcast %67 : vector<16x1xf32> to vector<16x2048xf32>
    %70 = arith.addf %68, %69 : vector<16x2048xf32>
    %c5_53 = arith.constant 5 : index
    %c0_54 = arith.constant 0 : index
    %c0_55 = arith.constant 0 : index
    %71 = vector.load %arg4[%c5_53, %c0_54, %c0_55] : memref<8x16x1xf32, #tpu.memory_space<vmem>>, vector<1x16x1xf32>
    %72 = vector.shape_cast %71 : vector<1x16x1xf32> to vector<16x1xf32>
    %cst_56 = arith.constant 0.000000e+00 : f32
    %73 = vector.broadcast %cst_56 : f32 to vector<16x2048xf32>
    %74 = arith.cmpf oge, %70, %73 : vector<16x2048xf32>
    %75 = vector.broadcast %72 : vector<16x1xf32> to vector<16x2048xf32>
    %76 = arith.mulf %75, %70 : vector<16x2048xf32>
    %77 = arith.select %74, %70, %76 : vector<16x2048xi1>, vector<16x2048xf32>
    %c6 = arith.constant 6 : index
    %c0_57 = arith.constant 0 : index
    %c0_58 = arith.constant 0 : index
    %78 = vector.load %arg2[%c6, %c0_57, %c0_58] : memref<8x16x16xf32, #tpu.memory_space<vmem>>, vector<1x16x16xf32>
    %79 = vector.shape_cast %78 : vector<1x16x16xf32> to vector<16x16xf32>
    %c6_59 = arith.constant 6 : index
    %c0_60 = arith.constant 0 : index
    %c0_61 = arith.constant 0 : index
    %80 = vector.load %arg3[%c6_59, %c0_60, %c0_61] : memref<8x16x1xf32, #tpu.memory_space<vmem>>, vector<1x16x1xf32>
    %81 = vector.shape_cast %80 : vector<1x16x1xf32> to vector<16x1xf32>
    %cst_62 = arith.constant dense<0.000000e+00> : vector<16x2048xf32>
    %82 = tpu.matmul %79, %77, %cst_62 {dimension_numbers = #tpu.dot_dimension_numbers<[1], [0], [0], [1], [0, 0, 1, 1], [], []>} : vector<16x16xf32>, vector<16x2048xf32>, vector<16x2048xf32> -> vector<16x2048xf32>
    %83 = vector.broadcast %81 : vector<16x1xf32> to vector<16x2048xf32>
    %84 = arith.addf %82, %83 : vector<16x2048xf32>
    %c6_63 = arith.constant 6 : index
    %c0_64 = arith.constant 0 : index
    %c0_65 = arith.constant 0 : index
    %85 = vector.load %arg4[%c6_63, %c0_64, %c0_65] : memref<8x16x1xf32, #tpu.memory_space<vmem>>, vector<1x16x1xf32>
    %86 = vector.shape_cast %85 : vector<1x16x1xf32> to vector<16x1xf32>
    %cst_66 = arith.constant 0.000000e+00 : f32
    %87 = vector.broadcast %cst_66 : f32 to vector<16x2048xf32>
    %88 = arith.cmpf oge, %84, %87 : vector<16x2048xf32>
    %89 = vector.broadcast %86 : vector<16x1xf32> to vector<16x2048xf32>
    %90 = arith.mulf %89, %84 : vector<16x2048xf32>
    %91 = arith.select %88, %84, %90 : vector<16x2048xi1>, vector<16x2048xf32>
    %c7 = arith.constant 7 : index
    %c0_67 = arith.constant 0 : index
    %c0_68 = arith.constant 0 : index
    %92 = vector.load %arg2[%c7, %c0_67, %c0_68] : memref<8x16x16xf32, #tpu.memory_space<vmem>>, vector<1x16x16xf32>
    %93 = vector.shape_cast %92 : vector<1x16x16xf32> to vector<16x16xf32>
    %c7_69 = arith.constant 7 : index
    %c0_70 = arith.constant 0 : index
    %c0_71 = arith.constant 0 : index
    %94 = vector.load %arg3[%c7_69, %c0_70, %c0_71] : memref<8x16x1xf32, #tpu.memory_space<vmem>>, vector<1x16x1xf32>
    %95 = vector.shape_cast %94 : vector<1x16x1xf32> to vector<16x1xf32>
    %cst_72 = arith.constant dense<0.000000e+00> : vector<16x2048xf32>
    %96 = tpu.matmul %93, %91, %cst_72 {dimension_numbers = #tpu.dot_dimension_numbers<[1], [0], [0], [1], [0, 0, 1, 1], [], []>} : vector<16x16xf32>, vector<16x2048xf32>, vector<16x2048xf32> -> vector<16x2048xf32>
    %97 = vector.broadcast %95 : vector<16x1xf32> to vector<16x2048xf32>
    %98 = arith.addf %96, %97 : vector<16x2048xf32>
    %99 = vector.extract_strided_slice %98 {offsets = [0, 0], sizes = [12, 2048], strides = [1, 1]} : vector<16x2048xf32> to vector<12x2048xf32>
    %c0_73 = arith.constant 0 : index
    %c0_74 = arith.constant 0 : index
    %100 = vector.load %arg5[%c0_73, %c0_74] : memref<12x2048xf32, #tpu.memory_space<vmem>>, vector<12x2048xf32>
    tpu.vector_store %arg5[%c0_73, %c0_74], %99 {strides = array<i32>} : memref<12x2048xf32, #tpu.memory_space<vmem>>, vector<12x2048xf32>,
    return
  }
  func.func @transform_0(%arg0: i32) -> (i32, i32) {
    %c0_i32 = arith.constant 0 : i32
    %c0_i32_0 = arith.constant 0 : i32
    return %c0_i32, %arg0 : i32, i32
  }
  func.func @transform_1(%arg0: i32) -> (i32, i32, i32) {
    %c0_i32 = arith.constant 0 : i32
    %c0_i32_0 = arith.constant 0 : i32
    %c0_i32_1 = arith.constant 0 : i32
    %c0_i32_2 = arith.constant 0 : i32
    return %c0_i32, %c0_i32_0, %c0_i32_1 : i32, i32, i32
  }
  func.func @transform_2(%arg0: i32) -> (i32, i32, i32) {
    %c0_i32 = arith.constant 0 : i32
    %c0_i32_0 = arith.constant 0 : i32
    %c0_i32_1 = arith.constant 0 : i32
    %c0_i32_2 = arith.constant 0 : i32
    return %c0_i32, %c0_i32_0, %c0_i32_1 : i32, i32, i32
  }
  func.func @transform_3(%arg0: i32) -> (i32, i32, i32) {
    %c0_i32 = arith.constant 0 : i32
    %c0_i32_0 = arith.constant 0 : i32
    %c0_i32_1 = arith.constant 0 : i32
    %c0_i32_2 = arith.constant 0 : i32
    return %c0_i32, %c0_i32_0, %c0_i32_1 : i32, i32, i32
  }
  func.func @transform_4(%arg0: i32) -> (i32, i32) {
    %c0_i32 = arith.constant 0 : i32
    %c0_i32_0 = arith.constant 0 : i32
    return %c0_i32, %arg0 : i32, i32
  }
}

</mosaic_0001>

<llo_original>
// kernel: tpu_custom_call.1
$region0: #{tpu_custom_call.1}
  #allocation0 [shape = 'u32[]', space=smem, size = 0x4, offset = 0x4, fixed_abs, tag = 'smem constant byte address 0x4 - core index']
  #allocation1 [shape = 'u32[144,128]{1,0:T(1,128)}', space=vmem, size = 0x12000, scoped, tag = 'internal scratch']
  %s0 = inlined_call_operand.hbm [shape: f32[16,4096], index: 0, kind: input, shape index: {}]
  %s1 = inlined_call_operand.vmem [shape: f32[8,16,16], index: 1, kind: input, shape index: {}]
  %s2 = inlined_call_operand.vmem [shape: f32[8,16,1], index: 2, kind: input, shape index: {}]
  %s3 = inlined_call_operand.vmem [shape: f32[8,16,1], index: 3, kind: input, shape index: {}]
  %s4 = inlined_call_operand.hbm [shape: f32[12,4096], index: 4, kind: output, shape index: {}]
  %s5 = sld [smem:[#allocation0]]
  $region53: #{tpu_custom_call.1} parent=0
    _
  %s7 = ssub.s32 1, %s5
  %s8 = scalar_select 0, %s7, %s5
  $region1: #{tpu_custom_call.1} parent=0
    #allocation2 [shape = 'u8[262144]{0}', space=vmem, size = 0x40000, scoped, tag = 'input window, operand 0']
    #allocation3 [shape = 's32[2]{0}', space=sflag, size = 0x8, scoped, tag = 'scoped memory for tpu_custom_call.1']
    #allocation4 [shape = 's32[2]{0}', space=sflag, size = 0x8, scoped, tag = 'scoped memory for tpu_custom_call.1']
    #allocation5 [shape = 'u8[262144]{0}', space=vmem, size = 0x40000, scoped, tag = 'output window, operand 0']
    %9 = vsyncpa [#allocation3], 0
    %s10 = scalar_lea.sflag [#allocation3], 1
    %11 = vsyncpa %s10, 0
    %12 = vsyncpa [#allocation4], 0
    %s13 = scalar_lea.sflag [#allocation4], 1
    %14 = vsyncpa %s13, 0
    loop: start=0, step=1, limit=4
    $region2: #{tpu_custom_call.1} parent=1 // loop_pre_header
      _
    $region3: #{tpu_custom_call.1} parent=1 // loop_header
      %s16 = sphi 0, %s20
      %p17 = scmp.ge.s32.totalorder %s16, 4
      %s26 = sphi 0, %s28
      %s29 = sphi 0, %s26
      %s30 = sphi 0, %s29
      %s46 = sphi 0, %s30
      %s50 = sphi 0, %s50
      %s52 = sphi 0, %s50
      %s53 = sphi 0, %s52
      %s67 = sphi 0, %s53
      %s71 = sphi 0, %s71
      %s73 = sphi 0, %s71
      %s74 = sphi 0, %s73
      %s88 = sphi 0, %s74
      %s92 = sphi 0, %s92
      %s94 = sphi 0, %s92
      %s95 = sphi 0, %s94
      %s109 = sphi 0, %s95
      %s115 = sphi 0, %s117
      %s118 = sphi 0, %s115
      %s119 = sphi 0, %s118
      %s135 = sphi 0, %s119
    $region4: #{tpu_custom_call.1} parent=1 // loop_header_branch
      %19 = sbr.rel (%p17) target = $region8
    $region5: #{tpu_custom_call.1} parent=1 // loop_body
      %s21 = ssub.s32 %s16, 1
      %s22 = ssub.s32 %s16, 2
      %s23 = sadd.s32 %s16, 1
      %s24 = ssub.s32 %s16, %s23
      %p25 = scmp.eq.s32.totalorder %s24, 0
      %s27 = sadd.s32 %s26, 1
      %s28 = scalar_select %p25, %s26, %s27
      %p31 = pneg %p25
      %p32 = scmp.eq.s32.totalorder %s16, 1
      %p33 = por %p31, %p32
      %p34 = scmp.ne.s32.totalorder %s26, %s29
      %p35 = scmp.eq.s32.totalorder %s16, 0
      %p36 = por %p34, %p35
      %p37 = scmp.ne.s32.totalorder %s26, %s29
      %p38 = scmp.eq.s32.totalorder %s21, 1
      %p39 = por %p37, %p38
      %p40 = scmp.ne.s32.totalorder %s29, %s30
      %p41 = scmp.eq.s32.totalorder %s21, 0
      %p42 = por %p40, %p41
      %p43 = scmp.ne.s32.totalorder %s29, %s30
      %p44 = scmp.eq.s32.totalorder %s22, 1
      %p45 = por %p43, %p44
      %p47 = scmp.ne.s32.totalorder %s30, %s46
      %p48 = scmp.eq.s32.totalorder %s22, 0
      %p49 = por %p47, %p48
      %s51 = sadd.s32 %s50, 1
      %p54 = scmp.eq.s32.totalorder %s16, 1
      %p55 = scmp.ne.s32.totalorder %s50, %s52
      %p56 = scmp.eq.s32.totalorder %s16, 0
      %p57 = por %p55, %p56
      %p58 = scmp.ne.s32.totalorder %s50, %s52
      %p59 = scmp.eq.s32.totalorder %s21, 1
      %p60 = por %p58, %p59
      %p61 = scmp.ne.s32.totalorder %s52, %s53
      %p62 = scmp.eq.s32.totalorder %s21, 0
      %p63 = por %p61, %p62
      %p64 = scmp.ne.s32.totalorder %s52, %s53
      %p65 = scmp.eq.s32.totalorder %s22, 1
      %p66 = por %p64, %p65
      %p68 = scmp.ne.s32.totalorder %s53, %s67
      %p69 = scmp.eq.s32.totalorder %s22, 0
      %p70 = por %p68, %p69
      %s72 = sadd.s32 %s71, 1
      %p75 = scmp.eq.s32.totalorder %s16, 1
      %p76 = scmp.ne.s32.totalorder %s71, %s73
      %p77 = scmp.eq.s32.totalorder %s16, 0
      %p78 = por %p76, %p77
      %p79 = scmp.ne.s32.totalorder %s71, %s73
      %p80 = scmp.eq.s32.totalorder %s21, 1
      %p81 = por %p79, %p80
      %p82 = scmp.ne.s32.totalorder %s73, %s74
      %p83 = scmp.eq.s32.totalorder %s21, 0
      %p84 = por %p82, %p83
      %p85 = scmp.ne.s32.totalorder %s73, %s74
      %p86 = scmp.eq.s32.totalorder %s22, 1
      %p87 = por %p85, %p86
      %p89 = scmp.ne.s32.totalorder %s74, %s88
      %p90 = scmp.eq.s32.totalorder %s22, 0
      %p91 = por %p89, %p90
      %s93 = sadd.s32 %s92, 1
      %p96 = scmp.eq.s32.totalorder %s16, 1
      %p97 = scmp.ne.s32.totalorder %s92, %s94
      %p98 = scmp.eq.s32.totalorder %s16, 0
      %p99 = por %p97, %p98
      %p100 = scmp.ne.s32.totalorder %s92, %s94
      %p101 = scmp.eq.s32.totalorder %s21, 1
      %p102 = por %p100, %p101
      %p103 = scmp.ne.s32.totalorder %s94, %s95
      %p104 = scmp.eq.s32.totalorder %s21, 0
      %p105 = por %p103, %p104
      %p106 = scmp.ne.s32.totalorder %s94, %s95
      %p107 = scmp.eq.s32.totalorder %s22, 1
      %p108 = por %p106, %p107
      %p110 = scmp.ne.s32.totalorder %s95, %s109
      %p111 = scmp.eq.s32.totalorder %s22, 0
      %p112 = por %p110, %p111
      %s113 = ssub.s32 %s16, %s23
      %p114 = scmp.eq.s32.totalorder %s113, 0
      %s116 = sadd.s32 %s115, 1
      %s117 = scalar_select %p114, %s115, %s116
      %p120 = pneg %p114
      %p121 = scmp.eq.s32.totalorder %s16, 1
      %p122 = por %p120, %p121
      %p123 = scmp.ne.s32.totalorder %s115, %s118
      %p124 = scmp.eq.s32.totalorder %s16, 0
      %p125 = por %p123, %p124
      %p126 = scmp.ne.s32.totalorder %s115, %s118
      %p127 = scmp.eq.s32.totalorder %s21, 1
      %p128 = por %p126, %p127
      %p129 = scmp.ne.s32.totalorder %s118, %s119
      %p130 = scmp.eq.s32.totalorder %s21, 0
      %p131 = por %p129, %p130
      %p132 = scmp.ne.s32.totalorder %s118, %s119
      %p133 = scmp.eq.s32.totalorder %s22, 1
      %p134 = por %p132, %p133
      %p136 = scmp.ne.s32.totalorder %s119, %s135
      %p137 = scmp.eq.s32.totalorder %s22, 0
      %p138 = por %p136, %p137
      %p139 = scmp.le.s32.totalorder 1, %s16
      %p140 = scmp.lt.s32.totalorder %s16, 3
      %p141 = pnand %p139, %p140
      %p142 = pneg %p141
      // Predicated region
      $region9: #{tpu_custom_call.1} parent=5 // pred_check
        _
      $region10: #{tpu_custom_call.1} parent=5 // pred_check_branch
        %144 = sbr.rel (%p141) target = $region12
      $region11: #{tpu_custom_call.1} parent=5 // pred_region
        %s145 = ssub.s32 %s16, 1
        // Predicated region
        $region13: #{tpu_custom_call.1} parent=11 // pred_check
          %p146 = pneg %p63
        $region14: #{tpu_custom_call.1} parent=11 // pred_check_branch
          %148 = sbr.rel (%p146) target = $region16
        $region15: #{tpu_custom_call.1} parent=11 // pred_region
          _
        $region16: #{tpu_custom_call.1} parent=11 // pred_fallthru
          _
        // Predicated region
        $region17: #{tpu_custom_call.1} parent=11 // pred_check
          %p149 = pneg %p84
        $region18: #{tpu_custom_call.1} parent=11 // pred_check_branch
          %151 = sbr.rel (%p149) target = $region20
        $region19: #{tpu_custom_call.1} parent=11 // pred_region
          _
        $region20: #{tpu_custom_call.1} parent=11 // pred_fallthru
          _
        // Predicated region
        $region21: #{tpu_custom_call.1} parent=11 // pred_check
          %p152 = pneg %p105
        $region22: #{tpu_custom_call.1} parent=11 // pred_check_branch
          %154 = sbr.rel (%p152) target = $region24
        $region23: #{tpu_custom_call.1} parent=11 // pred_region
          _
        $region24: #{tpu_custom_call.1} parent=11 // pred_fallthru
          _
      $region12: #{tpu_custom_call.1} parent=5 // pred_fallthru
        _
      %p155 = scmp.lt.s32.totalorder %s16, 2
      // Predicated region
      $region25: #{tpu_custom_call.1} parent=5 // pred_check
        %p156 = pneg %p155
      $region26: #{tpu_custom_call.1} parent=5 // pred_check_branch
        %158 = sbr.rel (%p156) target = $region28
      $region27: #{tpu_custom_call.1} parent=5 // pred_region
        // Predicated region
        $region29: #{tpu_custom_call.1} parent=27 // pred_check
          %p159 = pneg %p36
        $region30: #{tpu_custom_call.1} parent=27 // pred_check_branch
          %161 = sbr.rel (%p159) target = $region32
        $region31: #{tpu_custom_call.1} parent=27 // pred_region
          %s162 = sand.u32 %s26, 1
          %s163 = scalar_lea.sflag [#allocation3], %s162
          %s164 = sand.u32 %s26, 1
          %s165 = smul.addr %s164, 256
          %s166 = scalar_lea.vmem [#allocation2], %s165
          %s167 = smul.u32 16, %s16
          %s169 = ssub.s32 4096, 4096
          %170 = vsyncadd %s163, %s169
          %s171 = smul.addr %s167, 128
          %s172 = scalar_lea.hbm %s0, %s171
          %s173 = sshll.u32 %s166, 4
          %s174 = int_to_ptr.vmem [resolvable:$true] %s173
          %179 = dma.hbm_to_vmem [thread:$0]  %s172, 4096, %s174, %s163, 4096, 2048, 128
        $region32: #{tpu_custom_call.1} parent=27 // pred_fallthru
          _
      $region28: #{tpu_custom_call.1} parent=5 // pred_fallthru
        _
      %p180 = scmp.le.s32.totalorder 1, %s16
      %p181 = scmp.lt.s32.totalorder %s16, 3
      %p182 = pnand %p180, %p181
      %p183 = pneg %p182
      // Predicated region
      $region33: #{tpu_custom_call.1} parent=5 // pred_check
        _
      $region34: #{tpu_custom_call.1} parent=5 // pred_check_branch
        %185 = sbr.rel (%p182) target = $region36
      $region35: #{tpu_custom_call.1} parent=5 // pred_region
        %s186 = ssub.s32 %s16, 1
        %s187 = sand.u32 %s29, 1
        %s188 = scalar_lea.sflag [#allocation3], %s187
        %s189 = sand.u32 %s29, 1
        %s190 = smul.addr %s189, 256
        %s191 = scalar_lea.vmem [#allocation2], %s190
        // Predicated region
        $region37: #{tpu_custom_call.1} parent=35 // pred_check
          %p192 = pneg %p42
        $region38: #{tpu_custom_call.1} parent=35 // pred_check_branch
          %194 = sbr.rel (%p192) target = $region40
        $region39: #{tpu_custom_call.1} parent=35 // pred_region
          %195 = dma.done %s188, 4096
        $region40: #{tpu_custom_call.1} parent=35 // pred_fallthru
          _
        %s196 = sand.u32 %s29, 1
        %s197 = scalar_lea.sflag [#allocation3], %s196
        %s198 = sand.u32 %s29, 1
        %s199 = smul.addr %s198, 256
        %s200 = scalar_lea.vmem [#allocation2], %s199
        %p201 = pneg %p42
        %p202 = pneg %p39
        %p203 = pneg %p63
        %p204 = pneg %p60
        %p205 = pneg %p84
        %p206 = pneg %p81
        %p207 = pneg %p105
        %p208 = pneg %p102
        %p209 = pneg %p131
        %p210 = pneg %p128
        %s211 = sand.u32 %s118, 1
        %s212 = scalar_lea.sflag [#allocation4], %s211
        %s213 = sand.u32 %s118, 1
        %s214 = smul.addr %s213, 256
        %s215 = scalar_lea.vmem [#allocation5], %s214
        %s216 = smul.u32 16, %s21
        %s217 = smul.u32 16, %s21
        %v218 = vld [vmem:[%s191] sm:$0xff]
        %v219 = vld [vmem:[%s191 + $0x8] sm:$0xff]
        %v220 = vld [vmem:[%s191 + $0x10] sm:$0xff]
        %v221 = vld [vmem:[%s191 + $0x18] sm:$0xff]
        %v222 = vld [vmem:[%s191 + $0x20] sm:$0xff]
        %v223 = vld [vmem:[%s191 + $0x28] sm:$0xff]
        %v224 = vld [vmem:[%s191 + $0x30] sm:$0xff]
        %v225 = vld [vmem:[%s191 + $0x38] sm:$0xff]
        %v226 = vld [vmem:[%s191 + $0x40] sm:$0xff]
        %v227 = vld [vmem:[%s191 + $0x48] sm:$0xff]
        %v228 = vld [vmem:[%s191 + $0x50] sm:$0xff]
        %v229 = vld [vmem:[%s191 + $0x58] sm:$0xff]
        %v230 = vld [vmem:[%s191 + $0x60] sm:$0xff]
        %v231 = vld [vmem:[%s191 + $0x68] sm:$0xff]
        %v232 = vld [vmem:[%s191 + $0x70] sm:$0xff]
        %v233 = vld [vmem:[%s191 + $0x78] sm:$0xff]
        %v234 = vld [vmem:[%s191 + $0x80] sm:$0xff]
        %v235 = vld [vmem:[%s191 + $0x88] sm:$0xff]
        %v236 = vld [vmem:[%s191 + $0x90] sm:$0xff]
        %v237 = vld [vmem:[%s191 + $0x98] sm:$0xff]
        %v238 = vld [vmem:[%s191 + $0xa0] sm:$0xff]
        %v239 = vld [vmem:[%s191 + $0xa8] sm:$0xff]
        %v240 = vld [vmem:[%s191 + $0xb0] sm:$0xff]
        %v241 = vld [vmem:[%s191 + $0xb8] sm:$0xff]
        %v242 = vld [vmem:[%s191 + $0xc0] sm:$0xff]
        %v243 = vld [vmem:[%s191 + $0xc8] sm:$0xff]
        %v244 = vld [vmem:[%s191 + $0xd0] sm:$0xff]
        %v245 = vld [vmem:[%s191 + $0xd8] sm:$0xff]
        %v246 = vld [vmem:[%s191 + $0xe0] sm:$0xff]
        %v247 = vld [vmem:[%s191 + $0xe8] sm:$0xff]
        %v248 = vld [vmem:[%s191 + $0xf0] sm:$0xff]
        %v249 = vld [vmem:[%s191 + $0xf8] sm:$0xff]
        %v250 = vld [vmem:[%s1] sm:$0xff]
        %v251 = vld [vmem:[%s1 + $0x8] sm:$0xff]
        %v252 = vld [vmem:[%s2] sm:$0xff]
        %v253 = vld [vmem:[%s2 + $0x8] sm:$0xff]
        %255 = vset.pattern.permute.xlu0 0
        %256 = vperm.xlu0 %255, %v252
        %v257 = vpop.permute.xlu0 %256
        %260 = vset.pattern.permute.xlu0 0
        %261 = vperm.xlu0 %260, %v253
        %v262 = vpop.permute.xlu0 %261
        %vm264 = vcmask 130048
        %v266 = vsel %vm264, %v250, 0
        %v269 = vsel %vm264, %v251, 0
        %271 = vmatprep.subr.mxu0 %v219
        %272 = vmatpush1.msra.mxu0 %v218
        %273 = vmatprep.subr.mxu0 %v235
        %274 = vmatpush1.msra.mxu0 %v234
        %275 = vmatprep.subr.mxu0 0.0
        %276 = vmatpush1.msra.mxu0 0.0
        %277 = vmatprep.subr.mxu0 0.0
        %278 = vmatpush1.msra.mxu0 0.0
        %279 = vmatprep.subr.mxu0 0.0
        %280 = vmatpush1.msra.mxu0 0.0
        %281 = vmatprep.subr.mxu0 0.0
        %282 = vmatpush1.msra.mxu0 0.0
        %283 = vmatprep.subr.mxu0 0.0
        %284 = vmatpush1.msra.mxu0 0.0
        %285 = vmatprep.subr.mxu0 0.0
        %286 = vmatpush1.msra.mxu0 0.0
        %287 = vmatprep.subr.mxu0 0.0
        %288 = vmatpush1.msra.mxu0 0.0
        %289 = vmatprep.subr.mxu0 0.0
        %290 = vmatpush1.msra.mxu0 0.0
        %291 = vmatprep.subr.mxu0 0.0
        %292 = vmatpush1.msra.mxu0 0.0
        %293 = vmatprep.subr.mxu0 0.0
        %294 = vmatpush1.msra.mxu0 0.0
        %295 = vmatprep.subr.mxu0 0.0
        %296 = vmatpush1.msra.mxu0 0.0
        %297 = vmatprep.subr.mxu0 0.0
        %298 = vmatpush1.msra.mxu0 0.0
        %299 = vmatprep.subr.mxu0 0.0
        %300 = vmatpush1.msra.mxu0 0.0
        %301 = vmatprep.subr.mxu0 0.0
        %302 = vmatpush1.msra.mxu0 0.0
        %303 = vmatprep.subr.mxu0 0.0
        %304 = vmatpush1.msra.mxu0 0.0
        %305 = vmatprep.subr.mxu0 0.0
        %306 = vmatpush1.msra.mxu0 0.0
        %307 = vmatprep.subr.mxu0 0.0
        %308 = vmatpush1.msra.mxu0 0.0
        %309 = vmatprep.subr.mxu0 0.0
        %310 = vmatpush1.msra.mxu0 0.0
        %311 = vmatprep.subr.mxu0 0.0
        %312 = vmatpush1.msra.mxu0 0.0
        %313 = vmatprep.subr.mxu0 0.0
        %314 = vmatpush1.msra.mxu0 0.0
        %315 = vmatprep.subr.mxu0 0.0
        %316 = vmatpush1.msra.mxu0 0.0
        %317 = vmatprep.subr.mxu0 0.0
        %318 = vmatpush1.msra.mxu0 0.0
        %319 = vmatprep.subr.mxu0 0.0
        %320 = vmatpush1.msra.mxu0 0.0
        %321 = vmatprep.subr.mxu0 0.0
        %322 = vmatpush1.msra.mxu0 0.0
        %323 = vmatprep.subr.mxu0 0.0
        %324 = vmatpush1.msra.mxu0 0.0
        %325 = vmatprep.subr.mxu0 0.0
        %326 = vmatpush1.msra.mxu0 0.0
        %327 = vmatprep.subr.mxu0 0.0
        %328 = vmatpush1.msra.mxu0 0.0
        %329 = vmatprep.subr.mxu0 0.0
        %330 = vmatpush1.msra.mxu0 0.0
        %331 = vmatprep.subr.mxu0 0.0
        %332 = vmatpush1.msra.mxu0 0.0
        %333 = vmatprep.subr.mxu0 0.0
        %334 = vmatpush1.msra.mxu0 0.0
        %335 = vmatprep.mubr.f32.mxu0 0.0
        %336 = vmatmul.mubr.f32.gmra.mrb[0].mxu0 %v266
        %v337 = vpop.f32.mrb[0].mxu0
        %v338 = vadd.f32 %v257, %v337
        %v339 = vpop.f32.mrb[0].mxu0
        %v340 = vadd.f32 %v257, %v339
        %341 = vmatprep.mubr.f32.mxu0 0.0
        %342 = vmatmul.mubr.f32.gmra.mrb[0].mxu0 %v269
        %v343 = vpop.f32.mrb[0].mxu0
        %v344 = vadd.f32 %v262, %v343
        %v345 = vpop.f32.mrb[0].mxu0
        %v346 = vadd.f32 %v262, %v345
        %347 = vdwg.mxu0
        %348 = vmatprep.subr.mxu0 %v221
        %349 = vmatpush1.msra.mxu0 %v220
        %350 = vmatprep.subr.mxu0 %v237
        %351 = vmatpush1.msra.mxu0 %v236
        %352 = vmatprep.subr.mxu0 0.0
        %353 = vmatpush1.msra.mxu0 0.0
        %354 = vmatprep.subr.mxu0 0.0
        %355 = vmatpush1.msra.mxu0 0.0
        %356 = vmatprep.subr.mxu0 0.0
        %357 = vmatpush1.msra.mxu0 0.0
        %358 = vmatprep.subr.mxu0 0.0
        %359 = vmatpush1.msra.mxu0 0.0
        %360 = vmatprep.subr.mxu0 0.0
        %361 = vmatpush1.msra.mxu0 0.0
        %362 = vmatprep.subr.mxu0 0.0
        %363 = vmatpush1.msra.mxu0 0.0
        %364 = vmatprep.subr.mxu0 0.0
        %365 = vmatpush1.msra.mxu0 0.0
        %366 = vmatprep.subr.mxu0 0.0
        %367 = vmatpush1.msra.mxu0 0.0
        %368 = vmatprep.subr.mxu0 0.0
        %369 = vmatpush1.msra.mxu0 0.0
        %370 = vmatprep.subr.mxu0 0.0
        %371 = vmatpush1.msra.mxu0 0.0
        %372 = vmatprep.subr.mxu0 0.0
        %373 = vmatpush1.msra.mxu0 0.0
        %374 = vmatprep.subr.mxu0 0.0
        %375 = vmatpush1.msra.mxu0 0.0
        %376 = vmatprep.subr.mxu0 0.0
        %377 = vmatpush1.msra.mxu0 0.0
        %378 = vmatprep.subr.mxu0 0.0
        %379 = vmatpush1.msra.mxu0 0.0
        %380 = vmatprep.subr.mxu0 0.0
        %381 = vmatpush1.msra.mxu0 0.0
        %382 = vmatprep.subr.mxu0 0.0
        %383 = vmatpush1.msra.mxu0 0.0
        %384 = vmatprep.subr.mxu0 0.0
        %385 = vmatpush1.msra.mxu0 0.0
        %386 = vmatprep.subr.mxu0 0.0
        %387 = vmatpush1.msra.mxu0 0.0
        %388 = vmatprep.subr.mxu0 0.0
        %389 = vmatpush1.msra.mxu0 0.0
        %390 = vmatprep.subr.mxu0 0.0
        %391 = vmatpush1.msra.mxu0 0.0
        %392 = vmatprep.subr.mxu0 0.0
        %393 = vmatpush1.msra.mxu0 0.0
        %394 = vmatprep.subr.mxu0 0.0
        %395 = vmatpush1.msra.mxu0 0.0
        %396 = vmatprep.subr.mxu0 0.0
        %397 = vmatpush1.msra.mxu0 0.0
        %398 = vmatprep.subr.mxu0 0.0
        %399 = vmatpush1.msra.mxu0 0.0
        %400 = vmatprep.subr.mxu0 0.0
        %401 = vmatpush1.msra.mxu0 0.0
        %402 = vmatprep.subr.mxu0 0.0
        %403 = vmatpush1.msra.mxu0 0.0
        %404 = vmatprep.subr.mxu0 0.0
        %405 = vmatpush1.msra.mxu0 0.0
        %406 = vmatprep.subr.mxu0 0.0
        %407 = vmatpush1.msra.mxu0 0.0
        %408 = vmatprep.subr.mxu0 0.0
        %409 = vmatpush1.msra.mxu0 0.0
        %410 = vmatprep.subr.mxu0 0.0
        %411 = vmatpush1.msra.mxu0 0.0
        %412 = vmatprep.mubr.f32.mxu0 0.0
        %413 = vmatmul.mubr.f32.gmra.mrb[0].mxu0 %v266
        %v414 = vpop.f32.mrb[0].mxu0
        %v415 = vadd.f32 %v257, %v414
        %v416 = vpop.f32.mrb[0].mxu0
        %v417 = vadd.f32 %v257, %v416
        %418 = vmatprep.mubr.f32.mxu0 0.0
        %419 = vmatmul.mubr.f32.gmra.mrb[0].mxu0 %v269
        %v420 = vpop.f32.mrb[0].mxu0
        %v421 = vadd.f32 %v262, %v420
        %v422 = vpop.f32.mrb[0].mxu0
        %v423 = vadd.f32 %v262, %v422
        %424 = vdwg.mxu0
        %425 = vmatprep.subr.mxu0 %v223
        %426 = vmatpush1.msra.mxu0 %v222
        %427 = vmatprep.subr.mxu0 %v239
        %428 = vmatpush1.msra.mxu0 %v238
        %429 = vmatprep.subr.mxu0 0.0
        %430 = vmatpush1.msra.mxu0 0.0
        %431 = vmatprep.subr.mxu0 0.0
        %432 = vmatpush1.msra.mxu0 0.0
        %433 = vmatprep.subr.mxu0 0.0
        %434 = vmatpush1.msra.mxu0 0.0
        %435 = vmatprep.subr.mxu0 0.0
        %436 = vmatpush1.msra.mxu0 0.0
        %437 = vmatprep.subr.mxu0 0.0
        %438 = vmatpush1.msra.mxu0 0.0
        %439 = vmatprep.subr.mxu0 0.0
        %440 = vmatpush1.msra.mxu0 0.0
        %441 = vmatprep.subr.mxu0 0.0
        %442 = vmatpush1.msra.mxu0 0.0
        %443 = vmatprep.subr.mxu0 0.0
        %444 = vmatpush1.msra.mxu0 0.0
        %445 = vmatprep.subr.mxu0 0.0
        %446 = vmatpush1.msra.mxu0 0.0
        %447 = vmatprep.subr.mxu0 0.0
        %448 = vmatpush1.msra.mxu0 0.0
        %449 = vmatprep.subr.mxu0 0.0
        %450 = vmatpush1.msra.mxu0 0.0
        %451 = vmatprep.subr.mxu0 0.0
        %452 = vmatpush1.msra.mxu0 0.0
        %453 = vmatprep.subr.mxu0 0.0
        %454 = vmatpush1.msra.mxu0 0.0
        %455 = vmatprep.subr.mxu0 0.0
        %456 = vmatpush1.msra.mxu0 0.0
        %457 = vmatprep.subr.mxu0 0.0
        %458 = vmatpush1.msra.mxu0 0.0
        %459 = vmatprep.subr.mxu0 0.0
        %460 = vmatpush1.msra.mxu0 0.0
        %461 = vmatprep.subr.mxu0 0.0
        %462 = vmatpush1.msra.mxu0 0.0
        %463 = vmatprep.subr.mxu0 0.0
        %464 = vmatpush1.msra.mxu0 0.0
        %465 = vmatprep.subr.mxu0 0.0
        %466 = vmatpush1.msra.mxu0 0.0
        %467 = vmatprep.subr.mxu0 0.0
        %468 = vmatpush1.msra.mxu0 0.0
        %469 = vmatprep.subr.mxu0 0.0
        %470 = vmatpush1.msra.mxu0 0.0
        %471 = vmatprep.subr.mxu0 0.0
        %472 = vmatpush1.msra.mxu0 0.0
        %473 = vmatprep.subr.mxu0 0.0
        %474 = vmatpush1.msra.mxu0 0.0
        %475 = vmatprep.subr.mxu0 0.0
        %476 = vmatpush1.msra.mxu0 0.0
        %477 = vmatprep.subr.mxu0 0.0
        %478 = vmatpush1.msra.mxu0 0.0
        %479 = vmatprep.subr.mxu0 0.0
        %480 = vmatpush1.msra.mxu0 0.0
        %481 = vmatprep.subr.mxu0 0.0
        %482 = vmatpush1.msra.mxu0 0.0
        %483 = vmatprep.subr.mxu0 0.0
        %484 = vmatpush1.msra.mxu0 0.0
        %485 = vmatprep.subr.mxu0 0.0
        %486 = vmatpush1.msra.mxu0 0.0
        %487 = vmatprep.subr.mxu0 0.0
        %488 = vmatpush1.msra.mxu0 0.0
        %489 = vmatprep.mubr.f32.mxu0 0.0
        %490 = vmatmul.mubr.f32.gmra.mrb[0].mxu0 %v266
        %v491 = vpop.f32.mrb[0].mxu0
        %v492 = vadd.f32 %v257, %v491
        %v493 = vpop.f32.mrb[0].mxu0
        %v494 = vadd.f32 %v257, %v493
        %495 = vmatprep.mubr.f32.mxu0 0.0
        %496 = vmatmul.mubr.f32.gmra.mrb[0].mxu0 %v269
        %v497 = vpop.f32.mrb[0].mxu0
        %v498 = vadd.f32 %v262, %v497
        %v499 = vpop.f32.mrb[0].mxu0
        %v500 = vadd.f32 %v262, %v499
        %501 = vdwg.mxu0
        %502 = vmatprep.subr.mxu0 %v225
        %503 = vmatpush1.msra.mxu0 %v224
        %504 = vmatprep.subr.mxu0 %v241
        %505 = vmatpush1.msra.mxu0 %v240
        %506 = vmatprep.subr.mxu0 0.0
        %507 = vmatpush1.msra.mxu0 0.0
        %508 = vmatprep.subr.mxu0 0.0
        %509 = vmatpush1.msra.mxu0 0.0
        %510 = vmatprep.subr.mxu0 0.0
        %511 = vmatpush1.msra.mxu0 0.0
        %512 = vmatprep.subr.mxu0 0.0
        %513 = vmatpush1.msra.mxu0 0.0
        %514 = vmatprep.subr.mxu0 0.0
        %515 = vmatpush1.msra.mxu0 0.0
        %516 = vmatprep.subr.mxu0 0.0
        %517 = vmatpush1.msra.mxu0 0.0
        %518 = vmatprep.subr.mxu0 0.0
        %519 = vmatpush1.msra.mxu0 0.0
        %520 = vmatprep.subr.mxu0 0.0
        %521 = vmatpush1.msra.mxu0 0.0
        %522 = vmatprep.subr.mxu0 0.0
        %523 = vmatpush1.msra.mxu0 0.0
        %524 = vmatprep.subr.mxu0 0.0
        %525 = vmatpush1.msra.mxu0 0.0
        %526 = vmatprep.subr.mxu0 0.0
        %527 = vmatpush1.msra.mxu0 0.0
        %528 = vmatprep.subr.mxu0 0.0
        %529 = vmatpush1.msra.mxu0 0.0
        %530 = vmatprep.subr.mxu0 0.0
        %531 = vmatpush1.msra.mxu0 0.0
        %532 = vmatprep.subr.mxu0 0.0
        %533 = vmatpush1.msra.mxu0 0.0
        %534 = vmatprep.subr.mxu0 0.0
        %535 = vmatpush1.msra.mxu0 0.0
        %536 = vmatprep.subr.mxu0 0.0
        %537 = vmatpush1.msra.mxu0 0.0
        %538 = vmatprep.subr.mxu0 0.0
        %539 = vmatpush1.msra.mxu0 0.0
        %540 = vmatprep.subr.mxu0 0.0
        %541 = vmatpush1.msra.mxu0 0.0
        %542 = vmatprep.subr.mxu0 0.0
        %543 = vmatpush1.msra.mxu0 0.0
        %544 = vmatprep.subr.mxu0 0.0
        %545 = vmatpush1.msra.mxu0 0.0
        %546 = vmatprep.subr.mxu0 0.0
        %547 = vmatpush1.msra.mxu0 0.0
        %548 = vmatprep.subr.mxu0 0.0
        %549 = vmatpush1.msra.mxu0 0.0
        %550 = vmatprep.subr.mxu0 0.0
        %551 = vmatpush1.msra.mxu0 0.0
        %552 = vmatprep.subr.mxu0 0.0
        %553 = vmatpush1.msra.mxu0 0.0
        %554 = vmatprep.subr.mxu0 0.0
        %555 = vmatpush1.msra.mxu0 0.0
        %556 = vmatprep.subr.mxu0 0.0
        %557 = vmatpush1.msra.mxu0 0.0
        %558 = vmatprep.subr.mxu0 0.0
        %559 = vmatpush1.msra.mxu0 0.0
        %560 = vmatprep.subr.mxu0 0.0
        %561 = vmatpush1.msra.mxu0 0.0
        %562 = vmatprep.subr.mxu0 0.0
        %563 = vmatpush1.msra.mxu0 0.0
        %564 = vmatprep.subr.mxu0 0.0
        %565 = vmatpush1.msra.mxu0 0.0
        %566 = vmatprep.mubr.f32.mxu0 0.0
        %567 = vmatmul.mubr.f32.gmra.mrb[0].mxu0 %v266
        %v568 = vpop.f32.mrb[0].mxu0
        %v569 = vadd.f32 %v257, %v568
        %v570 = vpop.f32.mrb[0].mxu0
        %v571 = vadd.f32 %v257, %v570
        %572 = vmatprep.mubr.f32.mxu0 0.0
        %573 = vmatmul.mubr.f32.gmra.mrb[0].mxu0 %v269
        %v574 = vpop.f32.mrb[0].mxu0
        %v575 = vadd.f32 %v262, %v574
        %v576 = vpop.f32.mrb[0].mxu0
        %v577 = vadd.f32 %v262, %v576
        %578 = vdwg.mxu0
        %579 = vmatprep.subr.mxu0 %v227
        %580 = vmatpush1.msra.mxu0 %v226
        %581 = vmatprep.subr.mxu0 %v243
        %582 = vmatpush1.msra.mxu0 %v242
        %583 = vmatprep.subr.mxu0 0.0
        %584 = vmatpush1.msra.mxu0 0.0
        %585 = vmatprep.subr.mxu0 0.0
        %586 = vmatpush1.msra.mxu0 0.0
        %587 = vmatprep.subr.mxu0 0.0
        %588 = vmatpush1.msra.mxu0 0.0
        %589 = vmatprep.subr.mxu0 0.0
        %590 = vmatpush1.msra.mxu0 0.0
        %591 = vmatprep.subr.mxu0 0.0
        %592 = vmatpush1.msra.mxu0 0.0
        %593 = vmatprep.subr.mxu0 0.0
        %594 = vmatpush1.msra.mxu0 0.0
        %595 = vmatprep.subr.mxu0 0.0
        %596 = vmatpush1.msra.mxu0 0.0
        %597 = vmatprep.subr.mxu0 0.0
        %598 = vmatpush1.msra.mxu0 0.0
        %599 = vmatprep.subr.mxu0 0.0
        %600 = vmatpush1.msra.mxu0 0.0
        %601 = vmatprep.subr.mxu0 0.0
        %602 = vmatpush1.msra.mxu0 0.0
        %603 = vmatprep.subr.mxu0 0.0
        %604 = vmatpush1.msra.mxu0 0.0
        %605 = vmatprep.subr.mxu0 0.0
        %606 = vmatpush1.msra.mxu0 0.0
        %607 = vmatprep.subr.mxu0 0.0
        %608 = vmatpush1.msra.mxu0 0.0
        %609 = vmatprep.subr.mxu0 0.0
        %610 = vmatpush1.msra.mxu0 0.0
        %611 = vmatprep.subr.mxu0 0.0
        %612 = vmatpush1.msra.mxu0 0.0
        %613 = vmatprep.subr.mxu0 0.0
        %614 = vmatpush1.msra.mxu0 0.0
        %615 = vmatprep.subr.mxu0 0.0
        %616 = vmatpush1.msra.mxu0 0.0
        %617 = vmatprep.subr.mxu0 0.0
        %618 = vmatpush1.msra.mxu0 0.0
        %619 = vmatprep.subr.mxu0 0.0
        %620 = vmatpush1.msra.mxu0 0.0
        %621 = vmatprep.subr.mxu0 0.0
        %622 = vmatpush1.msra.mxu0 0.0
        %623 = vmatprep.subr.mxu0 0.0
        %624 = vmatpush1.msra.mxu0 0.0
        %625 = vmatprep.subr.mxu0 0.0
        %626 = vmatpush1.msra.mxu0 0.0
        %627 = vmatprep.subr.mxu0 0.0
        %628 = vmatpush1.msra.mxu0 0.0
        %629 = vmatprep.subr.mxu0 0.0
        %630 = vmatpush1.msra.mxu0 0.0
        %631 = vmatprep.subr.mxu0 0.0
        %632 = vmatpush1.msra.mxu0 0.0
        %633 = vmatprep.subr.mxu0 0.0
        %634 = vmatpush1.msra.mxu0 0.0
        %635 = vmatprep.subr.mxu0 0.0
        %636 = vmatpush1.msra.mxu0 0.0
        %637 = vmatprep.subr.mxu0 0.0
        %638 = vmatpush1.msra.mxu0 0.0
        %639 = vmatprep.subr.mxu0 0.0
        %640 = vmatpush1.msra.mxu0 0.0
        %641 = vmatprep.subr.mxu0 0.0
        %642 = vmatpush1.msra.mxu0 0.0
        %643 = vmatprep.mubr.f32.mxu0 0.0
        %644 = vmatmul.mubr.f32.gmra.mrb[0].mxu0 %v266
        %v645 = vpop.f32.mrb[0].mxu0
        %v646 = vadd.f32 %v257, %v645
        %v647 = vpop.f32.mrb[0].mxu0
        %v648 = vadd.f32 %v257, %v647
        %649 = vmatprep.mubr.f32.mxu0 0.0
        %650 = vmatmul.mubr.f32.gmra.mrb[0].mxu0 %v269
        %v651 = vpop.f32.mrb[0].mxu0
        %v652 = vadd.f32 %v262, %v651
        %v653 = vpop.f32.mrb[0].mxu0
        %v654 = vadd.f32 %v262, %v653
        %655 = vdwg.mxu0
        %656 = vmatprep.subr.mxu0 %v229
        %657 = vmatpush1.msra.mxu0 %v228
        %658 = vmatprep.subr.mxu0 %v245
        %659 = vmatpush1.msra.mxu0 %v244
        %660 = vmatprep.subr.mxu0 0.0
        %661 = vmatpush1.msra.mxu0 0.0
        %662 = vmatprep.subr.mxu0 0.0
        %663 = vmatpush1.msra.mxu0 0.0
        %664 = vmatprep.subr.mxu0 0.0
        %665 = vmatpush1.msra.mxu0 0.0
        %666 = vmatprep.subr.mxu0 0.0
        %667 = vmatpush1.msra.mxu0 0.0
        %668 = vmatprep.subr.mxu0 0.0
        %669 = vmatpush1.msra.mxu0 0.0
        %670 = vmatprep.subr.mxu0 0.0
        %671 = vmatpush1.msra.mxu0 0.0
        %672 = vmatprep.subr.mxu0 0.0
        %673 = vmatpush1.msra.mxu0 0.0
        %674 = vmatprep.subr.mxu0 0.0
        %675 = vmatpush1.msra.mxu0 0.0
        %676 = vmatprep.subr.mxu0 0.0
        %677 = vmatpush1.msra.mxu0 0.0
        %678 = vmatprep.subr.mxu0 0.0
        %679 = vmatpush1.msra.mxu0 0.0
        %680 = vmatprep.subr.mxu0 0.0
        %681 = vmatpush1.msra.mxu0 0.0
        %682 = vmatprep.subr.mxu0 0.0
        %683 = vmatpush1.msra.mxu0 0.0
        %684 = vmatprep.subr.mxu0 0.0
        %685 = vmatpush1.msra.mxu0 0.0
        %686 = vmatprep.subr.mxu0 0.0
        %687 = vmatpush1.msra.mxu0 0.0
        %688 = vmatprep.subr.mxu0 0.0
        %689 = vmatpush1.msra.mxu0 0.0
        %690 = vmatprep.subr.mxu0 0.0
        %691 = vmatpush1.msra.mxu0 0.0
        %692 = vmatprep.subr.mxu0 0.0
        %693 = vmatpush1.msra.mxu0 0.0
        %694 = vmatprep.subr.mxu0 0.0
        %695 = vmatpush1.msra.mxu0 0.0
        %696 = vmatprep.subr.mxu0 0.0
        %697 = vmatpush1.msra.mxu0 0.0
        %698 = vmatprep.subr.mxu0 0.0
        %699 = vmatpush1.msra.mxu0 0.0
        %700 = vmatprep.subr.mxu0 0.0
        %701 = vmatpush1.msra.mxu0 0.0
        %702 = vmatprep.subr.mxu0 0.0
        %703 = vmatpush1.msra.mxu0 0.0
        %704 = vmatprep.subr.mxu0 0.0
        %705 = vmatpush1.msra.mxu0 0.0
        %706 = vmatprep.subr.mxu0 0.0
        %707 = vmatpush1.msra.mxu0 0.0
        %708 = vmatprep.subr.mxu0 0.0
        %709 = vmatpush1.msra.mxu0 0.0
        %710 = vmatprep.subr.mxu0 0.0
        %711 = vmatpush1.msra.mxu0 0.0
        %712 = vmatprep.subr.mxu0 0.0
        %713 = vmatpush1.msra.mxu0 0.0
        %714 = vmatprep.subr.mxu0 0.0
        %715 = vmatpush1.msra.mxu0 0.0
        %716 = vmatprep.subr.mxu0 0.0
        %717 = vmatpush1.msra.mxu0 0.0
        %718 = vmatprep.subr.mxu0 0.0
        %719 = vmatpush1.msra.mxu0 0.0
        %720 = vmatprep.mubr.f32.mxu0 0.0
        %721 = vmatmul.mubr.f32.gmra.mrb[0].mxu0 %v266
        %v722 = vpop.f32.mrb[0].mxu0
        %v723 = vadd.f32 %v257, %v722
        %v724 = vpop.f32.mrb[0].mxu0
        %v725 = vadd.f32 %v257, %v724
        %726 = vmatprep.mubr.f32.mxu0 0.0
        %727 = vmatmul.mubr.f32.gmra.mrb[0].mxu0 %v269
        %v728 = vpop.f32.mrb[0].mxu0
        %v729 = vadd.f32 %v262, %v728
        %v730 = vpop.f32.mrb[0].mxu0
        %v731 = vadd.f32 %v262, %v730
        %732 = vdwg.mxu0
        %733 = vmatprep.subr.mxu0 %v231
        %734 = vmatpush1.msra.mxu0 %v230
        %735 = vmatprep.subr.mxu0 %v247
        %736 = vmatpush1.msra.mxu0 %v246
        %737 = vmatprep.subr.mxu0 0.0
        %738 = vmatpush1.msra.mxu0 0.0
        %739 = vmatprep.subr.mxu0 0.0
        %740 = vmatpush1.msra.mxu0 0.0
        %741 = vmatprep.subr.mxu0 0.0
        %742 = vmatpush1.msra.mxu0 0.0
        %743 = vmatprep.subr.mxu0 0.0
        %744 = vmatpush1.msra.mxu0 0.0
        %745 = vmatprep.subr.mxu0 0.0
        %746 = vmatpush1.msra.mxu0 0.0
        %747 = vmatprep.subr.mxu0 0.0
        %748 = vmatpush1.msra.mxu0 0.0
        %749 = vmatprep.subr.mxu0 0.0
        %750 = vmatpush1.msra.mxu0 0.0
        %751 = vmatprep.subr.mxu0 0.0
        %752 = vmatpush1.msra.mxu0 0.0
        %753 = vmatprep.subr.mxu0 0.0
        %754 = vmatpush1.msra.mxu0 0.0
        %755 = vmatprep.subr.mxu0 0.0
        %756 = vmatpush1.msra.mxu0 0.0
        %757 = vmatprep.subr.mxu0 0.0
        %758 = vmatpush1.msra.mxu0 0.0
        %759 = vmatprep.subr.mxu0 0.0
        %760 = vmatpush1.msra.mxu0 0.0
        %761 = vmatprep.subr.mxu0 0.0
        %762 = vmatpush1.msra.mxu0 0.0
        %763 = vmatprep.subr.mxu0 0.0
        %764 = vmatpush1.msra.mxu0 0.0
        %765 = vmatprep.subr.mxu0 0.0
        %766 = vmatpush1.msra.mxu0 0.0
        %767 = vmatprep.subr.mxu0 0.0
        %768 = vmatpush1.msra.mxu0 0.0
        %769 = vmatprep.subr.mxu0 0.0
        %770 = vmatpush1.msra.mxu0 0.0
        %771 = vmatprep.subr.mxu0 0.0
        %772 = vmatpush1.msra.mxu0 0.0
        %773 = vmatprep.subr.mxu0 0.0
        %774 = vmatpush1.msra.mxu0 0.0
        %775 = vmatprep.subr.mxu0 0.0
        %776 = vmatpush1.msra.mxu0 0.0
        %777 = vmatprep.subr.mxu0 0.0
        %778 = vmatpush1.msra.mxu0 0.0
        %779 = vmatprep.subr.mxu0 0.0
        %780 = vmatpush1.msra.mxu0 0.0
        %781 = vmatprep.subr.mxu0 0.0
        %782 = vmatpush1.msra.mxu0 0.0
        %783 = vmatprep.subr.mxu0 0.0
        %784 = vmatpush1.msra.mxu0 0.0
        %785 = vmatprep.subr.mxu0 0.0
        %786 = vmatpush1.msra.mxu0 0.0
        %787 = vmatprep.subr.mxu0 0.0
        %788 = vmatpush1.msra.mxu0 0.0
        %789 = vmatprep.subr.mxu0 0.0
        %790 = vmatpush1.msra.mxu0 0.0
        %791 = vmatprep.subr.mxu0 0.0
        %792 = vmatpush1.msra.mxu0 0.0
        %793 = vmatprep.subr.mxu0 0.0
        %794 = vmatpush1.msra.mxu0 0.0
        %795 = vmatprep.subr.mxu0 0.0
        %796 = vmatpush1.msra.mxu0 0.0
        %797 = vmatprep.mubr.f32.mxu0 0.0
        %798 = vmatmul.mubr.f32.gmra.mrb[0].mxu0 %v266
        %v799 = vpop.f32.mrb[0].mxu0
        %v800 = vadd.f32 %v257, %v799
        %v801 = vpop.f32.mrb[0].mxu0
        %v802 = vadd.f32 %v257, %v801
        %803 = vmatprep.mubr.f32.mxu0 0.0
        %804 = vmatmul.mubr.f32.gmra.mrb[0].mxu0 %v269
        %v805 = vpop.f32.mrb[0].mxu0
        %v806 = vadd.f32 %v262, %v805
        %v807 = vpop.f32.mrb[0].mxu0
        %v808 = vadd.f32 %v262, %v807
        %809 = vdwg.mxu0
        %810 = vmatprep.subr.mxu0 %v233
        %811 = vmatpush1.msra.mxu0 %v232
        %812 = vmatprep.subr.mxu0 %v249
        %813 = vmatpush1.msra.mxu0 %v248
        %814 = vmatprep.subr.mxu0 0.0
        %815 = vmatpush1.msra.mxu0 0.0
        %816 = vmatprep.subr.mxu0 0.0
        %817 = vmatpush1.msra.mxu0 0.0
        %818 = vmatprep.subr.mxu0 0.0
        %819 = vmatpush1.msra.mxu0 0.0
        %820 = vmatprep.subr.mxu0 0.0
        %821 = vmatpush1.msra.mxu0 0.0
        %822 = vmatprep.subr.mxu0 0.0
        %823 = vmatpush1.msra.mxu0 0.0
        %824 = vmatprep.subr.mxu0 0.0
        %825 = vmatpush1.msra.mxu0 0.0
        %826 = vmatprep.subr.mxu0 0.0
        %827 = vmatpush1.msra.mxu0 0.0
        %828 = vmatprep.subr.mxu0 0.0
        %829 = vmatpush1.msra.mxu0 0.0
        %830 = vmatprep.subr.mxu0 0.0
        %831 = vmatpush1.msra.mxu0 0.0
        %832 = vmatprep.subr.mxu0 0.0
        %833 = vmatpush1.msra.mxu0 0.0
        %834 = vmatprep.subr.mxu0 0.0
        %835 = vmatpush1.msra.mxu0 0.0
        %836 = vmatprep.subr.mxu0 0.0
        %837 = vmatpush1.msra.mxu0 0.0
        %838 = vmatprep.subr.mxu0 0.0
        %839 = vmatpush1.msra.mxu0 0.0
        %840 = vmatprep.subr.mxu0 0.0
        %841 = vmatpush1.msra.mxu0 0.0
        %842 = vmatprep.subr.mxu0 0.0
        %843 = vmatpush1.msra.mxu0 0.0
        %844 = vmatprep.subr.mxu0 0.0
        %845 = vmatpush1.msra.mxu0 0.0
        %846 = vmatprep.subr.mxu0 0.0
        %847 = vmatpush1.msra.mxu0 0.0
        %848 = vmatprep.subr.mxu0 0.0
        %849 = vmatpush1.msra.mxu0 0.0
        %850 = vmatprep.subr.mxu0 0.0
        %851 = vmatpush1.msra.mxu0 0.0
        %852 = vmatprep.subr.mxu0 0.0
        %853 = vmatpush1.msra.mxu0 0.0
        %854 = vmatprep.subr.mxu0 0.0
        %855 = vmatpush1.msra.mxu0 0.0
        %856 = vmatprep.subr.mxu0 0.0
        %857 = vmatpush1.msra.mxu0 0.0
        %858 = vmatprep.subr.mxu0 0.0
        %859 = vmatpush1.msra.mxu0 0.0
        %860 = vmatprep.subr.mxu0 0.0
        %861 = vmatpush1.msra.mxu0 0.0
        %862 = vmatprep.subr.mxu0 0.0
        %863 = vmatpush1.msra.mxu0 0.0
        %864 = vmatprep.subr.mxu0 0.0
        %865 = vmatpush1.msra.mxu0 0.0
        %866 = vmatprep.subr.mxu0 0.0
        %867 = vmatpush1.msra.mxu0 0.0
        %868 = vmatprep.subr.mxu0 0.0
        %869 = vmatpush1.msra.mxu0 0.0
        %870 = vmatprep.subr.mxu0 0.0
        %871 = vmatpush1.msra.mxu0 0.0
        %872 = vmatprep.subr.mxu0 0.0
        %873 = vmatpush1.msra.mxu0 0.0
        %874 = vmatprep.mubr.f32.mxu0 0.0
        %875 = vmatmul.mubr.f32.gmra.mrb[0].mxu0 %v266
        %v876 = vpop.f32.mrb[0].mxu0
        %v877 = vadd.f32 %v257, %v876
        %v878 = vpop.f32.mrb[0].mxu0
        %v879 = vadd.f32 %v257, %v878
        %880 = vmatprep.mubr.f32.mxu0 0.0
        %881 = vmatmul.mubr.f32.gmra.mrb[0].mxu0 %v269
        %v882 = vpop.f32.mrb[0].mxu0
        %v883 = vadd.f32 %v262, %v882
        %v884 = vpop.f32.mrb[0].mxu0
        %v885 = vadd.f32 %v262, %v884
        %886 = vdwg.mxu0
        %v887 = vld [vmem:[%s3] sm:$0xff]
        %v888 = vld [vmem:[%s3 + $0x8] sm:$0xff]
        %vm889 = vcmp.ge.f32.partialorder %v338, 0.0
        %vm890 = vcmp.ge.f32.partialorder %v340, 0.0
        %vm891 = vcmp.ge.f32.partialorder %v415, 0.0
        %vm892 = vcmp.ge.f32.partialorder %v417, 0.0
        %vm893 = vcmp.ge.f32.partialorder %v492, 0.0
        %vm894 = vcmp.ge.f32.partialorder %v494, 0.0
        %vm895 = vcmp.ge.f32.partialorder %v569, 0.0
        %vm896 = vcmp.ge.f32.partialorder %v571, 0.0
        %vm897 = vcmp.ge.f32.partialorder %v646, 0.0
        %vm898 = vcmp.ge.f32.partialorder %v648, 0.0
        %vm899 = vcmp.ge.f32.partialorder %v723, 0.0
        %vm900 = vcmp.ge.f32.partialorder %v725, 0.0
        %vm901 = vcmp.ge.f32.partialorder %v800, 0.0
        %vm902 = vcmp.ge.f32.partialorder %v802, 0.0
        %vm903 = vcmp.ge.f32.partialorder %v877, 0.0
        %vm904 = vcmp.ge.f32.partialorder %v879, 0.0
        %vm905 = vcmp.ge.f32.partialorder %v344, 0.0
        %vm906 = vcmp.ge.f32.partialorder %v346, 0.0
        %vm907 = vcmp.ge.f32.partialorder %v421, 0.0
        %vm908 = vcmp.ge.f32.partialorder %v423, 0.0
        %vm909 = vcmp.ge.f32.partialorder %v498, 0.0
        %vm910 = vcmp.ge.f32.partialorder %v500, 0.0
        %vm911 = vcmp.ge.f32.partialorder %v575, 0.0
        %vm912 = vcmp.ge.f32.partialorder %v577, 0.0
        %vm913 = vcmp.ge.f32.partialorder %v652, 0.0
        %vm914 = vcmp.ge.f32.partialorder %v654, 0.0
        %vm915 = vcmp.ge.f32.partialorder %v729, 0.0
        %vm916 = vcmp.ge.f32.partialorder %v731, 0.0
        %vm917 = vcmp.ge.f32.partialorder %v806, 0.0
        %vm918 = vcmp.ge.f32.partialorder %v808, 0.0
        %vm919 = vcmp.ge.f32.partialorder %v883, 0.0
        %vm920 = vcmp.ge.f32.partialorder %v885, 0.0
        %922 = vset.pattern.permute.xlu0 0
        %923 = vperm.xlu0 %922, %v887
        %v924 = vpop.permute.xlu0 %923
        %927 = vset.pattern.permute.xlu0 0
        %928 = vperm.xlu0 %927, %v888
        %v929 = vpop.permute.xlu0 %928
        %v931 = vmul.f32 %v924, %v338
        %v932 = vmul.f32 %v924, %v340
        %v933 = vmul.f32 %v924, %v415
        %v934 = vmul.f32 %v924, %v417
        %v935 = vmul.f32 %v924, %v492
        %v936 = vmul.f32 %v924, %v494
        %v937 = vmul.f32 %v924, %v569
        %v938 = vmul.f32 %v924, %v571
        %v939 = vmul.f32 %v924, %v646
        %v940 = vmul.f32 %v924, %v648
        %v941 = vmul.f32 %v924, %v723
        %v942 = vmul.f32 %v924, %v725
        %v943 = vmul.f32 %v924, %v800
        %v944 = vmul.f32 %v924, %v802
        %v945 = vmul.f32 %v924, %v877
        %v946 = vmul.f32 %v924, %v879
        %v947 = vmul.f32 %v929, %v344
        %v948 = vmul.f32 %v929, %v346
        %v949 = vmul.f32 %v929, %v421
        %v950 = vmul.f32 %v929, %v423
        %v951 = vmul.f32 %v929, %v498
        %v952 = vmul.f32 %v929, %v500
        %v953 = vmul.f32 %v929, %v575
        %v954 = vmul.f32 %v929, %v577
        %v955 = vmul.f32 %v929, %v652
        %v956 = vmul.f32 %v929, %v654
        %v957 = vmul.f32 %v929, %v729
        %v958 = vmul.f32 %v929, %v731
        %v959 = vmul.f32 %v929, %v806
        %v960 = vmul.f32 %v929, %v808
        %v961 = vmul.f32 %v929, %v883
        %v962 = vmul.f32 %v929, %v885
        %v963 = vsel %vm889, %v338, %v931
        %v964 = vsel %vm890, %v340, %v932
        %v965 = vsel %vm891, %v415, %v933
        %v966 = vsel %vm892, %v417, %v934
        %v967 = vsel %vm893, %v492, %v935
        %v968 = vsel %vm894, %v494, %v936
        %v969 = vsel %vm895, %v569, %v937
        %v970 = vsel %vm896, %v571, %v938
        %v971 = vsel %vm897, %v646, %v939
        %v972 = vsel %vm898, %v648, %v940
        %v973 = vsel %vm899, %v723, %v941
        %v974 = vsel %vm900, %v725, %v942
        %v975 = vsel %vm901, %v800, %v943
        %v976 = vsel %vm902, %v802, %v944
        %v977 = vsel %vm903, %v877, %v945
        %v978 = vsel %vm904, %v879, %v946
        %v979 = vsel %vm905, %v344, %v947
        %v980 = vsel %vm906, %v346, %v948
        %v981 = vsel %vm907, %v421, %v949
        %v982 = vsel %vm908, %v423, %v950
        %v983 = vsel %vm909, %v498, %v951
        %v984 = vsel %vm910, %v500, %v952
        %v985 = vsel %vm911, %v575, %v953
        %v986 = vsel %vm912, %v577, %v954
        %v987 = vsel %vm913, %v652, %v955
        %v988 = vsel %vm914, %v654, %v956
        %v989 = vsel %vm915, %v729, %v957
        %v990 = vsel %vm916, %v731, %v958
        %v991 = vsel %vm917, %v806, %v959
        %v992 = vsel %vm918, %v808, %v960
        %v993 = vsel %vm919, %v883, %v961
        %v994 = vsel %vm920, %v885, %v962
        %s995 = scalar_lea.vmem %s1, 16
        %v996 = vld [vmem:[%s995] sm:$0xff]
        %v997 = vld [vmem:[%s995 + $0x8] sm:$0xff]
        %s998 = scalar_lea.vmem %s2, 16
        %v999 = vld [vmem:[%s998] sm:$0xff]
        %v1000 = vld [vmem:[%s998 + $0x8] sm:$0xff]
        %1002 = vset.pattern.permute.xlu0 0
        %1003 = vperm.xlu0 %1002, %v999
        %v1004 = vpop.permute.xlu0 %1003
        %1007 = vset.pattern.permute.xlu0 0
        %1008 = vperm.xlu0 %1007, %v1000
        %v1009 = vpop.permute.xlu0 %1008
        %v1012 = vsel %vm264, %v996, 0
        %v1015 = vsel %vm264, %v997, 0
        %1017 = vmatprep.subr.mxu0 %v964
        %1018 = vmatpush1.msra.mxu0 %v963
        %1019 = vmatprep.subr.mxu0 %v980
        %1020 = vmatpush1.msra.mxu0 %v979
        %1021 = vmatprep.subr.mxu0 0.0
        %1022 = vmatpush1.msra.mxu0 0.0
        %1023 = vmatprep.subr.mxu0 0.0
        %1024 = vmatpush1.msra.mxu0 0.0
        %1025 = vmatprep.subr.mxu0 0.0
        %1026 = vmatpush1.msra.mxu0 0.0
        %1027 = vmatprep.subr.mxu0 0.0
        %1028 = vmatpush1.msra.mxu0 0.0
        %1029 = vmatprep.subr.mxu0 0.0
        %1030 = vmatpush1.msra.mxu0 0.0
        %1031 = vmatprep.subr.mxu0 0.0
        %1032 = vmatpush1.msra.mxu0 0.0
        %1033 = vmatprep.subr.mxu0 0.0
        %1034 = vmatpush1.msra.mxu0 0.0
        %1035 = vmatprep.subr.mxu0 0.0
        %1036 = vmatpush1.msra.mxu0 0.0
        %1037 = vmatprep.subr.mxu0 0.0
        %1038 = vmatpush1.msra.mxu0 0.0
        %1039 = vmatprep.subr.mxu0 0.0
        %1040 = vmatpush1.msra.mxu0 0.0
        %1041 = vmatprep.subr.mxu0 0.0
        %1042 = vmatpush1.msra.mxu0 0.0
        %1043 = vmatprep.subr.mxu0 0.0
        %1044 = vmatpush1.msra.mxu0 0.0
        %1045 = vmatprep.subr.mxu0 0.0
        %1046 = vmatpush1.msra.mxu0 0.0
        %1047 = vmatprep.subr.mxu0 0.0
        %1048 = vmatpush1.msra.mxu0 0.0
        %1049 = vmatprep.subr.mxu0 0.0
        %1050 = vmatpush1.msra.mxu0 0.0
        %1051 = vmatprep.subr.mxu0 0.0
        %1052 = vmatpush1.msra.mxu0 0.0
        %1053 = vmatprep.subr.mxu0 0.0
        %1054 = vmatpush1.msra.mxu0 0.0
        %1055 = vmatprep.subr.mxu0 0.0
        %1056 = vmatpush1.msra.mxu0 0.0
        %1057 = vmatprep.subr.mxu0 0.0
        %1058 = vmatpush1.msra.mxu0 0.0
        %1059 = vmatprep.subr.mxu0 0.0
        %1060 = vmatpush1.msra.mxu0 0.0
        %1061 = vmatprep.subr.mxu0 0.0
        %1062 = vmatpush1.msra.mxu0 0.0
        %1063 = vmatprep.subr.mxu0 0.0
        %1064 = vmatpush1.msra.mxu0 0.0
        %1065 = vmatprep.subr.mxu0 0.0
        %1066 = vmatpush1.msra.mxu0 0.0
        %1067 = vmatprep.subr.mxu0 0.0
        %1068 = vmatpush1.msra.mxu0 0.0
        %1069 = vmatprep.subr.mxu0 0.0
        %1070 = vmatpush1.msra.mxu0 0.0
        %1071 = vmatprep.subr.mxu0 0.0
        %1072 = vmatpush1.msra.mxu0 0.0
        %1073 = vmatprep.subr.mxu0 0.0
        %1074 = vmatpush1.msra.mxu0 0.0
        %1075 = vmatprep.subr.mxu0 0.0
        %1076 = vmatpush1.msra.mxu0 0.0
        %1077 = vmatprep.subr.mxu0 0.0
        %1078 = vmatpush1.msra.mxu0 0.0
        %1079 = vmatprep.subr.mxu0 0.0
        %1080 = vmatpush1.msra.mxu0 0.0
        %1081 = vmatprep.mubr.f32.mxu0 0.0
        %1082 = vmatmul.mubr.f32.gmra.mrb[0].mxu0 %v1012
        %v1083 = vpop.f32.mrb[0].mxu0
        %v1084 = vadd.f32 %v1004, %v1083
        %v1085 = vpop.f32.mrb[0].mxu0
        %v1086 = vadd.f32 %v1004, %v1085
        %1087 = vmatprep.mubr.f32.mxu0 0.0
        %1088 = vmatmul.mubr.f32.gmra.mrb[0].mxu0 %v1015
        %v1089 = vpop.f32.mrb[0].mxu0
        %v1090 = vadd.f32 %v1009, %v1089
        %v1091 = vpop.f32.mrb[0].mxu0
        %v1092 = vadd.f32 %v1009, %v1091
        %1093 = vdwg.mxu0
        %1094 = vmatprep.subr.mxu0 %v966
        %1095 = vmatpush1.msra.mxu0 %v965
        %1096 = vmatprep.subr.mxu0 %v982
        %1097 = vmatpush1.msra.mxu0 %v981
        %1098 = vmatprep.subr.mxu0 0.0
        %1099 = vmatpush1.msra.mxu0 0.0
        %1100 = vmatprep.subr.mxu0 0.0
        %1101 = vmatpush1.msra.mxu0 0.0
        %1102 = vmatprep.subr.mxu0 0.0
        %1103 = vmatpush1.msra.mxu0 0.0
        %1104 = vmatprep.subr.mxu0 0.0
        %1105 = vmatpush1.msra.mxu0 0.0
        %1106 = vmatprep.subr.mxu0 0.0
        %1107 = vmatpush1.msra.mxu0 0.0
        %1108 = vmatprep.subr.mxu0 0.0
        %1109 = vmatpush1.msra.mxu0 0.0
        %1110 = vmatprep.subr.mxu0 0.0
        %1111 = vmatpush1.msra.mxu0 0.0
        %1112 = vmatprep.subr.mxu0 0.0
        %1113 = vmatpush1.msra.mxu0 0.0
        %1114 = vmatprep.subr.mxu0 0.0
        %1115 = vmatpush1.msra.mxu0 0.0
        %1116 = vmatprep.subr.mxu0 0.0
        %1117 = vmatpush1.msra.mxu0 0.0
        %1118 = vmatprep.subr.mxu0 0.0
        %1119 = vmatpush1.msra.mxu0 0.0
        %1120 = vmatprep.subr.mxu0 0.0
        %1121 = vmatpush1.msra.mxu0 0.0
        %1122 = vmatprep.subr.mxu0 0.0
        %1123 = vmatpush1.msra.mxu0 0.0
        %1124 = vmatprep.subr.mxu0 0.0
        %1125 = vmatpush1.msra.mxu0 0.0
        %1126 = vmatprep.subr.mxu0 0.0
        %1127 = vmatpush1.msra.mxu0 0.0
        %1128 = vmatprep.subr.mxu0 0.0
        %1129 = vmatpush1.msra.mxu0 0.0
        %1130 = vmatprep.subr.mxu0 0.0
        %1131 = vmatpush1.msra.mxu0 0.0
        %1132 = vmatprep.subr.mxu0 0.0
        %1133 = vmatpush1.msra.mxu0 0.0
        %1134 = vmatprep.subr.mxu0 0.0
        %1135 = vmatpush1.msra.mxu0 0.0
        %1136 = vmatprep.subr.mxu0 0.0
        %1137 = vmatpush1.msra.mxu0 0.0
        %1138 = vmatprep.subr.mxu0 0.0
        %1139 = vmatpush1.msra.mxu0 0.0
        %1140 = vmatprep.subr.mxu0 0.0
        %1141 = vmatpush1.msra.mxu0 0.0
        %1142 = vmatprep.subr.mxu0 0.0
        %1143 = vmatpush1.msra.mxu0 0.0
        %1144 = vmatprep.subr.mxu0 0.0
        %1145 = vmatpush1.msra.mxu0 0.0
        %1146 = vmatprep.subr.mxu0 0.0
        %1147 = vmatpush1.msra.mxu0 0.0
        %1148 = vmatprep.subr.mxu0 0.0
        %1149 = vmatpush1.msra.mxu0 0.0
        %1150 = vmatprep.subr.mxu0 0.0
        %1151 = vmatpush1.msra.mxu0 0.0
        %1152 = vmatprep.subr.mxu0 0.0
        %1153 = vmatpush1.msra.mxu0 0.0
        %1154 = vmatprep.subr.mxu0 0.0
        %1155 = vmatpush1.msra.mxu0 0.0
        %1156 = vmatprep.subr.mxu0 0.0
        %1157 = vmatpush1.msra.mxu0 0.0
        %1158 = vmatprep.mubr.f32.mxu0 0.0
        %1159 = vmatmul.mubr.f32.gmra.mrb[0].mxu0 %v1012
        %v1160 = vpop.f32.mrb[0].mxu0
        %v1161 = vadd.f32 %v1004, %v1160
        %v1162 = vpop.f32.mrb[0].mxu0
        %v1163 = vadd.f32 %v1004, %v1162
        %1164 = vmatprep.mubr.f32.mxu0 0.0
        %1165 = vmatmul.mubr.f32.gmra.mrb[0].mxu0 %v1015
        %v1166 = vpop.f32.mrb[0].mxu0
        %v1167 = vadd.f32 %v1009, %v1166
        %v1168 = vpop.f32.mrb[0].mxu0
        %v1169 = vadd.f32 %v1009, %v1168
        %1170 = vdwg.mxu0
        %1171 = vmatprep.subr.mxu0 %v968
        %1172 = vmatpush1.msra.mxu0 %v967
        %1173 = vmatprep.subr.mxu0 %v984
        %1174 = vmatpush1.msra.mxu0 %v983
        %1175 = vmatprep.subr.mxu0 0.0
        %1176 = vmatpush1.msra.mxu0 0.0
        %1177 = vmatprep.subr.mxu0 0.0
        %1178 = vmatpush1.msra.mxu0 0.0
        %1179 = vmatprep.subr.mxu0 0.0
        %1180 = vmatpush1.msra.mxu0 0.0
        %1181 = vmatprep.subr.mxu0 0.0
        %1182 = vmatpush1.msra.mxu0 0.0
        %1183 = vmatprep.subr.mxu0 0.0
        %1184 = vmatpush1.msra.mxu0 0.0
        %1185 = vmatprep.subr.mxu0 0.0
        %1186 = vmatpush1.msra.mxu0 0.0
        %1187 = vmatprep.subr.mxu0 0.0
        %1188 = vmatpush1.msra.mxu0 0.0
        %1189 = vmatprep.subr.mxu0 0.0
        %1190 = vmatpush1.msra.mxu0 0.0
        %1191 = vmatprep.subr.mxu0 0.0
        %1192 = vmatpush1.msra.mxu0 0.0
        %1193 = vmatprep.subr.mxu0 0.0
        %1194 = vmatpush1.msra.mxu0 0.0
        %1195 = vmatprep.subr.mxu0 0.0
        %1196 = vmatpush1.msra.mxu0 0.0
        %1197 = vmatprep.subr.mxu0 0.0
        %1198 = vmatpush1.msra.mxu0 0.0
        %1199 = vmatprep.subr.mxu0 0.0
        %1200 = vmatpush1.msra.mxu0 0.0
        %1201 = vmatprep.subr.mxu0 0.0
        %1202 = vmatpush1.msra.mxu0 0.0
        %1203 = vmatprep.subr.mxu0 0.0
        %1204 = vmatpush1.msra.mxu0 0.0
        %1205 = vmatprep.subr.mxu0 0.0
        %1206 = vmatpush1.msra.mxu0 0.0
        %1207 = vmatprep.subr.mxu0 0.0
        %1208 = vmatpush1.msra.mxu0 0.0
        %1209 = vmatprep.subr.mxu0 0.0
        %1210 = vmatpush1.msra.mxu0 0.0
        %1211 = vmatprep.subr.mxu0 0.0
        %1212 = vmatpush1.msra.mxu0 0.0
        %1213 = vmatprep.subr.mxu0 0.0
        %1214 = vmatpush1.msra.mxu0 0.0
        %1215 = vmatprep.subr.mxu0 0.0
        %1216 = vmatpush1.msra.mxu0 0.0
        %1217 = vmatprep.subr.mxu0 0.0
        %1218 = vmatpush1.msra.mxu0 0.0
        %1219 = vmatprep.subr.mxu0 0.0
        %1220 = vmatpush1.msra.mxu0 0.0
        %1221 = vmatprep.subr.mxu0 0.0
        %1222 = vmatpush1.msra.mxu0 0.0
        %1223 = vmatprep.subr.mxu0 0.0
        %1224 = vmatpush1.msra.mxu0 0.0
        %1225 = vmatprep.subr.mxu0 0.0
        %1226 = vmatpush1.msra.mxu0 0.0
        %1227 = vmatprep.subr.mxu0 0.0
        %1228 = vmatpush1.msra.mxu0 0.0
        %1229 = vmatprep.subr.mxu0 0.0
        %1230 = vmatpush1.msra.mxu0 0.0
        %1231 = vmatprep.subr.mxu0 0.0
        %1232 = vmatpush1.msra.mxu0 0.0
        %1233 = vmatprep.subr.mxu0 0.0
        %1234 = vmatpush1.msra.mxu0 0.0
        %1235 = vmatprep.mubr.f32.mxu0 0.0
        %1236 = vmatmul.mubr.f32.gmra.mrb[0].mxu0 %v1012
        %v1237 = vpop.f32.mrb[0].mxu0
        %v1238 = vadd.f32 %v1004, %v1237
        %v1239 = vpop.f32.mrb[0].mxu0
        %v1240 = vadd.f32 %v1004, %v1239
        %1241 = vmatprep.mubr.f32.mxu0 0.0
        %1242 = vmatmul.mubr.f32.gmra.mrb[0].mxu0 %v1015
        %v1243 = vpop.f32.mrb[0].mxu0
        %v1244 = vadd.f32 %v1009, %v1243
        %v1245 = vpop.f32.mrb[0].mxu0
        %v1246 = vadd.f32 %v1009, %v1245
        %1247 = vdwg.mxu0
        %1248 = vmatprep.subr.mxu0 %v970
        %1249 = vmatpush1.msra.mxu0 %v969
        %1250 = vmatprep.subr.mxu0 %v986
        %1251 = vmatpush1.msra.mxu0 %v985
        %1252 = vmatprep.subr.mxu0 0.0
        %1253 = vmatpush1.msra.mxu0 0.0
        %1254 = vmatprep.subr.mxu0 0.0
        %1255 = vmatpush1.msra.mxu0 0.0
        %1256 = vmatprep.subr.mxu0 0.0
        %1257 = vmatpush1.msra.mxu0 0.0
        %1258 = vmatprep.subr.mxu0 0.0
        %1259 = vmatpush1.msra.mxu0 0.0
        %1260 = vmatprep.subr.mxu0 0.0
        %1261 = vmatpush1.msra.mxu0 0.0
        %1262 = vmatprep.subr.mxu0 0.0
        %1263 = vmatpush1.msra.mxu0 0.0
        %1264 = vmatprep.subr.mxu0 0.0
        %1265 = vmatpush1.msra.mxu0 0.0
        %1266 = vmatprep.subr.mxu0 0.0
        %1267 = vmatpush1.msra.mxu0 0.0
        %1268 = vmatprep.subr.mxu0 0.0
        %1269 = vmatpush1.msra.mxu0 0.0
        %1270 = vmatprep.subr.mxu0 0.0
        %1271 = vmatpush1.msra.mxu0 0.0
        %1272 = vmatprep.subr.mxu0 0.0
        %1273 = vmatpush1.msra.mxu0 0.0
        %1274 = vmatprep.subr.mxu0 0.0
        %1275 = vmatpush1.msra.mxu0 0.0
        %1276 = vmatprep.subr.mxu0 0.0
        %1277 = vmatpush1.msra.mxu0 0.0
        %1278 = vmatprep.subr.mxu0 0.0
        %1279 = vmatpush1.msra.mxu0 0.0
        %1280 = vmatprep.subr.mxu0 0.0
        %1281 = vmatpush1.msra.mxu0 0.0
        %1282 = vmatprep.subr.mxu0 0.0
        %1283 = vmatpush1.msra.mxu0 0.0
        %1284 = vmatprep.subr.mxu0 0.0
        %1285 = vmatpush1.msra.mxu0 0.0
        %1286 = vmatprep.subr.mxu0 0.0
        %1287 = vmatpush1.msra.mxu0 0.0
        %1288 = vmatprep.subr.mxu0 0.0
        %1289 = vmatpush1.msra.mxu0 0.0
        %1290 = vmatprep.subr.mxu0 0.0
        %1291 = vmatpush1.msra.mxu0 0.0
        %1292 = vmatprep.subr.mxu0 0.0
        %1293 = vmatpush1.msra.mxu0 0.0
        %1294 = vmatprep.subr.mxu0 0.0
        %1295 = vmatpush1.msra.mxu0 0.0
        %1296 = vmatprep.subr.mxu0 0.0
        %1297 = vmatpush1.msra.mxu0 0.0
        %1298 = vmatprep.subr.mxu0 0.0
        %1299 = vmatpush1.msra.mxu0 0.0
        %1300 = vmatprep.subr.mxu0 0.0
        %1301 = vmatpush1.msra.mxu0 0.0
        %1302 = vmatprep.subr.mxu0 0.0
        %1303 = vmatpush1.msra.mxu0 0.0
        %1304 = vmatprep.subr.mxu0 0.0
        %1305 = vmatpush1.msra.mxu0 0.0
        %1306 = vmatprep.subr.mxu0 0.0
        %1307 = vmatpush1.msra.mxu0 0.0
        %1308 = vmatprep.subr.mxu0 0.0
        %1309 = vmatpush1.msra.mxu0 0.0
        %1310 = vmatprep.subr.mxu0 0.0
        %1311 = vmatpush1.msra.mxu0 0.0
        %1312 = vmatprep.mubr.f32.mxu0 0.0
        %1313 = vmatmul.mubr.f32.gmra.mrb[0].mxu0 %v1012
        %v1314 = vpop.f32.mrb[0].mxu0
        %v1315 = vadd.f32 %v1004, %v1314
        %v1316 = vpop.f32.mrb[0].mxu0
        %v1317 = vadd.f32 %v1004, %v1316
        %1318 = vmatprep.mubr.f32.mxu0 0.0
        %1319 = vmatmul.mubr.f32.gmra.mrb[0].mxu0 %v1015
        %v1320 = vpop.f32.mrb[0].mxu0
        %v1321 = vadd.f32 %v1009, %v1320
        %v1322 = vpop.f32.mrb[0].mxu0
        %v1323 = vadd.f32 %v1009, %v1322
        %1324 = vdwg.mxu0
        %1325 = vmatprep.subr.mxu0 %v972
        %1326 = vmatpush1.msra.mxu0 %v971
        %1327 = vmatprep.subr.mxu0 %v988
        %1328 = vmatpush1.msra.mxu0 %v987
        %1329 = vmatprep.subr.mxu0 0.0
        %1330 = vmatpush1.msra.mxu0 0.0
        %1331 = vmatprep.subr.mxu0 0.0
        %1332 = vmatpush1.msra.mxu0 0.0
        %1333 = vmatprep.subr.mxu0 0.0
        %1334 = vmatpush1.msra.mxu0 0.0
        %1335 = vmatprep.subr.mxu0 0.0
        %1336 = vmatpush1.msra.mxu0 0.0
        %1337 = vmatprep.subr.mxu0 0.0
        %1338 = vmatpush1.msra.mxu0 0.0
        %1339 = vmatprep.subr.mxu0 0.0
        %1340 = vmatpush1.msra.mxu0 0.0
        %1341 = vmatprep.subr.mxu0 0.0
        %1342 = vmatpush1.msra.mxu0 0.0
        %1343 = vmatprep.subr.mxu0 0.0
        %1344 = vmatpush1.msra.mxu0 0.0
        %1345 = vmatprep.subr.mxu0 0.0
        %1346 = vmatpush1.msra.mxu0 0.0
        %1347 = vmatprep.subr.mxu0 0.0
        %1348 = vmatpush1.msra.mxu0 0.0
        %1349 = vmatprep.subr.mxu0 0.0
        %1350 = vmatpush1.msra.mxu0 0.0
        %1351 = vmatprep.subr.mxu0 0.0
        %1352 = vmatpush1.msra.mxu0 0.0
        %1353 = vmatprep.subr.mxu0 0.0
        %1354 = vmatpush1.msra.mxu0 0.0
        %1355 = vmatprep.subr.mxu0 0.0
        %1356 = vmatpush1.msra.mxu0 0.0
        %1357 = vmatprep.subr.mxu0 0.0
        %1358 = vmatpush1.msra.mxu0 0.0
        %1359 = vmatprep.subr.mxu0 0.0
        %1360 = vmatpush1.msra.mxu0 0.0
        %1361 = vmatprep.subr.mxu0 0.0
        %1362 = vmatpush1.msra.mxu0 0.0
        %1363 = vmatprep.subr.mxu0 0.0
        %1364 = vmatpush1.msra.mxu0 0.0
        %1365 = vmatprep.subr.mxu0 0.0
        %1366 = vmatpush1.msra.mxu0 0.0
        %1367 = vmatprep.subr.mxu0 0.0
        %1368 = vmatpush1.msra.mxu0 0.0
        %1369 = vmatprep.subr.mxu0 0.0
        %1370 = vmatpush1.msra.mxu0 0.0
        %1371 = vmatprep.subr.mxu0 0.0
        %1372 = vmatpush1.msra.mxu0 0.0
        %1373 = vmatprep.subr.mxu0 0.0
        %1374 = vmatpush1.msra.mxu0 0.0
        %1375 = vmatprep.subr.mxu0 0.0
        %1376 = vmatpush1.msra.mxu0 0.0
        %1377 = vmatprep.subr.mxu0 0.0
        %1378 = vmatpush1.msra.mxu0 0.0
        %1379 = vmatprep.subr.mxu0 0.0
        %1380 = vmatpush1.msra.mxu0 0.0
        %1381 = vmatprep.subr.mxu0 0.0
        %1382 = vmatpush1.msra.mxu0 0.0
        %1383 = vmatprep.subr.mxu0 0.0
        %1384 = vmatpush1.msra.mxu0 0.0
        %1385 = vmatprep.subr.mxu0 0.0
        %1386 = vmatpush1.msra.mxu0 0.0
        %1387 = vmatprep.subr.mxu0 0.0
        %1388 = vmatpush1.msra.mxu0 0.0
        %1389 = vmatprep.mubr.f32.mxu0 0.0
        %1390 = vmatmul.mubr.f32.gmra.mrb[0].mxu0 %v1012
        %v1391 = vpop.f32.mrb[0].mxu0
        %v1392 = vadd.f32 %v1004, %v1391
        %v1393 = vpop.f32.mrb[0].mxu0
        %v1394 = vadd.f32 %v1004, %v1393
        %1395 = vmatprep.mubr.f32.mxu0 0.0
        %1396 = vmatmul.mubr.f32.gmra.mrb[0].mxu0 %v1015
        %v1397 = vpop.f32.mrb[0].mxu0
        %v1398 = vadd.f32 %v1009, %v1397
        %v1399 = vpop.f32.mrb[0].mxu0
        %v1400 = vadd.f32 %v1009, %v1399
        %1401 = vdwg.mxu0
        %1402 = vmatprep.subr.mxu0 %v974
        %1403 = vmatpush1.msra.mxu0 %v973
        %1404 = vmatprep.subr.mxu0 %v990
        %1405 = vmatpush1.msra.mxu0 %v989
        %1406 = vmatprep.subr.mxu0 0.0
        %1407 = vmatpush1.msra.mxu0 0.0
        %1408 = vmatprep.subr.mxu0 0.0
        %1409 = vmatpush1.msra.mxu0 0.0
        %1410 = vmatprep.subr.mxu0 0.0
        %1411 = vmatpush1.msra.mxu0 0.0
        %1412 = vmatprep.subr.mxu0 0.0
        %1413 = vmatpush1.msra.mxu0 0.0
        %1414 = vmatprep.subr.mxu0 0.0
        %1415 = vmatpush1.msra.mxu0 0.0
        %1416 = vmatprep.subr.mxu0 0.0
        %1417 = vmatpush1.msra.mxu0 0.0
        %1418 = vmatprep.subr.mxu0 0.0
        %1419 = vmatpush1.msra.mxu0 0.0
        %1420 = vmatprep.subr.mxu0 0.0
        %1421 = vmatpush1.msra.mxu0 0.0
        %1422 = vmatprep.subr.mxu0 0.0
        %1423 = vmatpush1.msra.mxu0 0.0
        %1424 = vmatprep.subr.mxu0 0.0
        %1425 = vmatpush1.msra.mxu0 0.0
        %1426 = vmatprep.subr.mxu0 0.0
        %1427 = vmatpush1.msra.mxu0 0.0
        %1428 = vmatprep.subr.mxu0 0.0
        %1429 = vmatpush1.msra.mxu0 0.0
        %1430 = vmatprep.subr.mxu0 0.0
        %1431 = vmatpush1.msra.mxu0 0.0
        %1432 = vmatprep.subr.mxu0 0.0
        %1433 = vmatpush1.msra.mxu0 0.0
        %1434 = vmatprep.subr.mxu0 0.0
        %1435 = vmatpush1.msra.mxu0 0.0
        %1436 = vmatprep.subr.mxu0 0.0
        %1437 = vmatpush1.msra.mxu0 0.0
        %1438 = vmatprep.subr.mxu0 0.0
        %1439 = vmatpush1.msra.mxu0 0.0
        %1440 = vmatprep.subr.mxu0 0.0
        %1441 = vmatpush1.msra.mxu0 0.0
        %1442 = vmatprep.subr.mxu0 0.0
        %1443 = vmatpush1.msra.mxu0 0.0
        %1444 = vmatprep.subr.mxu0 0.0
        %1445 = vmatpush1.msra.mxu0 0.0
        %1446 = vmatprep.subr.mxu0 0.0
        %1447 = vmatpush1.msra.mxu0 0.0
        %1448 = vmatprep.subr.mxu0 0.0
        %1449 = vmatpush1.msra.mxu0 0.0
        %1450 = vmatprep.subr.mxu0 0.0
        %1451 = vmatpush1.msra.mxu0 0.0
        %1452 = vmatprep.subr.mxu0 0.0
        %1453 = vmatpush1.msra.mxu0 0.0
        %1454 = vmatprep.subr.mxu0 0.0
        %1455 = vmatpush1.msra.mxu0 0.0
        %1456 = vmatprep.subr.mxu0 0.0
        %1457 = vmatpush1.msra.mxu0 0.0
        %1458 = vmatprep.subr.mxu0 0.0
        %1459 = vmatpush1.msra.mxu0 0.0
        %1460 = vmatprep.subr.mxu0 0.0
        %1461 = vmatpush1.msra.mxu0 0.0
        %1462 = vmatprep.subr.mxu0 0.0
        %1463 = vmatpush1.msra.mxu0 0.0
        %1464 = vmatprep.subr.mxu0 0.0
        %1465 = vmatpush1.msra.mxu0 0.0
        %1466 = vmatprep.mubr.f32.mxu0 0.0
        %1467 = vmatmul.mubr.f32.gmra.mrb[0].mxu0 %v1012
        %v1468 = vpop.f32.mrb[0].mxu0
        %v1469 = vadd.f32 %v1004, %v1468
        %v1470 = vpop.f32.mrb[0].mxu0
        %v1471 = vadd.f32 %v1004, %v1470
        %1472 = vmatprep.mubr.f32.mxu0 0.0
        %1473 = vmatmul.mubr.f32.gmra.mrb[0].mxu0 %v1015
        %v1474 = vpop.f32.mrb[0].mxu0
        %v1475 = vadd.f32 %v1009, %v1474
        %v1476 = vpop.f32.mrb[0].mxu0
        %v1477 = vadd.f32 %v1009, %v1476
        %1478 = vdwg.mxu0
        %1479 = vmatprep.subr.mxu0 %v976
        %1480 = vmatpush1.msra.mxu0 %v975
        %1481 = vmatprep.subr.mxu0 %v992
        %1482 = vmatpush1.msra.mxu0 %v991
        %1483 = vmatprep.subr.mxu0 0.0
        %1484 = vmatpush1.msra.mxu0 0.0
        %1485 = vmatprep.subr.mxu0 0.0
        %1486 = vmatpush1.msra.mxu0 0.0
        %1487 = vmatprep.subr.mxu0 0.0
        %1488 = vmatpush1.msra.mxu0 0.0
        %1489 = vmatprep.subr.mxu0 0.0
        %1490 = vmatpush1.msra.mxu0 0.0
        %1491 = vmatprep.subr.mxu0 0.0
        %1492 = vmatpush1.msra.mxu0 0.0
        %1493 = vmatprep.subr.mxu0 0.0
        %1494 = vmatpush1.msra.mxu0 0.0
        %1495 = vmatprep.subr.mxu0 0.0
        %1496 = vmatpush1.msra.mxu0 0.0
        %1497 = vmatprep.subr.mxu0 0.0
        %1498 = vmatpush1.msra.mxu0 0.0
        %1499 = vmatprep.subr.mxu0 0.0
        %1500 = vmatpush1.msra.mxu0 0.0
        %1501 = vmatprep.subr.mxu0 0.0
        %1502 = vmatpush1.msra.mxu0 0.0
        %1503 = vmatprep.subr.mxu0 0.0
        %1504 = vmatpush1.msra.mxu0 0.0
        %1505 = vmatprep.subr.mxu0 0.0
        %1506 = vmatpush1.msra.mxu0 0.0
        %1507 = vmatprep.subr.mxu0 0.0
        %1508 = vmatpush1.msra.mxu0 0.0
        %1509 = vmatprep.subr.mxu0 0.0
        %1510 = vmatpush1.msra.mxu0 0.0
        %1511 = vmatprep.subr.mxu0 0.0
        %1512 = vmatpush1.msra.mxu0 0.0
        %1513 = vmatprep.subr.mxu0 0.0
        %1514 = vmatpush1.msra.mxu0 0.0
        %1515 = vmatprep.subr.mxu0 0.0
        %1516 = vmatpush1.msra.mxu0 0.0
        %1517 = vmatprep.subr.mxu0 0.0
        %1518 = vmatpush1.msra.mxu0 0.0
        %1519 = vmatprep.subr.mxu0 0.0
        %1520 = vmatpush1.msra.mxu0 0.0
        %1521 = vmatprep.subr.mxu0 0.0
        %1522 = vmatpush1.msra.mxu0 0.0
        %1523 = vmatprep.subr.mxu0 0.0
        %1524 = vmatpush1.msra.mxu0 0.0
        %1525 = vmatprep.subr.mxu0 0.0
        %1526 = vmatpush1.msra.mxu0 0.0
        %1527 = vmatprep.subr.mxu0 0.0
        %1528 = vmatpush1.msra.mxu0 0.0
        %1529 = vmatprep.subr.mxu0 0.0
        %1530 = vmatpush1.msra.mxu0 0.0
        %1531 = vmatprep.subr.mxu0 0.0
        %1532 = vmatpush1.msra.mxu0 0.0
        %1533 = vmatprep.subr.mxu0 0.0
        %1534 = vmatpush1.msra.mxu0 0.0
        %1535 = vmatprep.subr.mxu0 0.0
        %1536 = vmatpush1.msra.mxu0 0.0
        %1537 = vmatprep.subr.mxu0 0.0
        %1538 = vmatpush1.msra.mxu0 0.0
        %1539 = vmatprep.subr.mxu0 0.0
        %1540 = vmatpush1.msra.mxu0 0.0
        %1541 = vmatprep.subr.mxu0 0.0
        %1542 = vmatpush1.msra.mxu0 0.0
        %1543 = vmatprep.mubr.f32.mxu0 0.0
        %1544 = vmatmul.mubr.f32.gmra.mrb[0].mxu0 %v1012
        %v1545 = vpop.f32.mrb[0].mxu0
        %v1546 = vadd.f32 %v1004, %v1545
        %v1547 = vpop.f32.mrb[0].mxu0
        %v1548 = vadd.f32 %v1004, %v1547
        %1549 = vmatprep.mubr.f32.mxu0 0.0
        %1550 = vmatmul.mubr.f32.gmra.mrb[0].mxu0 %v1015
        %v1551 = vpop.f32.mrb[0].mxu0
        %v1552 = vadd.f32 %v1009, %v1551
        %v1553 = vpop.f32.mrb[0].mxu0
        %v1554 = vadd.f32 %v1009, %v1553
        %1555 = vdwg.mxu0
        %1556 = vmatprep.subr.mxu0 %v978
        %1557 = vmatpush1.msra.mxu0 %v977
        %1558 = vmatprep.subr.mxu0 %v994
        %1559 = vmatpush1.msra.mxu0 %v993
        %1560 = vmatprep.subr.mxu0 0.0
        %1561 = vmatpush1.msra.mxu0 0.0
        %1562 = vmatprep.subr.mxu0 0.0
        %1563 = vmatpush1.msra.mxu0 0.0
        %1564 = vmatprep.subr.mxu0 0.0
        %1565 = vmatpush1.msra.mxu0 0.0
        %1566 = vmatprep.subr.mxu0 0.0
        %1567 = vmatpush1.msra.mxu0 0.0
        %1568 = vmatprep.subr.mxu0 0.0
        %1569 = vmatpush1.msra.mxu0 0.0
        %1570 = vmatprep.subr.mxu0 0.0
        %1571 = vmatpush1.msra.mxu0 0.0
        %1572 = vmatprep.subr.mxu0 0.0
        %1573 = vmatpush1.msra.mxu0 0.0
        %1574 = vmatprep.subr.mxu0 0.0
        %1575 = vmatpush1.msra.mxu0 0.0
        %1576 = vmatprep.subr.mxu0 0.0
        %1577 = vmatpush1.msra.mxu0 0.0
        %1578 = vmatprep.subr.mxu0 0.0
        %1579 = vmatpush1.msra.mxu0 0.0
        %1580 = vmatprep.subr.mxu0 0.0
        %1581 = vmatpush1.msra.mxu0 0.0
        %1582 = vmatprep.subr.mxu0 0.0
        %1583 = vmatpush1.msra.mxu0 0.0
        %1584 = vmatprep.subr.mxu0 0.0
        %1585 = vmatpush1.msra.mxu0 0.0
        %1586 = vmatprep.subr.mxu0 0.0
        %1587 = vmatpush1.msra.mxu0 0.0
        %1588 = vmatprep.subr.mxu0 0.0
        %1589 = vmatpush1.msra.mxu0 0.0
        %1590 = vmatprep.subr.mxu0 0.0
        %1591 = vmatpush1.msra.mxu0 0.0
        %1592 = vmatprep.subr.mxu0 0.0
        %1593 = vmatpush1.msra.mxu0 0.0
        %1594 = vmatprep.subr.mxu0 0.0
        %1595 = vmatpush1.msra.mxu0 0.0
        %1596 = vmatprep.subr.mxu0 0.0
        %1597 = vmatpush1.msra.mxu0 0.0
        %1598 = vmatprep.subr.mxu0 0.0
        %1599 = vmatpush1.msra.mxu0 0.0
        %1600 = vmatprep.subr.mxu0 0.0
        %1601 = vmatpush1.msra.mxu0 0.0
        %1602 = vmatprep.subr.mxu0 0.0
        %1603 = vmatpush1.msra.mxu0 0.0
        %1604 = vmatprep.subr.mxu0 0.0
        %1605 = vmatpush1.msra.mxu0 0.0
        %1606 = vmatprep.subr.mxu0 0.0
        %1607 = vmatpush1.msra.mxu0 0.0
        %1608 = vmatprep.subr.mxu0 0.0
        %1609 = vmatpush1.msra.mxu0 0.0
        %1610 = vmatprep.subr.mxu0 0.0
        %1611 = vmatpush1.msra.mxu0 0.0
        %1612 = vmatprep.subr.mxu0 0.0
        %1613 = vmatpush1.msra.mxu0 0.0
        %1614 = vmatprep.subr.mxu0 0.0
        %1615 = vmatpush1.msra.mxu0 0.0
        %1616 = vmatprep.subr.mxu0 0.0
        %1617 = vmatpush1.msra.mxu0 0.0
        %1618 = vmatprep.subr.mxu0 0.0
        %1619 = vmatpush1.msra.mxu0 0.0
        %1620 = vmatprep.mubr.f32.mxu0 0.0
        %1621 = vmatmul.mubr.f32.gmra.mrb[0].mxu0 %v1012
        %v1622 = vpop.f32.mrb[0].mxu0
        %v1623 = vadd.f32 %v1004, %v1622
        %v1624 = vpop.f32.mrb[0].mxu0
        %v1625 = vadd.f32 %v1004, %v1624
        %1626 = vmatprep.mubr.f32.mxu0 0.0
        %1627 = vmatmul.mubr.f32.gmra.mrb[0].mxu0 %v1015
        %v1628 = vpop.f32.mrb[0].mxu0
        %v1629 = vadd.f32 %v1009, %v1628
        %v1630 = vpop.f32.mrb[0].mxu0
        %v1631 = vadd.f32 %v1009, %v1630
        %1632 = vdwg.mxu0
        %s1633 = scalar_lea.vmem %s3, 16
        %v1634 = vld [vmem:[%s1633] sm:$0xff]
        %v1635 = vld [vmem:[%s1633 + $0x8] sm:$0xff]
        %vm1636 = vcmp.ge.f32.partialorder %v1084, 0.0
        %vm1637 = vcmp.ge.f32.partialorder %v1086, 0.0
        %vm1638 = vcmp.ge.f32.partialorder %v1161, 0.0
        %vm1639 = vcmp.ge.f32.partialorder %v1163, 0.0
        %vm1640 = vcmp.ge.f32.partialorder %v1238, 0.0
        %vm1641 = vcmp.ge.f32.partialorder %v1240, 0.0
        %vm1642 = vcmp.ge.f32.partialorder %v1315, 0.0
        %vm1643 = vcmp.ge.f32.partialorder %v1317, 0.0
        %vm1644 = vcmp.ge.f32.partialorder %v1392, 0.0
        %vm1645 = vcmp.ge.f32.partialorder %v1394, 0.0
        %vm1646 = vcmp.ge.f32.partialorder %v1469, 0.0
        %vm1647 = vcmp.ge.f32.partialorder %v1471, 0.0
        %vm1648 = vcmp.ge.f32.partialorder %v1546, 0.0
        %vm1649 = vcmp.ge.f32.partialorder %v1548, 0.0
        %vm1650 = vcmp.ge.f32.partialorder %v1623, 0.0
        %vm1651 = vcmp.ge.f32.partialorder %v1625, 0.0
        %vm1652 = vcmp.ge.f32.partialorder %v1090, 0.0
        %vm1653 = vcmp.ge.f32.partialorder %v1092, 0.0
        %vm1654 = vcmp.ge.f32.partialorder %v1167, 0.0
        %vm1655 = vcmp.ge.f32.partialorder %v1169, 0.0
        %vm1656 = vcmp.ge.f32.partialorder %v1244, 0.0
        %vm1657 = vcmp.ge.f32.partialorder %v1246, 0.0
        %vm1658 = vcmp.ge.f32.partialorder %v1321, 0.0
        %vm1659 = vcmp.ge.f32.partialorder %v1323, 0.0
        %vm1660 = vcmp.ge.f32.partialorder %v1398, 0.0
        %vm1661 = vcmp.ge.f32.partialorder %v1400, 0.0
        %vm1662 = vcmp.ge.f32.partialorder %v1475, 0.0
        %vm1663 = vcmp.ge.f32.partialorder %v1477, 0.0
        %vm1664 = vcmp.ge.f32.partialorder %v1552, 0.0
        %vm1665 = vcmp.ge.f32.partialorder %v1554, 0.0
        %vm1666 = vcmp.ge.f32.partialorder %v1629, 0.0
        %vm1667 = vcmp.ge.f32.partialorder %v1631, 0.0
        %1669 = vset.pattern.permute.xlu0 0
        %1670 = vperm.xlu0 %1669, %v1634
        %v1671 = vpop.permute.xlu0 %1670
        %1674 = vset.pattern.permute.xlu0 0
        %1675 = vperm.xlu0 %1674, %v1635
        %v1676 = vpop.permute.xlu0 %1675
        %v1678 = vmul.f32 %v1671, %v1084
        %v1679 = vmul.f32 %v1671, %v1086
        %v1680 = vmul.f32 %v1671, %v1161
        %v1681 = vmul.f32 %v1671, %v1163
        %v1682 = vmul.f32 %v1671, %v1238
        %v1683 = vmul.f32 %v1671, %v1240
        %v1684 = vmul.f32 %v1671, %v1315
        %v1685 = vmul.f32 %v1671, %v1317
        %v1686 = vmul.f32 %v1671, %v1392
        %v1687 = vmul.f32 %v1671, %v1394
        %v1688 = vmul.f32 %v1671, %v1469
        %v1689 = vmul.f32 %v1671, %v1471
        %v1690 = vmul.f32 %v1671, %v1546
        %v1691 = vmul.f32 %v1671, %v1548
        %v1692 = vmul.f32 %v1671, %v1623
        %v1693 = vmul.f32 %v1671, %v1625
        %v1694 = vmul.f32 %v1676, %v1090
        %v1695 = vmul.f32 %v1676, %v1092
        %v1696 = vmul.f32 %v1676, %v1167
        %v1697 = vmul.f32 %v1676, %v1169
        %v1698 = vmul.f32 %v1676, %v1244
        %v1699 = vmul.f32 %v1676, %v1246
        %v1700 = vmul.f32 %v1676, %v1321
        %v1701 = vmul.f32 %v1676, %v1323
        %v1702 = vmul.f32 %v1676, %v1398
        %v1703 = vmul.f32 %v1676, %v1400
        %v1704 = vmul.f32 %v1676, %v1475
        %v1705 = vmul.f32 %v1676, %v1477
        %v1706 = vmul.f32 %v1676, %v1552
        %v1707 = vmul.f32 %v1676, %v1554
        %v1708 = vmul.f32 %v1676, %v1629
        %v1709 = vmul.f32 %v1676, %v1631
        %v1710 = vsel %vm1636, %v1084, %v1678
        %v1711 = vsel %vm1637, %v1086, %v1679
        %v1712 = vsel %vm1638, %v1161, %v1680
        %v1713 = vsel %vm1639, %v1163, %v1681
        %v1714 = vsel %vm1640, %v1238, %v1682
        %v1715 = vsel %vm1641, %v1240, %v1683
        %v1716 = vsel %vm1642, %v1315, %v1684
        %v1717 = vsel %vm1643, %v1317, %v1685
        %v1718 = vsel %vm1644, %v1392, %v1686
        %v1719 = vsel %vm1645, %v1394, %v1687
        %v1720 = vsel %vm1646, %v1469, %v1688
        %v1721 = vsel %vm1647, %v1471, %v1689
        %v1722 = vsel %vm1648, %v1546, %v1690
        %v1723 = vsel %vm1649, %v1548, %v1691
        %v1724 = vsel %vm1650, %v1623, %v1692
        %v1725 = vsel %vm1651, %v1625, %v1693
        %v1726 = vsel %vm1652, %v1090, %v1694
        %v1727 = vsel %vm1653, %v1092, %v1695
        %v1728 = vsel %vm1654, %v1167, %v1696
        %v1729 = vsel %vm1655, %v1169, %v1697
        %v1730 = vsel %vm1656, %v1244, %v1698
        %v1731 = vsel %vm1657, %v1246, %v1699
        %v1732 = vsel %vm1658, %v1321, %v1700
        %v1733 = vsel %vm1659, %v1323, %v1701
        %v1734 = vsel %vm1660, %v1398, %v1702
        %v1735 = vsel %vm1661, %v1400, %v1703
        %v1736 = vsel %vm1662, %v1475, %v1704
        %v1737 = vsel %vm1663, %v1477, %v1705
        %v1738 = vsel %vm1664, %v1552, %v1706
        %v1739 = vsel %vm1665, %v1554, %v1707
        %v1740 = vsel %vm1666, %v1629, %v1708
        %v1741 = vsel %vm1667, %v1631, %v1709
        %s1742 = scalar_lea.vmem %s1, 32
        %v1743 = vld [vmem:[%s1742] sm:$0xff]
        %v1744 = vld [vmem:[%s1742 + $0x8] sm:$0xff]
        %s1745 = scalar_lea.vmem %s2, 32
        %v1746 = vld [vmem:[%s1745] sm:$0xff]
        %v1747 = vld [vmem:[%s1745 + $0x8] sm:$0xff]
        %1749 = vset.pattern.permute.xlu0 0
        %1750 = vperm.xlu0 %1749, %v1746
        %v1751 = vpop.permute.xlu0 %1750
        %1754 = vset.pattern.permute.xlu0 0
        %1755 = vperm.xlu0 %1754, %v1747
        %v1756 = vpop.permute.xlu0 %1755
        %v1759 = vsel %vm264, %v1743, 0
        %v1762 = vsel %vm264, %v1744, 0
        %1764 = vmatprep.subr.mxu0 %v1711
        %1765 = vmatpush1.msra.mxu0 %v1710
        %1766 = vmatprep.subr.mxu0 %v1727
        %1767 = vmatpush1.msra.mxu0 %v1726
        %1768 = vmatprep.subr.mxu0 0.0
        %1769 = vmatpush1.msra.mxu0 0.0
        %1770 = vmatprep.subr.mxu0 0.0
        %1771 = vmatpush1.msra.mxu0 0.0
        %1772 = vmatprep.subr.mxu0 0.0
        %1773 = vmatpush1.msra.mxu0 0.0
        %1774 = vmatprep.subr.mxu0 0.0
        %1775 = vmatpush1.msra.mxu0 0.0
        %1776 = vmatprep.subr.mxu0 0.0
        %1777 = vmatpush1.msra.mxu0 0.0
        %1778 = vmatprep.subr.mxu0 0.0
        %1779 = vmatpush1.msra.mxu0 0.0
        %1780 = vmatprep.subr.mxu0 0.0
        %1781 = vmatpush1.msra.mxu0 0.0
        %1782 = vmatprep.subr.mxu0 0.0
        %1783 = vmatpush1.msra.mxu0 0.0
        %1784 = vmatprep.subr.mxu0 0.0
        %1785 = vmatpush1.msra.mxu0 0.0
        %1786 = vmatprep.subr.mxu0 0.0
        %1787 = vmatpush1.msra.mxu0 0.0
        %1788 = vmatprep.subr.mxu0 0.0
        %1789 = vmatpush1.msra.mxu0 0.0
        %1790 = vmatprep.subr.mxu0 0.0
        %1791 = vmatpush1.msra.mxu0 0.0
        %1792 = vmatprep.subr.mxu0 0.0
        %1793 = vmatpush1.msra.mxu0 0.0
        %1794 = vmatprep.subr.mxu0 0.0
        %1795 = vmatpush1.msra.mxu0 0.0
        %1796 = vmatprep.subr.mxu0 0.0
        %1797 = vmatpush1.msra.mxu0 0.0
        %1798 = vmatprep.subr.mxu0 0.0
        %1799 = vmatpush1.msra.mxu0 0.0
        %1800 = vmatprep.subr.mxu0 0.0
        %1801 = vmatpush1.msra.mxu0 0.0
        %1802 = vmatprep.subr.mxu0 0.0
        %1803 = vmatpush1.msra.mxu0 0.0
        %1804 = vmatprep.subr.mxu0 0.0
        %1805 = vmatpush1.msra.mxu0 0.0
        %1806 = vmatprep.subr.mxu0 0.0
        %1807 = vmatpush1.msra.mxu0 0.0
        %1808 = vmatprep.subr.mxu0 0.0
        %1809 = vmatpush1.msra.mxu0 0.0
        %1810 = vmatprep.subr.mxu0 0.0
        %1811 = vmatpush1.msra.mxu0 0.0
        %1812 = vmatprep.subr.mxu0 0.0
        %1813 = vmatpush1.msra.mxu0 0.0
        %1814 = vmatprep.subr.mxu0 0.0
        %1815 = vmatpush1.msra.mxu0 0.0
        %1816 = vmatprep.subr.mxu0 0.0
        %1817 = vmatpush1.msra.mxu0 0.0
        %1818 = vmatprep.subr.mxu0 0.0
        %1819 = vmatpush1.msra.mxu0 0.0
        %1820 = vmatprep.subr.mxu0 0.0
        %1821 = vmatpush1.msra.mxu0 0.0
        %1822 = vmatprep.subr.mxu0 0.0
        %1823 = vmatpush1.msra.mxu0 0.0
        %1824 = vmatprep.subr.mxu0 0.0
        %1825 = vmatpush1.msra.mxu0 0.0
        %1826 = vmatprep.subr.mxu0 0.0
        %1827 = vmatpush1.msra.mxu0 0.0
        %1828 = vmatprep.mubr.f32.mxu0 0.0
        %1829 = vmatmul.mubr.f32.gmra.mrb[0].mxu0 %v1759
        %v1830 = vpop.f32.mrb[0].mxu0
        %v1831 = vadd.f32 %v1751, %v1830
        %v1832 = vpop.f32.mrb[0].mxu0
        %v1833 = vadd.f32 %v1751, %v1832
        %1834 = vmatprep.mubr.f32.mxu0 0.0
        %1835 = vmatmul.mubr.f32.gmra.mrb[0].mxu0 %v1762
        %v1836 = vpop.f32.mrb[0].mxu0
        %v1837 = vadd.f32 %v1756, %v1836
        %v1838 = vpop.f32.mrb[0].mxu0
        %v1839 = vadd.f32 %v1756, %v1838
        %1840 = vdwg.mxu0
        %1841 = vmatprep.subr.mxu0 %v1713
        %1842 = vmatpush1.msra.mxu0 %v1712
        %1843 = vmatprep.subr.mxu0 %v1729
        %1844 = vmatpush1.msra.mxu0 %v1728
        %1845 = vmatprep.subr.mxu0 0.0
        %1846 = vmatpush1.msra.mxu0 0.0
        %1847 = vmatprep.subr.mxu0 0.0
        %1848 = vmatpush1.msra.mxu0 0.0
        %1849 = vmatprep.subr.mxu0 0.0
        %1850 = vmatpush1.msra.mxu0 0.0
        %1851 = vmatprep.subr.mxu0 0.0
        %1852 = vmatpush1.msra.mxu0 0.0
        %1853 = vmatprep.subr.mxu0 0.0
        %1854 = vmatpush1.msra.mxu0 0.0
        %1855 = vmatprep.subr.mxu0 0.0
        %1856 = vmatpush1.msra.mxu0 0.0
        %1857 = vmatprep.subr.mxu0 0.0
        %1858 = vmatpush1.msra.mxu0 0.0
        %1859 = vmatprep.subr.mxu0 0.0
        %1860 = vmatpush1.msra.mxu0 0.0
        %1861 = vmatprep.subr.mxu0 0.0
        %1862 = vmatpush1.msra.mxu0 0.0
        %1863 = vmatprep.subr.mxu0 0.0
        %1864 = vmatpush1.msra.mxu0 0.0
        %1865 = vmatprep.subr.mxu0 0.0
        %1866 = vmatpush1.msra.mxu0 0.0
        %1867 = vmatprep.subr.mxu0 0.0
        %1868 = vmatpush1.msra.mxu0 0.0
        %1869 = vmatprep.subr.mxu0 0.0
        %1870 = vmatpush1.msra.mxu0 0.0
        %1871 = vmatprep.subr.mxu0 0.0
        %1872 = vmatpush1.msra.mxu0 0.0
        %1873 = vmatprep.subr.mxu0 0.0
        %1874 = vmatpush1.msra.mxu0 0.0
        %1875 = vmatprep.subr.mxu0 0.0
        %1876 = vmatpush1.msra.mxu0 0.0
        %1877 = vmatprep.subr.mxu0 0.0
        %1878 = vmatpush1.msra.mxu0 0.0
        %1879 = vmatprep.subr.mxu0 0.0
        %1880 = vmatpush1.msra.mxu0 0.0
        %1881 = vmatprep.subr.mxu0 0.0
        %1882 = vmatpush1.msra.mxu0 0.0
        %1883 = vmatprep.subr.mxu0 0.0
        %1884 = vmatpush1.msra.mxu0 0.0
        %1885 = vmatprep.subr.mxu0 0.0
        %1886 = vmatpush1.msra.mxu0 0.0
        %1887 = vmatprep.subr.mxu0 0.0
        %1888 = vmatpush1.msra.mxu0 0.0
        %1889 = vmatprep.subr.mxu0 0.0
        %1890 = vmatpush1.msra.mxu0 0.0
        %1891 = vmatprep.subr.mxu0 0.0
        %1892 = vmatpush1.msra.mxu0 0.0
        %1893 = vmatprep.subr.mxu0 0.0
        %1894 = vmatpush1.msra.mxu0 0.0
        %1895 = vmatprep.subr.mxu0 0.0
        %1896 = vmatpush1.msra.mxu0 0.0
        %1897 = vmatprep.subr.mxu0 0.0
        %1898 = vmatpush1.msra.mxu0 0.0
        %1899 = vmatprep.subr.mxu0 0.0
        %1900 = vmatpush1.msra.mxu0 0.0
        %1901 = vmatprep.subr.mxu0 0.0
        %1902 = vmatpush1.msra.mxu0 0.0
        %1903 = vmatprep.subr.mxu0 0.0
        %1904 = vmatpush1.msra.mxu0 0.0
        %1905 = vmatprep.mubr.f32.mxu0 0.0
        %1906 = vmatmul.mubr.f32.gmra.mrb[0].mxu0 %v1759
        %v1907 = vpop.f32.mrb[0].mxu0
        %v1908 = vadd.f32 %v1751, %v1907
        %v1909 = vpop.f32.mrb[0].mxu0
        %v1910 = vadd.f32 %v1751, %v1909
        %1911 = vmatprep.mubr.f32.mxu0 0.0
        %1912 = vmatmul.mubr.f32.gmra.mrb[0].mxu0 %v1762
        %v1913 = vpop.f32.mrb[0].mxu0
        %v1914 = vadd.f32 %v1756, %v1913
        %v1915 = vpop.f32.mrb[0].mxu0
        %v1916 = vadd.f32 %v1756, %v1915
        %1917 = vdwg.mxu0
        %1918 = vmatprep.subr.mxu0 %v1715
        %1919 = vmatpush1.msra.mxu0 %v1714
        %1920 = vmatprep.subr.mxu0 %v1731
        %1921 = vmatpush1.msra.mxu0 %v1730
        %1922 = vmatprep.subr.mxu0 0.0
        %1923 = vmatpush1.msra.mxu0 0.0
        %1924 = vmatprep.subr.mxu0 0.0
        %1925 = vmatpush1.msra.mxu0 0.0
        %1926 = vmatprep.subr.mxu0 0.0
        %1927 = vmatpush1.msra.mxu0 0.0
        %1928 = vmatprep.subr.mxu0 0.0
        %1929 = vmatpush1.msra.mxu0 0.0
        %1930 = vmatprep.subr.mxu0 0.0
        %1931 = vmatpush1.msra.mxu0 0.0
        %1932 = vmatprep.subr.mxu0 0.0
        %1933 = vmatpush1.msra.mxu0 0.0
        %1934 = vmatprep.subr.mxu0 0.0
        %1935 = vmatpush1.msra.mxu0 0.0
        %1936 = vmatprep.subr.mxu0 0.0
        %1937 = vmatpush1.msra.mxu0 0.0
        %1938 = vmatprep.subr.mxu0 0.0
        %1939 = vmatpush1.msra.mxu0 0.0
        %1940 = vmatprep.subr.mxu0 0.0
        %1941 = vmatpush1.msra.mxu0 0.0
        %1942 = vmatprep.subr.mxu0 0.0
        %1943 = vmatpush1.msra.mxu0 0.0
        %1944 = vmatprep.subr.mxu0 0.0
        %1945 = vmatpush1.msra.mxu0 0.0
        %1946 = vmatprep.subr.mxu0 0.0
        %1947 = vmatpush1.msra.mxu0 0.0
        %1948 = vmatprep.subr.mxu0 0.0
        %1949 = vmatpush1.msra.mxu0 0.0
        %1950 = vmatprep.subr.mxu0 0.0
        %1951 = vmatpush1.msra.mxu0 0.0
        %1952 = vmatprep.subr.mxu0 0.0
        %1953 = vmatpush1.msra.mxu0 0.0
        %1954 = vmatprep.subr.mxu0 0.0
        %1955 = vmatpush1.msra.mxu0 0.0
        %1956 = vmatprep.subr.mxu0 0.0
        %1957 = vmatpush1.msra.mxu0 0.0
        %1958 = vmatprep.subr.mxu0 0.0
        %1959 = vmatpush1.msra.mxu0 0.0
        %1960 = vmatprep.subr.mxu0 0.0
        %1961 = vmatpush1.msra.mxu0 0.0
        %1962 = vmatprep.subr.mxu0 0.0
        %1963 = vmatpush1.msra.mxu0 0.0
        %1964 = vmatprep.subr.mxu0 0.0
        %1965 = vmatpush1.msra.mxu0 0.0
        %1966 = vmatprep.subr.mxu0 0.0
        %1967 = vmatpush1.msra.mxu0 0.0
        %1968 = vmatprep.subr.mxu0 0.0
        %1969 = vmatpush1.msra.mxu0 0.0
        %1970 = vmatprep.subr.mxu0 0.0
        %1971 = vmatpush1.msra.mxu0 0.0
        %1972 = vmatprep.subr.mxu0 0.0
        %1973 = vmatpush1.msra.mxu0 0.0
        %1974 = vmatprep.subr.mxu0 0.0
        %1975 = vmatpush1.msra.mxu0 0.0
        %1976 = vmatprep.subr.mxu0 0.0
        %1977 = vmatpush1.msra.mxu0 0.0
        %1978 = vmatprep.subr.mxu0 0.0
        %1979 = vmatpush1.msra.mxu0 0.0
        %1980 = vmatprep.subr.mxu0 0.0
        %1981 = vmatpush1.msra.mxu0 0.0
        %1982 = vmatprep.mubr.f32.mxu0 0.0
        %1983 = vmatmul.mubr.f32.gmra.mrb[0].mxu0 %v1759
        %v1984 = vpop.f32.mrb[0].mxu0
        %v1985 = vadd.f32 %v1751, %v1984
        %v1986 = vpop.f32.mrb[0].mxu0
        %v1987 = vadd.f32 %v1751, %v1986
        %1988 = vmatprep.mubr.f32.mxu0 0.0
        %1989 = vmatmul.mubr.f32.gmra.mrb[0].mxu0 %v1762
        %v1990 = vpop.f32.mrb[0].mxu0
        %v1991 = vadd.f32 %v1756, %v1990
        %v1992 = vpop.f32.mrb[0].mxu0
        %v1993 = vadd.f32 %v1756, %v1992
        %1994 = vdwg.mxu0
        %1995 = vmatprep.subr.mxu0 %v1717
        %1996 = vmatpush1.msra.mxu0 %v1716
        %1997 = vmatprep.subr.mxu0 %v1733
        %1998 = vmatpush1.msra.mxu0 %v1732
        %1999 = vmatprep.subr.mxu0 0.0
        %2000 = vmatpush1.msra.mxu0 0.0
        %2001 = vmatprep.subr.mxu0 0.0
        %2002 = vmatpush1.msra.mxu0 0.0
        %2003 = vmatprep.subr.mxu0 0.0
        %2004 = vmatpush1.msra.mxu0 0.0
        %2005 = vmatprep.subr.mxu0 0.0
        %2006 = vmatpush1.msra.mxu0 0.0
        %2007 = vmatprep.subr.mxu0 0.0
        %2008 = vmatpush1.msra.mxu0 0.0
        %2009 = vmatprep.subr.mxu0 0.0
        %2010 = vmatpush1.msra.mxu0 0.0
        %2011 = vmatprep.subr.mxu0 0.0
        %2012 = vmatpush1.msra.mxu0 0.0
        %2013 = vmatprep.subr.mxu0 0.0
        %2014 = vmatpush1.msra.mxu0 0.0
        %2015 = vmatprep.subr.mxu0 0.0
        %2016 = vmatpush1.msra.mxu0 0.0
        %2017 = vmatprep.subr.mxu0 0.0
        %2018 = vmatpush1.msra.mxu0 0.0
        %2019 = vmatprep.subr.mxu0 0.0
        %2020 = vmatpush1.msra.mxu0 0.0
        %2021 = vmatprep.subr.mxu0 0.0
        %2022 = vmatpush1.msra.mxu0 0.0
        %2023 = vmatprep.subr.mxu0 0.0
        %2024 = vmatpush1.msra.mxu0 0.0
        %2025 = vmatprep.subr.mxu0 0.0
        %2026 = vmatpush1.msra.mxu0 0.0
        %2027 = vmatprep.subr.mxu0 0.0
        %2028 = vmatpush1.msra.mxu0 0.0
        %2029 = vmatprep.subr.mxu0 0.0
        %2030 = vmatpush1.msra.mxu0 0.0
        %2031 = vmatprep.subr.mxu0 0.0
        %2032 = vmatpush1.msra.mxu0 0.0
        %2033 = vmatprep.subr.mxu0 0.0
        %2034 = vmatpush1.msra.mxu0 0.0
        %2035 = vmatprep.subr.mxu0 0.0
        %2036 = vmatpush1.msra.mxu0 0.0
        %2037 = vmatprep.subr.mxu0 0.0
        %2038 = vmatpush1.msra.mxu0 0.0
        %2039 = vmatprep.subr.mxu0 0.0
        %2040 = vmatpush1.msra.mxu0 0.0
        %2041 = vmatprep.subr.mxu0 0.0
        %2042 = vmatpush1.msra.mxu0 0.0
        %2043 = vmatprep.subr.mxu0 0.0
        %2044 = vmatpush1.msra.mxu0 0.0
        %2045 = vmatprep.subr.mxu0 0.0
        %2046 = vmatpush1.msra.mxu0 0.0
        %2047 = vmatprep.subr.mxu0 0.0
        %2048 = vmatpush1.msra.mxu0 0.0
        %2049 = vmatprep.subr.mxu0 0.0
        %2050 = vmatpush1.msra.mxu0 0.0
        %2051 = vmatprep.subr.mxu0 0.0
        %2052 = vmatpush1.msra.mxu0 0.0
        %2053 = vmatprep.subr.mxu0 0.0
        %2054 = vmatpush1.msra.mxu0 0.0
        %2055 = vmatprep.subr.mxu0 0.0
        %2056 = vmatpush1.msra.mxu0 0.0
        %2057 = vmatprep.subr.mxu0 0.0
        %2058 = vmatpush1.msra.mxu0 0.0
        %2059 = vmatprep.mubr.f32.mxu0 0.0
        %2060 = vmatmul.mubr.f32.gmra.mrb[0].mxu0 %v1759
        %v2061 = vpop.f32.mrb[0].mxu0
        %v2062 = vadd.f32 %v1751, %v2061
        %v2063 = vpop.f32.mrb[0].mxu0
        %v2064 = vadd.f32 %v1751, %v2063
        %2065 = vmatprep.mubr.f32.mxu0 0.0
        %2066 = vmatmul.mubr.f32.gmra.mrb[0].mxu0 %v1762
        %v2067 = vpop.f32.mrb[0].mxu0
        %v2068 = vadd.f32 %v1756, %v2067
        %v2069 = vpop.f32.mrb[0].mxu0
        %v2070 = vadd.f32 %v1756, %v2069
        %2071 = vdwg.mxu0
        %2072 = vmatprep.subr.mxu0 %v1719
        %2073 = vmatpush1.msra.mxu0 %v1718
        %2074 = vmatprep.subr.mxu0 %v1735
        %2075 = vmatpush1.msra.mxu0 %v1734
        %2076 = vmatprep.subr.mxu0 0.0
        %2077 = vmatpush1.msra.mxu0 0.0
        %2078 = vmatprep.subr.mxu0 0.0
        %2079 = vmatpush1.msra.mxu0 0.0
        %2080 = vmatprep.subr.mxu0 0.0
        %2081 = vmatpush1.msra.mxu0 0.0
        %2082 = vmatprep.subr.mxu0 0.0
        %2083 = vmatpush1.msra.mxu0 0.0
        %2084 = vmatprep.subr.mxu0 0.0
        %2085 = vmatpush1.msra.mxu0 0.0
        %2086 = vmatprep.subr.mxu0 0.0
        %2087 = vmatpush1.msra.mxu0 0.0
        %2088 = vmatprep.subr.mxu0 0.0
        %2089 = vmatpush1.msra.mxu0 0.0
        %2090 = vmatprep.subr.mxu0 0.0
        %2091 = vmatpush1.msra.mxu0 0.0
        %2092 = vmatprep.subr.mxu0 0.0
        %2093 = vmatpush1.msra.mxu0 0.0
        %2094 = vmatprep.subr.mxu0 0.0
        %2095 = vmatpush1.msra.mxu0 0.0
        %2096 = vmatprep.subr.mxu0 0.0
        %2097 = vmatpush1.msra.mxu0 0.0
        %2098 = vmatprep.subr.mxu0 0.0
        %2099 = vmatpush1.msra.mxu0 0.0
        %2100 = vmatprep.subr.mxu0 0.0
        %2101 = vmatpush1.msra.mxu0 0.0
        %2102 = vmatprep.subr.mxu0 0.0
        %2103 = vmatpush1.msra.mxu0 0.0
        %2104 = vmatprep.subr.mxu0 0.0
        %2105 = vmatpush1.msra.mxu0 0.0
        %2106 = vmatprep.subr.mxu0 0.0
        %2107 = vmatpush1.msra.mxu0 0.0
        %2108 = vmatprep.subr.mxu0 0.0
        %2109 = vmatpush1.msra.mxu0 0.0
        %2110 = vmatprep.subr.mxu0 0.0
        %2111 = vmatpush1.msra.mxu0 0.0
        %2112 = vmatprep.subr.mxu0 0.0
        %2113 = vmatpush1.msra.mxu0 0.0
        %2114 = vmatprep.subr.mxu0 0.0
        %2115 = vmatpush1.msra.mxu0 0.0
        %2116 = vmatprep.subr.mxu0 0.0
        %2117 = vmatpush1.msra.mxu0 0.0
        %2118 = vmatprep.subr.mxu0 0.0
        %2119 = vmatpush1.msra.mxu0 0.0
        %2120 = vmatprep.subr.mxu0 0.0
        %2121 = vmatpush1.msra.mxu0 0.0
        %2122 = vmatprep.subr.mxu0 0.0
        %2123 = vmatpush1.msra.mxu0 0.0
        %2124 = vmatprep.subr.mxu0 0.0
        %2125 = vmatpush1.msra.mxu0 0.0
        %2126 = vmatprep.subr.mxu0 0.0
        %2127 = vmatpush1.msra.mxu0 0.0
        %2128 = vmatprep.subr.mxu0 0.0
        %2129 = vmatpush1.msra.mxu0 0.0
        %2130 = vmatprep.subr.mxu0 0.0
        %2131 = vmatpush1.msra.mxu0 0.0
        %2132 = vmatprep.subr.mxu0 0.0
        %2133 = vmatpush1.msra.mxu0 0.0
        %2134 = vmatprep.subr.mxu0 0.0
        %2135 = vmatpush1.msra.mxu0 0.0
        %2136 = vmatprep.mubr.f32.mxu0 0.0
        %2137 = vmatmul.mubr.f32.gmra.mrb[0].mxu0 %v1759
        %v2138 = vpop.f32.mrb[0].mxu0
        %v2139 = vadd.f32 %v1751, %v2138
        %v2140 = vpop.f32.mrb[0].mxu0
        %v2141 = vadd.f32 %v1751, %v2140
        %2142 = vmatprep.mubr.f32.mxu0 0.0
        %2143 = vmatmul.mubr.f32.gmra.mrb[0].mxu0 %v1762
        %v2144 = vpop.f32.mrb[0].mxu0
        %v2145 = vadd.f32 %v1756, %v2144
        %v2146 = vpop.f32.mrb[0].mxu0
        %v2147 = vadd.f32 %v1756, %v2146
        %2148 = vdwg.mxu0
        %2149 = vmatprep.subr.mxu0 %v1721
        %2150 = vmatpush1.msra.mxu0 %v1720
        %2151 = vmatprep.subr.mxu0 %v1737
        %2152 = vmatpush1.msra.mxu0 %v1736
        %2153 = vmatprep.subr.mxu0 0.0
        %2154 = vmatpush1.msra.mxu0 0.0
        %2155 = vmatprep.subr.mxu0 0.0
        %2156 = vmatpush1.msra.mxu0 0.0
        %2157 = vmatprep.subr.mxu0 0.0
        %2158 = vmatpush1.msra.mxu0 0.0
        %2159 = vmatprep.subr.mxu0 0.0
        %2160 = vmatpush1.msra.mxu0 0.0
        %2161 = vmatprep.subr.mxu0 0.0
        %2162 = vmatpush1.msra.mxu0 0.0
        %2163 = vmatprep.subr.mxu0 0.0
        %2164 = vmatpush1.msra.mxu0 0.0
        %2165 = vmatprep.subr.mxu0 0.0
        %2166 = vmatpush1.msra.mxu0 0.0
        %2167 = vmatprep.subr.mxu0 0.0
        %2168 = vmatpush1.msra.mxu0 0.0
        %2169 = vmatprep.subr.mxu0 0.0
        %2170 = vmatpush1.msra.mxu0 0.0
        %2171 = vmatprep.subr.mxu0 0.0
        %2172 = vmatpush1.msra.mxu0 0.0
        %2173 = vmatprep.subr.mxu0 0.0
        %2174 = vmatpush1.msra.mxu0 0.0
        %2175 = vmatprep.subr.mxu0 0.0
        %2176 = vmatpush1.msra.mxu0 0.0
        %2177 = vmatprep.subr.mxu0 0.0
        %2178 = vmatpush1.msra.mxu0 0.0
        %2179 = vmatprep.subr.mxu0 0.0
        %2180 = vmatpush1.msra.mxu0 0.0
        %2181 = vmatprep.subr.mxu0 0.0
        %2182 = vmatpush1.msra.mxu0 0.0
        %2183 = vmatprep.subr.mxu0 0.0
        %2184 = vmatpush1.msra.mxu0 0.0
        %2185 = vmatprep.subr.mxu0 0.0
        %2186 = vmatpush1.msra.mxu0 0.0
        %2187 = vmatprep.subr.mxu0 0.0
        %2188 = vmatpush1.msra.mxu0 0.0
        %2189 = vmatprep.subr.mxu0 0.0
        %2190 = vmatpush1.msra.mxu0 0.0
        %2191 = vmatprep.subr.mxu0 0.0
        %2192 = vmatpush1.msra.mxu0 0.0
        %2193 = vmatprep.subr.mxu0 0.0
        %2194 = vmatpush1.msra.mxu0 0.0
        %2195 = vmatprep.subr.mxu0 0.0
        %2196 = vmatpush1.msra.mxu0 0.0
        %2197 = vmatprep.subr.mxu0 0.0
        %2198 = vmatpush1.msra.mxu0 0.0
        %2199 = vmatprep.subr.mxu0 0.0
        %2200 = vmatpush1.msra.mxu0 0.0
        %2201 = vmatprep.subr.mxu0 0.0
        %2202 = vmatpush1.msra.mxu0 0.0
        %2203 = vmatprep.subr.mxu0 0.0
        %2204 = vmatpush1.msra.mxu0 0.0
        %2205 = vmatprep.subr.mxu0 0.0
        %2206 = vmatpush1.msra.mxu0 0.0
        %2207 = vmatprep.subr.mxu0 0.0
        %2208 = vmatpush1.msra.mxu0 0.0
        %2209 = vmatprep.subr.mxu0 0.0
        %2210 = vmatpush1.msra.mxu0 0.0
        %2211 = vmatprep.subr.mxu0 0.0
        %2212 = vmatpush1.msra.mxu0 0.0
        %2213 = vmatprep.mubr.f32.mxu0 0.0
        %2214 = vmatmul.mubr.f32.gmra.mrb[0].mxu0 %v1759
        %v2215 = vpop.f32.mrb[0].mxu0
        %v2216 = vadd.f32 %v1751, %v2215
        %v2217 = vpop.f32.mrb[0].mxu0
        %v2218 = vadd.f32 %v1751, %v2217
        %2219 = vmatprep.mubr.f32.mxu0 0.0
        %2220 = vmatmul.mubr.f32.gmra.mrb[0].mxu0 %v1762
        %v2221 = vpop.f32.mrb[0].mxu0
        %v2222 = vadd.f32 %v1756, %v2221
        %v2223 = vpop.f32.mrb[0].mxu0
        %v2224 = vadd.f32 %v1756, %v2223
        %2225 = vdwg.mxu0
        %2226 = vmatprep.subr.mxu0 %v1723
        %2227 = vmatpush1.msra.mxu0 %v1722
        %2228 = vmatprep.subr.mxu0 %v1739
        %2229 = vmatpush1.msra.mxu0 %v1738
        %2230 = vmatprep.subr.mxu0 0.0
        %2231 = vmatpush1.msra.mxu0 0.0
        %2232 = vmatprep.subr.mxu0 0.0
        %2233 = vmatpush1.msra.mxu0 0.0
        %2234 = vmatprep.subr.mxu0 0.0
        %2235 = vmatpush1.msra.mxu0 0.0
        %2236 = vmatprep.subr.mxu0 0.0
        %2237 = vmatpush1.msra.mxu0 0.0
        %2238 = vmatprep.subr.mxu0 0.0
        %2239 = vmatpush1.msra.mxu0 0.0
        %2240 = vmatprep.subr.mxu0 0.0
        %2241 = vmatpush1.msra.mxu0 0.0
        %2242 = vmatprep.subr.mxu0 0.0
        %2243 = vmatpush1.msra.mxu0 0.0
        %2244 = vmatprep.subr.mxu0 0.0
        %2245 = vmatpush1.msra.mxu0 0.0
        %2246 = vmatprep.subr.mxu0 0.0
        %2247 = vmatpush1.msra.mxu0 0.0
        %2248 = vmatprep.subr.mxu0 0.0
        %2249 = vmatpush1.msra.mxu0 0.0
        %2250 = vmatprep.subr.mxu0 0.0
        %2251 = vmatpush1.msra.mxu0 0.0
        %2252 = vmatprep.subr.mxu0 0.0
        %2253 = vmatpush1.msra.mxu0 0.0
        %2254 = vmatprep.subr.mxu0 0.0
        %2255 = vmatpush1.msra.mxu0 0.0
        %2256 = vmatprep.subr.mxu0 0.0
        %2257 = vmatpush1.msra.mxu0 0.0
        %2258 = vmatprep.subr.mxu0 0.0
        %2259 = vmatpush1.msra.mxu0 0.0
        %2260 = vmatprep.subr.mxu0 0.0
        %2261 = vmatpush1.msra.mxu0 0.0
        %2262 = vmatprep.subr.mxu0 0.0
        %2263 = vmatpush1.msra.mxu0 0.0
        %2264 = vmatprep.subr.mxu0 0.0
        %2265 = vmatpush1.msra.mxu0 0.0
        %2266 = vmatprep.subr.mxu0 0.0
        %2267 = vmatpush1.msra.mxu0 0.0
        %2268 = vmatprep.subr.mxu0 0.0
        %2269 = vmatpush1.msra.mxu0 0.0
        %2270 = vmatprep.subr.mxu0 0.0
        %2271 = vmatpush1.msra.mxu0 0.0
        %2272 = vmatprep.subr.mxu0 0.0
        %2273 = vmatpush1.msra.mxu0 0.0
        %2274 = vmatprep.subr.mxu0 0.0
        %2275 = vmatpush1.msra.mxu0 0.0
        %2276 = vmatprep.subr.mxu0 0.0
        %2277 = vmatpush1.msra.mxu0 0.0
        %2278 = vmatprep.subr.mxu0 0.0
        %2279 = vmatpush1.msra.mxu0 0.0
        %2280 = vmatprep.subr.mxu0 0.0
        %2281 = vmatpush1.msra.mxu0 0.0
        %2282 = vmatprep.subr.mxu0 0.0
        %2283 = vmatpush1.msra.mxu0 0.0
        %2284 = vmatprep.subr.mxu0 0.0
        %2285 = vmatpush1.msra.mxu0 0.0
        %2286 = vmatprep.subr.mxu0 0.0
        %2287 = vmatpush1.msra.mxu0 0.0
        %2288 = vmatprep.subr.mxu0 0.0
        %2289 = vmatpush1.msra.mxu0 0.0
        %2290 = vmatprep.mubr.f32.mxu0 0.0
        %2291 = vmatmul.mubr.f32.gmra.mrb[0].mxu0 %v1759
        %v2292 = vpop.f32.mrb[0].mxu0
        %v2293 = vadd.f32 %v1751, %v2292
        %v2294 = vpop.f32.mrb[0].mxu0
        %v2295 = vadd.f32 %v1751, %v2294
        %2296 = vmatprep.mubr.f32.mxu0 0.0
        %2297 = vmatmul.mubr.f32.gmra.mrb[0].mxu0 %v1762
        %v2298 = vpop.f32.mrb[0].mxu0
        %v2299 = vadd.f32 %v1756, %v2298
        %v2300 = vpop.f32.mrb[0].mxu0
        %v2301 = vadd.f32 %v1756, %v2300
        %2302 = vdwg.mxu0
        %2303 = vmatprep.subr.mxu0 %v1725
        %2304 = vmatpush1.msra.mxu0 %v1724
        %2305 = vmatprep.subr.mxu0 %v1741
        %2306 = vmatpush1.msra.mxu0 %v1740
        %2307 = vmatprep.subr.mxu0 0.0
        %2308 = vmatpush1.msra.mxu0 0.0
        %2309 = vmatprep.subr.mxu0 0.0
        %2310 = vmatpush1.msra.mxu0 0.0
        %2311 = vmatprep.subr.mxu0 0.0
        %2312 = vmatpush1.msra.mxu0 0.0
        %2313 = vmatprep.subr.mxu0 0.0
        %2314 = vmatpush1.msra.mxu0 0.0
        %2315 = vmatprep.subr.mxu0 0.0
        %2316 = vmatpush1.msra.mxu0 0.0
        %2317 = vmatprep.subr.mxu0 0.0
        %2318 = vmatpush1.msra.mxu0 0.0
        %2319 = vmatprep.subr.mxu0 0.0
        %2320 = vmatpush1.msra.mxu0 0.0
        %2321 = vmatprep.subr.mxu0 0.0
        %2322 = vmatpush1.msra.mxu0 0.0
        %2323 = vmatprep.subr.mxu0 0.0
        %2324 = vmatpush1.msra.mxu0 0.0
        %2325 = vmatprep.subr.mxu0 0.0
        %2326 = vmatpush1.msra.mxu0 0.0
        %2327 = vmatprep.subr.mxu0 0.0
        %2328 = vmatpush1.msra.mxu0 0.0
        %2329 = vmatprep.subr.mxu0 0.0
        %2330 = vmatpush1.msra.mxu0 0.0
        %2331 = vmatprep.subr.mxu0 0.0
        %2332 = vmatpush1.msra.mxu0 0.0
        %2333 = vmatprep.subr.mxu0 0.0
        %2334 = vmatpush1.msra.mxu0 0.0
        %2335 = vmatprep.subr.mxu0 0.0
        %2336 = vmatpush1.msra.mxu0 0.0
        %2337 = vmatprep.subr.mxu0 0.0
        %2338 = vmatpush1.msra.mxu0 0.0
        %2339 = vmatprep.subr.mxu0 0.0
        %2340 = vmatpush1.msra.mxu0 0.0
        %2341 = vmatprep.subr.mxu0 0.0
        %2342 = vmatpush1.msra.mxu0 0.0
        %2343 = vmatprep.subr.mxu0 0.0
        %2344 = vmatpush1.msra.mxu0 0.0
        %2345 = vmatprep.subr.mxu0 0.0
        %2346 = vmatpush1.msra.mxu0 0.0
        %2347 = vmatprep.subr.mxu0 0.0
        %2348 = vmatpush1.msra.mxu0 0.0
        %2349 = vmatprep.subr.mxu0 0.0
        %2350 = vmatpush1.msra.mxu0 0.0
        %2351 = vmatprep.subr.mxu0 0.0
        %2352 = vmatpush1.msra.mxu0 0.0
        %2353 = vmatprep.subr.mxu0 0.0
        %2354 = vmatpush1.msra.mxu0 0.0
        %2355 = vmatprep.subr.mxu0 0.0
        %2356 = vmatpush1.msra.mxu0 0.0
        %2357 = vmatprep.subr.mxu0 0.0
        %2358 = vmatpush1.msra.mxu0 0.0
        %2359 = vmatprep.subr.mxu0 0.0
        %2360 = vmatpush1.msra.mxu0 0.0
        %2361 = vmatprep.subr.mxu0 0.0
        %2362 = vmatpush1.msra.mxu0 0.0
        %2363 = vmatprep.subr.mxu0 0.0
        %2364 = vmatpush1.msra.mxu0 0.0
        %2365 = vmatprep.subr.mxu0 0.0
        %2366 = vmatpush1.msra.mxu0 0.0
        %2367 = vmatprep.mubr.f32.mxu0 0.0
        %2368 = vmatmul.mubr.f32.gmra.mrb[0].mxu0 %v1759
        %v2369 = vpop.f32.mrb[0].mxu0
        %v2370 = vadd.f32 %v1751, %v2369
        %v2371 = vpop.f32.mrb[0].mxu0
        %v2372 = vadd.f32 %v1751, %v2371
        %2373 = vmatprep.mubr.f32.mxu0 0.0
        %2374 = vmatmul.mubr.f32.gmra.mrb[0].mxu0 %v1762
        %v2375 = vpop.f32.mrb[0].mxu0
        %v2376 = vadd.f32 %v1756, %v2375
        %v2377 = vpop.f32.mrb[0].mxu0
        %v2378 = vadd.f32 %v1756, %v2377
        %2379 = vdwg.mxu0
        %s2380 = scalar_lea.vmem %s3, 32
        %v2381 = vld [vmem:[%s2380] sm:$0xff]
        %v2382 = vld [vmem:[%s2380 + $0x8] sm:$0xff]
        %vm2383 = vcmp.ge.f32.partialorder %v1831, 0.0
        %vm2384 = vcmp.ge.f32.partialorder %v1833, 0.0
        %vm2385 = vcmp.ge.f32.partialorder %v1908, 0.0
        %vm2386 = vcmp.ge.f32.partialorder %v1910, 0.0
        %vm2387 = vcmp.ge.f32.partialorder %v1985, 0.0
        %vm2388 = vcmp.ge.f32.partialorder %v1987, 0.0
        %vm2389 = vcmp.ge.f32.partialorder %v2062, 0.0
        %vm2390 = vcmp.ge.f32.partialorder %v2064, 0.0
        %vm2391 = vcmp.ge.f32.partialorder %v2139, 0.0
        %vm2392 = vcmp.ge.f32.partialorder %v2141, 0.0
        %vm2393 = vcmp.ge.f32.partialorder %v2216, 0.0
        %vm2394 = vcmp.ge.f32.partialorder %v2218, 0.0
        %vm2395 = vcmp.ge.f32.partialorder %v2293, 0.0
        %vm2396 = vcmp.ge.f32.partialorder %v2295, 0.0
        %vm2397 = vcmp.ge.f32.partialorder %v2370, 0.0
        %vm2398 = vcmp.ge.f32.partialorder %v2372, 0.0
        %vm2399 = vcmp.ge.f32.partialorder %v1837, 0.0
        %vm2400 = vcmp.ge.f32.partialorder %v1839, 0.0
        %vm2401 = vcmp.ge.f32.partialorder %v1914, 0.0
        %vm2402 = vcmp.ge.f32.partialorder %v1916, 0.0
        %vm2403 = vcmp.ge.f32.partialorder %v1991, 0.0
        %vm2404 = vcmp.ge.f32.partialorder %v1993, 0.0
        %vm2405 = vcmp.ge.f32.partialorder %v2068, 0.0
        %vm2406 = vcmp.ge.f32.partialorder %v2070, 0.0
        %vm2407 = vcmp.ge.f32.partialorder %v2145, 0.0
        %vm2408 = vcmp.ge.f32.partialorder %v2147, 0.0
        %vm2409 = vcmp.ge.f32.partialorder %v2222, 0.0
        %vm2410 = vcmp.ge.f32.partialorder %v2224, 0.0
        %vm2411 = vcmp.ge.f32.partialorder %v2299, 0.0
        %vm2412 = vcmp.ge.f32.partialorder %v2301, 0.0
        %vm2413 = vcmp.ge.f32.partialorder %v2376, 0.0
        %vm2414 = vcmp.ge.f32.partialorder %v2378, 0.0
        %2416 = vset.pattern.permute.xlu0 0
        %2417 = vperm.xlu0 %2416, %v2381
        %v2418 = vpop.permute.xlu0 %2417
        %2421 = vset.pattern.permute.xlu0 0
        %2422 = vperm.xlu0 %2421, %v2382
        %v2423 = vpop.permute.xlu0 %2422
        %v2425 = vmul.f32 %v2418, %v1831
        %v2426 = vmul.f32 %v2418, %v1833
        %v2427 = vmul.f32 %v2418, %v1908
        %v2428 = vmul.f32 %v2418, %v1910
        %v2429 = vmul.f32 %v2418, %v1985
        %v2430 = vmul.f32 %v2418, %v1987
        %v2431 = vmul.f32 %v2418, %v2062
        %v2432 = vmul.f32 %v2418, %v2064
        %v2433 = vmul.f32 %v2418, %v2139
        %v2434 = vmul.f32 %v2418, %v2141
        %v2435 = vmul.f32 %v2418, %v2216
        %v2436 = vmul.f32 %v2418, %v2218
        %v2437 = vmul.f32 %v2418, %v2293
        %v2438 = vmul.f32 %v2418, %v2295
        %v2439 = vmul.f32 %v2418, %v2370
        %v2440 = vmul.f32 %v2418, %v2372
        %v2441 = vmul.f32 %v2423, %v1837
        %v2442 = vmul.f32 %v2423, %v1839
        %v2443 = vmul.f32 %v2423, %v1914
        %v2444 = vmul.f32 %v2423, %v1916
        %v2445 = vmul.f32 %v2423, %v1991
        %v2446 = vmul.f32 %v2423, %v1993
        %v2447 = vmul.f32 %v2423, %v2068
        %v2448 = vmul.f32 %v2423, %v2070
        %v2449 = vmul.f32 %v2423, %v2145
        %v2450 = vmul.f32 %v2423, %v2147
        %v2451 = vmul.f32 %v2423, %v2222
        %v2452 = vmul.f32 %v2423, %v2224
        %v2453 = vmul.f32 %v2423, %v2299
        %v2454 = vmul.f32 %v2423, %v2301
        %v2455 = vmul.f32 %v2423, %v2376
        %v2456 = vmul.f32 %v2423, %v2378
        %v2457 = vsel %vm2383, %v1831, %v2425
        %v2458 = vsel %vm2384, %v1833, %v2426
        %v2459 = vsel %vm2385, %v1908, %v2427
        %v2460 = vsel %vm2386, %v1910, %v2428
        %v2461 = vsel %vm2387, %v1985, %v2429
        %v2462 = vsel %vm2388, %v1987, %v2430
        %v2463 = vsel %vm2389, %v2062, %v2431
        %v2464 = vsel %vm2390, %v2064, %v2432
        %v2465 = vsel %vm2391, %v2139, %v2433
        %v2466 = vsel %vm2392, %v2141, %v2434
        %v2467 = vsel %vm2393, %v2216, %v2435
        %v2468 = vsel %vm2394, %v2218, %v2436
        %v2469 = vsel %vm2395, %v2293, %v2437
        %v2470 = vsel %vm2396, %v2295, %v2438
        %v2471 = vsel %vm2397, %v2370, %v2439
        %v2472 = vsel %vm2398, %v2372, %v2440
        %v2473 = vsel %vm2399, %v1837, %v2441
        %v2474 = vsel %vm2400, %v1839, %v2442
        %v2475 = vsel %vm2401, %v1914, %v2443
        %v2476 = vsel %vm2402, %v1916, %v2444
        %v2477 = vsel %vm2403, %v1991, %v2445
        %v2478 = vsel %vm2404, %v1993, %v2446
        %v2479 = vsel %vm2405, %v2068, %v2447
        %v2480 = vsel %vm2406, %v2070, %v2448
        %v2481 = vsel %vm2407, %v2145, %v2449
        %v2482 = vsel %vm2408, %v2147, %v2450
        %v2483 = vsel %vm2409, %v2222, %v2451
        %v2484 = vsel %vm2410, %v2224, %v2452
        %v2485 = vsel %vm2411, %v2299, %v2453
        %v2486 = vsel %vm2412, %v2301, %v2454
        %v2487 = vsel %vm2413, %v2376, %v2455
        %v2488 = vsel %vm2414, %v2378, %v2456
        %s2489 = scalar_lea.vmem %s1, 48
        %v2490 = vld [vmem:[%s2489] sm:$0xff]
        %v2491 = vld [vmem:[%s2489 + $0x8] sm:$0xff]
        %s2492 = scalar_lea.vmem %s2, 48
        %v2493 = vld [vmem:[%s2492] sm:$0xff]
        %v2494 = vld [vmem:[%s2492 + $0x8] sm:$0xff]
        %2496 = vset.pattern.permute.xlu0 0
        %2497 = vperm.xlu0 %2496, %v2493
        %v2498 = vpop.permute.xlu0 %2497
        %2501 = vset.pattern.permute.xlu0 0
        %2502 = vperm.xlu0 %2501, %v2494
        %v2503 = vpop.permute.xlu0 %2502
        %v2506 = vsel %vm264, %v2490, 0
        %v2509 = vsel %vm264, %v2491, 0
        %2511 = vmatprep.subr.mxu0 %v2458
        %2512 = vmatpush1.msra.mxu0 %v2457
        %2513 = vmatprep.subr.mxu0 %v2474
        %2514 = vmatpush1.msra.mxu0 %v2473
        %2515 = vmatprep.subr.mxu0 0.0
        %2516 = vmatpush1.msra.mxu0 0.0
        %2517 = vmatprep.subr.mxu0 0.0
        %2518 = vmatpush1.msra.mxu0 0.0
        %2519 = vmatprep.subr.mxu0 0.0
        %2520 = vmatpush1.msra.mxu0 0.0
        %2521 = vmatprep.subr.mxu0 0.0
        %2522 = vmatpush1.msra.mxu0 0.0
        %2523 = vmatprep.subr.mxu0 0.0
        %2524 = vmatpush1.msra.mxu0 0.0
        %2525 = vmatprep.subr.mxu0 0.0
        %2526 = vmatpush1.msra.mxu0 0.0
        %2527 = vmatprep.subr.mxu0 0.0
        %2528 = vmatpush1.msra.mxu0 0.0
        %2529 = vmatprep.subr.mxu0 0.0
        %2530 = vmatpush1.msra.mxu0 0.0
        %2531 = vmatprep.subr.mxu0 0.0
        %2532 = vmatpush1.msra.mxu0 0.0
        %2533 = vmatprep.subr.mxu0 0.0
        %2534 = vmatpush1.msra.mxu0 0.0
        %2535 = vmatprep.subr.mxu0 0.0
        %2536 = vmatpush1.msra.mxu0 0.0
        %2537 = vmatprep.subr.mxu0 0.0
        %2538 = vmatpush1.msra.mxu0 0.0
        %2539 = vmatprep.subr.mxu0 0.0
        %2540 = vmatpush1.msra.mxu0 0.0
        %2541 = vmatprep.subr.mxu0 0.0
        %2542 = vmatpush1.msra.mxu0 0.0
        %2543 = vmatprep.subr.mxu0 0.0
        %2544 = vmatpush1.msra.mxu0 0.0
        %2545 = vmatprep.subr.mxu0 0.0
        %2546 = vmatpush1.msra.mxu0 0.0
        %2547 = vmatprep.subr.mxu0 0.0
        %2548 = vmatpush1.msra.mxu0 0.0
        %2549 = vmatprep.subr.mxu0 0.0
        %2550 = vmatpush1.msra.mxu0 0.0
        %2551 = vmatprep.subr.mxu0 0.0
        %2552 = vmatpush1.msra.mxu0 0.0
        %2553 = vmatprep.subr.mxu0 0.0
        %2554 = vmatpush1.msra.mxu0 0.0
        %2555 = vmatprep.subr.mxu0 0.0
        %2556 = vmatpush1.msra.mxu0 0.0
        %2557 = vmatprep.subr.mxu0 0.0
        %2558 = vmatpush1.msra.mxu0 0.0
        %2559 = vmatprep.subr.mxu0 0.0
        %2560 = vmatpush1.msra.mxu0 0.0
        %2561 = vmatprep.subr.mxu0 0.0
        %2562 = vmatpush1.msra.mxu0 0.0
        %2563 = vmatprep.subr.mxu0 0.0
        %2564 = vmatpush1.msra.mxu0 0.0
        %2565 = vmatprep.subr.mxu0 0.0
        %2566 = vmatpush1.msra.mxu0 0.0
        %2567 = vmatprep.subr.mxu0 0.0
        %2568 = vmatpush1.msra.mxu0 0.0
        %2569 = vmatprep.subr.mxu0 0.0
        %2570 = vmatpush1.msra.mxu0 0.0
        %2571 = vmatprep.subr.mxu0 0.0
        %2572 = vmatpush1.msra.mxu0 0.0
        %2573 = vmatprep.subr.mxu0 0.0
        %2574 = vmatpush1.msra.mxu0 0.0
        %2575 = vmatprep.mubr.f32.mxu0 0.0
        %2576 = vmatmul.mubr.f32.gmra.mrb[0].mxu0 %v2506
        %v2577 = vpop.f32.mrb[0].mxu0
        %v2578 = vadd.f32 %v2498, %v2577
        %v2579 = vpop.f32.mrb[0].mxu0
        %v2580 = vadd.f32 %v2498, %v2579
        %2581 = vmatprep.mubr.f32.mxu0 0.0
        %2582 = vmatmul.mubr.f32.gmra.mrb[0].mxu0 %v2509
        %v2583 = vpop.f32.mrb[0].mxu0
        %v2584 = vadd.f32 %v2503, %v2583
        %v2585 = vpop.f32.mrb[0].mxu0
        %v2586 = vadd.f32 %v2503, %v2585
        %2587 = vdwg.mxu0
        %2588 = vmatprep.subr.mxu0 %v2460
        %2589 = vmatpush1.msra.mxu0 %v2459
        %2590 = vmatprep.subr.mxu0 %v2476
        %2591 = vmatpush1.msra.mxu0 %v2475
        %2592 = vmatprep.subr.mxu0 0.0
        %2593 = vmatpush1.msra.mxu0 0.0
        %2594 = vmatprep.subr.mxu0 0.0
        %2595 = vmatpush1.msra.mxu0 0.0
        %2596 = vmatprep.subr.mxu0 0.0
        %2597 = vmatpush1.msra.mxu0 0.0
        %2598 = vmatprep.subr.mxu0 0.0
        %2599 = vmatpush1.msra.mxu0 0.0
        %2600 = vmatprep.subr.mxu0 0.0
        %2601 = vmatpush1.msra.mxu0 0.0
        %2602 = vmatprep.subr.mxu0 0.0
        %2603 = vmatpush1.msra.mxu0 0.0
        %2604 = vmatprep.subr.mxu0 0.0
        %2605 = vmatpush1.msra.mxu0 0.0
        %2606 = vmatprep.subr.mxu0 0.0
        %2607 = vmatpush1.msra.mxu0 0.0
        %2608 = vmatprep.subr.mxu0 0.0
        %2609 = vmatpush1.msra.mxu0 0.0
        %2610 = vmatprep.subr.mxu0 0.0
        %2611 = vmatpush1.msra.mxu0 0.0
        %2612 = vmatprep.subr.mxu0 0.0
        %2613 = vmatpush1.msra.mxu0 0.0
        %2614 = vmatprep.subr.mxu0 0.0
        %2615 = vmatpush1.msra.mxu0 0.0
        %2616 = vmatprep.subr.mxu0 0.0
        %2617 = vmatpush1.msra.mxu0 0.0
        %2618 = vmatprep.subr.mxu0 0.0
        %2619 = vmatpush1.msra.mxu0 0.0
        %2620 = vmatprep.subr.mxu0 0.0
        %2621 = vmatpush1.msra.mxu0 0.0
        %2622 = vmatprep.subr.mxu0 0.0
        %2623 = vmatpush1.msra.mxu0 0.0
        %2624 = vmatprep.subr.mxu0 0.0
        %2625 = vmatpush1.msra.mxu0 0.0
        %2626 = vmatprep.subr.mxu0 0.0
        %2627 = vmatpush1.msra.mxu0 0.0
        %2628 = vmatprep.subr.mxu0 0.0
        %2629 = vmatpush1.msra.mxu0 0.0
        %2630 = vmatprep.subr.mxu0 0.0
        %2631 = vmatpush1.msra.mxu0 0.0
        %2632 = vmatprep.subr.mxu0 0.0
        %2633 = vmatpush1.msra.mxu0 0.0
        %2634 = vmatprep.subr.mxu0 0.0
        %2635 = vmatpush1.msra.mxu0 0.0
        %2636 = vmatprep.subr.mxu0 0.0
        %2637 = vmatpush1.msra.mxu0 0.0
        %2638 = vmatprep.subr.mxu0 0.0
        %2639 = vmatpush1.msra.mxu0 0.0
        %2640 = vmatprep.subr.mxu0 0.0
        %2641 = vmatpush1.msra.mxu0 0.0
        %2642 = vmatprep.subr.mxu0 0.0
        %2643 = vmatpush1.msra.mxu0 0.0
        %2644 = vmatprep.subr.mxu0 0.0
        %2645 = vmatpush1.msra.mxu0 0.0
        %2646 = vmatprep.subr.mxu0 0.0
        %2647 = vmatpush1.msra.mxu0 0.0
        %2648 = vmatprep.subr.mxu0 0.0
        %2649 = vmatpush1.msra.mxu0 0.0
        %2650 = vmatprep.subr.mxu0 0.0
        %2651 = vmatpush1.msra.mxu0 0.0
        %2652 = vmatprep.mubr.f32.mxu0 0.0
        %2653 = vmatmul.mubr.f32.gmra.mrb[0].mxu0 %v2506
        %v2654 = vpop.f32.mrb[0].mxu0
        %v2655 = vadd.f32 %v2498, %v2654
        %v2656 = vpop.f32.mrb[0].mxu0
        %v2657 = vadd.f32 %v2498, %v2656
        %2658 = vmatprep.mubr.f32.mxu0 0.0
        %2659 = vmatmul.mubr.f32.gmra.mrb[0].mxu0 %v2509
        %v2660 = vpop.f32.mrb[0].mxu0
        %v2661 = vadd.f32 %v2503, %v2660
        %v2662 = vpop.f32.mrb[0].mxu0
        %v2663 = vadd.f32 %v2503, %v2662
        %2664 = vdwg.mxu0
        %2665 = vmatprep.subr.mxu0 %v2462
        %2666 = vmatpush1.msra.mxu0 %v2461
        %2667 = vmatprep.subr.mxu0 %v2478
        %2668 = vmatpush1.msra.mxu0 %v2477
        %2669 = vmatprep.subr.mxu0 0.0
        %2670 = vmatpush1.msra.mxu0 0.0
        %2671 = vmatprep.subr.mxu0 0.0
        %2672 = vmatpush1.msra.mxu0 0.0
        %2673 = vmatprep.subr.mxu0 0.0
        %2674 = vmatpush1.msra.mxu0 0.0
        %2675 = vmatprep.subr.mxu0 0.0
        %2676 = vmatpush1.msra.mxu0 0.0
        %2677 = vmatprep.subr.mxu0 0.0
        %2678 = vmatpush1.msra.mxu0 0.0
        %2679 = vmatprep.subr.mxu0 0.0
        %2680 = vmatpush1.msra.mxu0 0.0
        %2681 = vmatprep.subr.mxu0 0.0
        %2682 = vmatpush1.msra.mxu0 0.0
        %2683 = vmatprep.subr.mxu0 0.0
        %2684 = vmatpush1.msra.mxu0 0.0
        %2685 = vmatprep.subr.mxu0 0.0
        %2686 = vmatpush1.msra.mxu0 0.0
        %2687 = vmatprep.subr.mxu0 0.0
        %2688 = vmatpush1.msra.mxu0 0.0
        %2689 = vmatprep.subr.mxu0 0.0
        %2690 = vmatpush1.msra.mxu0 0.0
        %2691 = vmatprep.subr.mxu0 0.0
        %2692 = vmatpush1.msra.mxu0 0.0
        %2693 = vmatprep.subr.mxu0 0.0
        %2694 = vmatpush1.msra.mxu0 0.0
        %2695 = vmatprep.subr.mxu0 0.0
        %2696 = vmatpush1.msra.mxu0 0.0
        %2697 = vmatprep.subr.mxu0 0.0
        %2698 = vmatpush1.msra.mxu0 0.0
        %2699 = vmatprep.subr.mxu0 0.0
        %2700 = vmatpush1.msra.mxu0 0.0
        %2701 = vmatprep.subr.mxu0 0.0
        %2702 = vmatpush1.msra.mxu0 0.0
        %2703 = vmatprep.subr.mxu0 0.0
        %2704 = vmatpush1.msra.mxu0 0.0
        %2705 = vmatprep.subr.mxu0 0.0
        %2706 = vmatpush1.msra.mxu0 0.0
        %2707 = vmatprep.subr.mxu0 0.0
        %2708 = vmatpush1.msra.mxu0 0.0
        %2709 = vmatprep.subr.mxu0 0.0
        %2710 = vmatpush1.msra.mxu0 0.0
        %2711 = vmatprep.subr.mxu0 0.0
        %2712 = vmatpush1.msra.mxu0 0.0
        %2713 = vmatprep.subr.mxu0 0.0
        %2714 = vmatpush1.msra.mxu0 0.0
        %2715 = vmatprep.subr.mxu0 0.0
        %2716 = vmatpush1.msra.mxu0 0.0
        %2717 = vmatprep.subr.mxu0 0.0
        %2718 = vmatpush1.msra.mxu0 0.0
        %2719 = vmatprep.subr.mxu0 0.0
        %2720 = vmatpush1.msra.mxu0 0.0
        %2721 = vmatprep.subr.mxu0 0.0
        %2722 = vmatpush1.msra.mxu0 0.0
        %2723 = vmatprep.subr.mxu0 0.0
        %2724 = vmatpush1.msra.mxu0 0.0
        %2725 = vmatprep.subr.mxu0 0.0
        %2726 = vmatpush1.msra.mxu0 0.0
        %2727 = vmatprep.subr.mxu0 0.0
        %2728 = vmatpush1.msra.mxu0 0.0
        %2729 = vmatprep.mubr.f32.mxu0 0.0
        %2730 = vmatmul.mubr.f32.gmra.mrb[0].mxu0 %v2506
        %v2731 = vpop.f32.mrb[0].mxu0
        %v2732 = vadd.f32 %v2498, %v2731
        %v2733 = vpop.f32.mrb[0].mxu0
        %v2734 = vadd.f32 %v2498, %v2733
        %2735 = vmatprep.mubr.f32.mxu0 0.0
        %2736 = vmatmul.mubr.f32.gmra.mrb[0].mxu0 %v2509
        %v2737 = vpop.f32.mrb[0].mxu0
        %v2738 = vadd.f32 %v2503, %v2737
        %v2739 = vpop.f32.mrb[0].mxu0
        %v2740 = vadd.f32 %v2503, %v2739
        %2741 = vdwg.mxu0
        %2742 = vmatprep.subr.mxu0 %v2464
        %2743 = vmatpush1.msra.mxu0 %v2463
        %2744 = vmatprep.subr.mxu0 %v2480
        %2745 = vmatpush1.msra.mxu0 %v2479
        %2746 = vmatprep.subr.mxu0 0.0
        %2747 = vmatpush1.msra.mxu0 0.0
        %2748 = vmatprep.subr.mxu0 0.0
        %2749 = vmatpush1.msra.mxu0 0.0
        %2750 = vmatprep.subr.mxu0 0.0
        %2751 = vmatpush1.msra.mxu0 0.0
        %2752 = vmatprep.subr.mxu0 0.0
        %2753 = vmatpush1.msra.mxu0 0.0
        %2754 = vmatprep.subr.mxu0 0.0
        %2755 = vmatpush1.msra.mxu0 0.0
        %2756 = vmatprep.subr.mxu0 0.0
        %2757 = vmatpush1.msra.mxu0 0.0
        %2758 = vmatprep.subr.mxu0 0.0
        %2759 = vmatpush1.msra.mxu0 0.0
        %2760 = vmatprep.subr.mxu0 0.0
        %2761 = vmatpush1.msra.mxu0 0.0
        %2762 = vmatprep.subr.mxu0 0.0
        %2763 = vmatpush1.msra.mxu0 0.0
        %2764 = vmatprep.subr.mxu0 0.0
        %2765 = vmatpush1.msra.mxu0 0.0
        %2766 = vmatprep.subr.mxu0 0.0
        %2767 = vmatpush1.msra.mxu0 0.0
        %2768 = vmatprep.subr.mxu0 0.0
        %2769 = vmatpush1.msra.mxu0 0.0
        %2770 = vmatprep.subr.mxu0 0.0
        %2771 = vmatpush1.msra.mxu0 0.0
        %2772 = vmatprep.subr.mxu0 0.0
        %2773 = vmatpush1.msra.mxu0 0.0
        %2774 = vmatprep.subr.mxu0 0.0
        %2775 = vmatpush1.msra.mxu0 0.0
        %2776 = vmatprep.subr.mxu0 0.0
        %2777 = vmatpush1.msra.mxu0 0.0
        %2778 = vmatprep.subr.mxu0 0.0
        %2779 = vmatpush1.msra.mxu0 0.0
        %2780 = vmatprep.subr.mxu0 0.0
        %2781 = vmatpush1.msra.mxu0 0.0
        %2782 = vmatprep.subr.mxu0 0.0
        %2783 = vmatpush1.msra.mxu0 0.0
        %2784 = vmatprep.subr.mxu0 0.0
        %2785 = vmatpush1.msra.mxu0 0.0
        %2786 = vmatprep.subr.mxu0 0.0
        %2787 = vmatpush1.msra.mxu0 0.0
        %2788 = vmatprep.subr.mxu0 0.0
        %2789 = vmatpush1.msra.mxu0 0.0
        %2790 = vmatprep.subr.mxu0 0.0
        %2791 = vmatpush1.msra.mxu0 0.0
        %2792 = vmatprep.subr.mxu0 0.0
        %2793 = vmatpush1.msra.mxu0 0.0
        %2794 = vmatprep.subr.mxu0 0.0
        %2795 = vmatpush1.msra.mxu0 0.0
        %2796 = vmatprep.subr.mxu0 0.0
        %2797 = vmatpush1.msra.mxu0 0.0
        %2798 = vmatprep.subr.mxu0 0.0
        %2799 = vmatpush1.msra.mxu0 0.0
        %2800 = vmatprep.subr.mxu0 0.0
        %2801 = vmatpush1.msra.mxu0 0.0
        %2802 = vmatprep.subr.mxu0 0.0
        %2803 = vmatpush1.msra.mxu0 0.0
        %2804 = vmatprep.subr.mxu0 0.0
        %2805 = vmatpush1.msra.mxu0 0.0
        %2806 = vmatprep.mubr.f32.mxu0 0.0
        %2807 = vmatmul.mubr.f32.gmra.mrb[0].mxu0 %v2506
        %v2808 = vpop.f32.mrb[0].mxu0
        %v2809 = vadd.f32 %v2498, %v2808
        %v2810 = vpop.f32.mrb[0].mxu0
        %v2811 = vadd.f32 %v2498, %v2810
        %2812 = vmatprep.mubr.f32.mxu0 0.0
        %2813 = vmatmul.mubr.f32.gmra.mrb[0].mxu0 %v2509
        %v2814 = vpop.f32.mrb[0].mxu0
        %v2815 = vadd.f32 %v2503, %v2814
        %v2816 = vpop.f32.mrb[0].mxu0
        %v2817 = vadd.f32 %v2503, %v2816
        %2818 = vdwg.mxu0
        %2819 = vmatprep.subr.mxu0 %v2466
        %2820 = vmatpush1.msra.mxu0 %v2465
        %2821 = vmatprep.subr.mxu0 %v2482
        %2822 = vmatpush1.msra.mxu0 %v2481
        %2823 = vmatprep.subr.mxu0 0.0
        %2824 = vmatpush1.msra.mxu0 0.0
        %2825 = vmatprep.subr.mxu0 0.0
        %2826 = vmatpush1.msra.mxu0 0.0
        %2827 = vmatprep.subr.mxu0 0.0
        %2828 = vmatpush1.msra.mxu0 0.0
        %2829 = vmatprep.subr.mxu0 0.0
        %2830 = vmatpush1.msra.mxu0 0.0
        %2831 = vmatprep.subr.mxu0 0.0
        %2832 = vmatpush1.msra.mxu0 0.0
        %2833 = vmatprep.subr.mxu0 0.0
        %2834 = vmatpush1.msra.mxu0 0.0
        %2835 = vmatprep.subr.mxu0 0.0
        %2836 = vmatpush1.msra.mxu0 0.0
        %2837 = vmatprep.subr.mxu0 0.0
        %2838 = vmatpush1.msra.mxu0 0.0
        %2839 = vmatprep.subr.mxu0 0.0
        %2840 = vmatpush1.msra.mxu0 0.0
        %2841 = vmatprep.subr.mxu0 0.0
        %2842 = vmatpush1.msra.mxu0 0.0
        %2843 = vmatprep.subr.mxu0 0.0
        %2844 = vmatpush1.msra.mxu0 0.0
        %2845 = vmatprep.subr.mxu0 0.0
        %2846 = vmatpush1.msra.mxu0 0.0
        %2847 = vmatprep.subr.mxu0 0.0
        %2848 = vmatpush1.msra.mxu0 0.0
        %2849 = vmatprep.subr.mxu0 0.0
        %2850 = vmatpush1.msra.mxu0 0.0
        %2851 = vmatprep.subr.mxu0 0.0
        %2852 = vmatpush1.msra.mxu0 0.0
        %2853 = vmatprep.subr.mxu0 0.0
        %2854 = vmatpush1.msra.mxu0 0.0
        %2855 = vmatprep.subr.mxu0 0.0
        %2856 = vmatpush1.msra.mxu0 0.0
        %2857 = vmatprep.subr.mxu0 0.0
        %2858 = vmatpush1.msra.mxu0 0.0
        %2859 = vmatprep.subr.mxu0 0.0
        %2860 = vmatpush1.msra.mxu0 0.0
        %2861 = vmatprep.subr.mxu0 0.0
        %2862 = vmatpush1.msra.mxu0 0.0
        %2863 = vmatprep.subr.mxu0 0.0
        %2864 = vmatpush1.msra.mxu0 0.0
        %2865 = vmatprep.subr.mxu0 0.0
        %2866 = vmatpush1.msra.mxu0 0.0
        %2867 = vmatprep.subr.mxu0 0.0
        %2868 = vmatpush1.msra.mxu0 0.0
        %2869 = vmatprep.subr.mxu0 0.0
        %2870 = vmatpush1.msra.mxu0 0.0
        %2871 = vmatprep.subr.mxu0 0.0
        %2872 = vmatpush1.msra.mxu0 0.0
        %2873 = vmatprep.subr.mxu0 0.0
        %2874 = vmatpush1.msra.mxu0 0.0
        %2875 = vmatprep.subr.mxu0 0.0
        %2876 = vmatpush1.msra.mxu0 0.0
        %2877 = vmatprep.subr.mxu0 0.0
        %2878 = vmatpush1.msra.mxu0 0.0
        %2879 = vmatprep.subr.mxu0 0.0
        %2880 = vmatpush1.msra.mxu0 0.0
        %2881 = vmatprep.subr.mxu0 0.0
        %2882 = vmatpush1.msra.mxu0 0.0
        %2883 = vmatprep.mubr.f32.mxu0 0.0
        %2884 = vmatmul.mubr.f32.gmra.mrb[0].mxu0 %v2506
        %v2885 = vpop.f32.mrb[0].mxu0
        %v2886 = vadd.f32 %v2498, %v2885
        %v2887 = vpop.f32.mrb[0].mxu0
        %v2888 = vadd.f32 %v2498, %v2887
        %2889 = vmatprep.mubr.f32.mxu0 0.0
        %2890 = vmatmul.mubr.f32.gmra.mrb[0].mxu0 %v2509
        %v2891 = vpop.f32.mrb[0].mxu0
        %v2892 = vadd.f32 %v2503, %v2891
        %v2893 = vpop.f32.mrb[0].mxu0
        %v2894 = vadd.f32 %v2503, %v2893
        %2895 = vdwg.mxu0
        %2896 = vmatprep.subr.mxu0 %v2468
        %2897 = vmatpush1.msra.mxu0 %v2467
        %2898 = vmatprep.subr.mxu0 %v2484
        %2899 = vmatpush1.msra.mxu0 %v2483
        %2900 = vmatprep.subr.mxu0 0.0
        %2901 = vmatpush1.msra.mxu0 0.0
        %2902 = vmatprep.subr.mxu0 0.0
        %2903 = vmatpush1.msra.mxu0 0.0
        %2904 = vmatprep.subr.mxu0 0.0
        %2905 = vmatpush1.msra.mxu0 0.0
        %2906 = vmatprep.subr.mxu0 0.0
        %2907 = vmatpush1.msra.mxu0 0.0
        %2908 = vmatprep.subr.mxu0 0.0
        %2909 = vmatpush1.msra.mxu0 0.0
        %2910 = vmatprep.subr.mxu0 0.0
        %2911 = vmatpush1.msra.mxu0 0.0
        %2912 = vmatprep.subr.mxu0 0.0
        %2913 = vmatpush1.msra.mxu0 0.0
        %2914 = vmatprep.subr.mxu0 0.0
        %2915 = vmatpush1.msra.mxu0 0.0
        %2916 = vmatprep.subr.mxu0 0.0
        %2917 = vmatpush1.msra.mxu0 0.0
        %2918 = vmatprep.subr.mxu0 0.0
        %2919 = vmatpush1.msra.mxu0 0.0
        %2920 = vmatprep.subr.mxu0 0.0
        %2921 = vmatpush1.msra.mxu0 0.0
        %2922 = vmatprep.subr.mxu0 0.0
        %2923 = vmatpush1.msra.mxu0 0.0
        %2924 = vmatprep.subr.mxu0 0.0
        %2925 = vmatpush1.msra.mxu0 0.0
        %2926 = vmatprep.subr.mxu0 0.0
        %2927 = vmatpush1.msra.mxu0 0.0
        %2928 = vmatprep.subr.mxu0 0.0
        %2929 = vmatpush1.msra.mxu0 0.0
        %2930 = vmatprep.subr.mxu0 0.0
        %2931 = vmatpush1.msra.mxu0 0.0
        %2932 = vmatprep.subr.mxu0 0.0
        %2933 = vmatpush1.msra.mxu0 0.0
        %2934 = vmatprep.subr.mxu0 0.0
        %2935 = vmatpush1.msra.mxu0 0.0
        %2936 = vmatprep.subr.mxu0 0.0
        %2937 = vmatpush1.msra.mxu0 0.0
        %2938 = vmatprep.subr.mxu0 0.0
        %2939 = vmatpush1.msra.mxu0 0.0
        %2940 = vmatprep.subr.mxu0 0.0
        %2941 = vmatpush1.msra.mxu0 0.0
        %2942 = vmatprep.subr.mxu0 0.0
        %2943 = vmatpush1.msra.mxu0 0.0
        %2944 = vmatprep.subr.mxu0 0.0
        %2945 = vmatpush1.msra.mxu0 0.0
        %2946 = vmatprep.subr.mxu0 0.0
        %2947 = vmatpush1.msra.mxu0 0.0
        %2948 = vmatprep.subr.mxu0 0.0
        %2949 = vmatpush1.msra.mxu0 0.0
        %2950 = vmatprep.subr.mxu0 0.0
        %2951 = vmatpush1.msra.mxu0 0.0
        %2952 = vmatprep.subr.mxu0 0.0
        %2953 = vmatpush1.msra.mxu0 0.0
        %2954 = vmatprep.subr.mxu0 0.0
        %2955 = vmatpush1.msra.mxu0 0.0
        %2956 = vmatprep.subr.mxu0 0.0
        %2957 = vmatpush1.msra.mxu0 0.0
        %2958 = vmatprep.subr.mxu0 0.0
        %2959 = vmatpush1.msra.mxu0 0.0
        %2960 = vmatprep.mubr.f32.mxu0 0.0
        %2961 = vmatmul.mubr.f32.gmra.mrb[0].mxu0 %v2506
        %v2962 = vpop.f32.mrb[0].mxu0
        %v2963 = vadd.f32 %v2498, %v2962
        %v2964 = vpop.f32.mrb[0].mxu0
        %v2965 = vadd.f32 %v2498, %v2964
        %2966 = vmatprep.mubr.f32.mxu0 0.0
        %2967 = vmatmul.mubr.f32.gmra.mrb[0].mxu0 %v2509
        %v2968 = vpop.f32.mrb[0].mxu0
        %v2969 = vadd.f32 %v2503, %v2968
        %v2970 = vpop.f32.mrb[0].mxu0
        %v2971 = vadd.f32 %v2503, %v2970
        %2972 = vdwg.mxu0
        %2973 = vmatprep.subr.mxu0 %v2470
        %2974 = vmatpush1.msra.mxu0 %v2469
        %2975 = vmatprep.subr.mxu0 %v2486
        %2976 = vmatpush1.msra.mxu0 %v2485
        %2977 = vmatprep.subr.mxu0 0.0
        %2978 = vmatpush1.msra.mxu0 0.0
        %2979 = vmatprep.subr.mxu0 0.0
        %2980 = vmatpush1.msra.mxu0 0.0
        %2981 = vmatprep.subr.mxu0 0.0
        %2982 = vmatpush1.msra.mxu0 0.0
        %2983 = vmatprep.subr.mxu0 0.0
        %2984 = vmatpush1.msra.mxu0 0.0
        %2985 = vmatprep.subr.mxu0 0.0
        %2986 = vmatpush1.msra.mxu0 0.0
        %2987 = vmatprep.subr.mxu0 0.0
        %2988 = vmatpush1.msra.mxu0 0.0
        %2989 = vmatprep.subr.mxu0 0.0
        %2990 = vmatpush1.msra.mxu0 0.0
        %2991 = vmatprep.subr.mxu0 0.0
        %2992 = vmatpush1.msra.mxu0 0.0
        %2993 = vmatprep.subr.mxu0 0.0
        %2994 = vmatpush1.msra.mxu0 0.0
        %2995 = vmatprep.subr.mxu0 0.0
        %2996 = vmatpush1.msra.mxu0 0.0
        %2997 = vmatprep.subr.mxu0 0.0
        %2998 = vmatpush1.msra.mxu0 0.0
        %2999 = vmatprep.subr.mxu0 0.0
        %3000 = vmatpush1.msra.mxu0 0.0
        %3001 = vmatprep.subr.mxu0 0.0
        %3002 = vmatpush1.msra.mxu0 0.0
        %3003 = vmatprep.subr.mxu0 0.0
        %3004 = vmatpush1.msra.mxu0 0.0
        %3005 = vmatprep.subr.mxu0 0.0
        %3006 = vmatpush1.msra.mxu0 0.0
        %3007 = vmatprep.subr.mxu0 0.0
        %3008 = vmatpush1.msra.mxu0 0.0
        %3009 = vmatprep.subr.mxu0 0.0
        %3010 = vmatpush1.msra.mxu0 0.0
        %3011 = vmatprep.subr.mxu0 0.0
        %3012 = vmatpush1.msra.mxu0 0.0
        %3013 = vmatprep.subr.mxu0 0.0
        %3014 = vmatpush1.msra.mxu0 0.0
        %3015 = vmatprep.subr.mxu0 0.0
        %3016 = vmatpush1.msra.mxu0 0.0
        %3017 = vmatprep.subr.mxu0 0.0
        %3018 = vmatpush1.msra.mxu0 0.0
        %3019 = vmatprep.subr.mxu0 0.0
        %3020 = vmatpush1.msra.mxu0 0.0
        %3021 = vmatprep.subr.mxu0 0.0
        %3022 = vmatpush1.msra.mxu0 0.0
        %3023 = vmatprep.subr.mxu0 0.0
        %3024 = vmatpush1.msra.mxu0 0.0
        %3025 = vmatprep.subr.mxu0 0.0
        %3026 = vmatpush1.msra.mxu0 0.0
        %3027 = vmatprep.subr.mxu0 0.0
        %3028 = vmatpush1.msra.mxu0 0.0
        %3029 = vmatprep.subr.mxu0 0.0
        %3030 = vmatpush1.msra.mxu0 0.0
        %3031 = vmatprep.subr.mxu0 0.0
        %3032 = vmatpush1.msra.mxu0 0.0
        %3033 = vmatprep.subr.mxu0 0.0
        %3034 = vmatpush1.msra.mxu0 0.0
        %3035 = vmatprep.subr.mxu0 0.0
        %3036 = vmatpush1.msra.mxu0 0.0
        %3037 = vmatprep.mubr.f32.mxu0 0.0
        %3038 = vmatmul.mubr.f32.gmra.mrb[0].mxu0 %v2506
        %v3039 = vpop.f32.mrb[0].mxu0
        %v3040 = vadd.f32 %v2498, %v3039
        %v3041 = vpop.f32.mrb[0].mxu0
        %v3042 = vadd.f32 %v2498, %v3041
        %3043 = vmatprep.mubr.f32.mxu0 0.0
        %3044 = vmatmul.mubr.f32.gmra.mrb[0].mxu0 %v2509
        %v3045 = vpop.f32.mrb[0].mxu0
        %v3046 = vadd.f32 %v2503, %v3045
        %v3047 = vpop.f32.mrb[0].mxu0
        %v3048 = vadd.f32 %v2503, %v3047
        %3049 = vdwg.mxu0
        %3050 = vmatprep.subr.mxu0 %v2472
        %3051 = vmatpush1.msra.mxu0 %v2471
        %3052 = vmatprep.subr.mxu0 %v2488
        %3053 = vmatpush1.msra.mxu0 %v2487
        %3054 = vmatprep.subr.mxu0 0.0
        %3055 = vmatpush1.msra.mxu0 0.0
        %3056 = vmatprep.subr.mxu0 0.0
        %3057 = vmatpush1.msra.mxu0 0.0
        %3058 = vmatprep.subr.mxu0 0.0
        %3059 = vmatpush1.msra.mxu0 0.0
        %3060 = vmatprep.subr.mxu0 0.0
        %3061 = vmatpush1.msra.mxu0 0.0
        %3062 = vmatprep.subr.mxu0 0.0
        %3063 = vmatpush1.msra.mxu0 0.0
        %3064 = vmatprep.subr.mxu0 0.0
        %3065 = vmatpush1.msra.mxu0 0.0
        %3066 = vmatprep.subr.mxu0 0.0
        %3067 = vmatpush1.msra.mxu0 0.0
        %3068 = vmatprep.subr.mxu0 0.0
        %3069 = vmatpush1.msra.mxu0 0.0
        %3070 = vmatprep.subr.mxu0 0.0
        %3071 = vmatpush1.msra.mxu0 0.0
        %3072 = vmatprep.subr.mxu0 0.0
        %3073 = vmatpush1.msra.mxu0 0.0
        %3074 = vmatprep.subr.mxu0 0.0
        %3075 = vmatpush1.msra.mxu0 0.0
        %3076 = vmatprep.subr.mxu0 0.0
        %3077 = vmatpush1.msra.mxu0 0.0
        %3078 = vmatprep.subr.mxu0 0.0
        %3079 = vmatpush1.msra.mxu0 0.0
        %3080 = vmatprep.subr.mxu0 0.0
        %3081 = vmatpush1.msra.mxu0 0.0
        %3082 = vmatprep.subr.mxu0 0.0
        %3083 = vmatpush1.msra.mxu0 0.0
        %3084 = vmatprep.subr.mxu0 0.0
        %3085 = vmatpush1.msra.mxu0 0.0
        %3086 = vmatprep.subr.mxu0 0.0
        %3087 = vmatpush1.msra.mxu0 0.0
        %3088 = vmatprep.subr.mxu0 0.0
        %3089 = vmatpush1.msra.mxu0 0.0
        %3090 = vmatprep.subr.mxu0 0.0
        %3091 = vmatpush1.msra.mxu0 0.0
        %3092 = vmatprep.subr.mxu0 0.0
        %3093 = vmatpush1.msra.mxu0 0.0
        %3094 = vmatprep.subr.mxu0 0.0
        %3095 = vmatpush1.msra.mxu0 0.0
        %3096 = vmatprep.subr.mxu0 0.0
        %3097 = vmatpush1.msra.mxu0 0.0
        %3098 = vmatprep.subr.mxu0 0.0
        %3099 = vmatpush1.msra.mxu0 0.0
        %3100 = vmatprep.subr.mxu0 0.0
        %3101 = vmatpush1.msra.mxu0 0.0
        %3102 = vmatprep.subr.mxu0 0.0
        %3103 = vmatpush1.msra.mxu0 0.0
        %3104 = vmatprep.subr.mxu0 0.0
        %3105 = vmatpush1.msra.mxu0 0.0
        %3106 = vmatprep.subr.mxu0 0.0
        %3107 = vmatpush1.msra.mxu0 0.0
        %3108 = vmatprep.subr.mxu0 0.0
        %3109 = vmatpush1.msra.mxu0 0.0
        %3110 = vmatprep.subr.mxu0 0.0
        %3111 = vmatpush1.msra.mxu0 0.0
        %3112 = vmatprep.subr.mxu0 0.0
        %3113 = vmatpush1.msra.mxu0 0.0
        %3114 = vmatprep.mubr.f32.mxu0 0.0
        %3115 = vmatmul.mubr.f32.gmra.mrb[0].mxu0 %v2506
        %v3116 = vpop.f32.mrb[0].mxu0
        %v3117 = vadd.f32 %v2498, %v3116
        %v3118 = vpop.f32.mrb[0].mxu0
        %v3119 = vadd.f32 %v2498, %v3118
        %3120 = vmatprep.mubr.f32.mxu0 0.0
        %3121 = vmatmul.mubr.f32.gmra.mrb[0].mxu0 %v2509
        %v3122 = vpop.f32.mrb[0].mxu0
        %v3123 = vadd.f32 %v2503, %v3122
        %v3124 = vpop.f32.mrb[0].mxu0
        %v3125 = vadd.f32 %v2503, %v3124
        %3126 = vdwg.mxu0
        %s3127 = scalar_lea.vmem %s1, 64
        %v3128 = vld [vmem:[%s3127] sm:$0xff]
        %v3129 = vld [vmem:[%s3127 + $0x8] sm:$0xff]
        %s3130 = scalar_lea.vmem %s2, 64
        %v3131 = vld [vmem:[%s3130] sm:$0xff]
        %v3132 = vld [vmem:[%s3130 + $0x8] sm:$0xff]
        %3134 = vset.pattern.permute.xlu0 0
        %3135 = vperm.xlu0 %3134, %v3131
        %v3136 = vpop.permute.xlu0 %3135
        %3139 = vset.pattern.permute.xlu0 0
        %3140 = vperm.xlu0 %3139, %v3132
        %v3141 = vpop.permute.xlu0 %3140
        %v3144 = vsel %vm264, %v3128, 0
        %v3147 = vsel %vm264, %v3129, 0
        %3149 = vmatprep.subr.mxu0 %v2580
        %3150 = vmatpush1.msra.mxu0 %v2578
        %3151 = vmatprep.subr.mxu0 %v2586
        %3152 = vmatpush1.msra.mxu0 %v2584
        %3153 = vmatprep.subr.mxu0 0.0
        %3154 = vmatpush1.msra.mxu0 0.0
        %3155 = vmatprep.subr.mxu0 0.0
        %3156 = vmatpush1.msra.mxu0 0.0
        %3157 = vmatprep.subr.mxu0 0.0
        %3158 = vmatpush1.msra.mxu0 0.0
        %3159 = vmatprep.subr.mxu0 0.0
        %3160 = vmatpush1.msra.mxu0 0.0
        %3161 = vmatprep.subr.mxu0 0.0
        %3162 = vmatpush1.msra.mxu0 0.0
        %3163 = vmatprep.subr.mxu0 0.0
        %3164 = vmatpush1.msra.mxu0 0.0
        %3165 = vmatprep.subr.mxu0 0.0
        %3166 = vmatpush1.msra.mxu0 0.0
        %3167 = vmatprep.subr.mxu0 0.0
        %3168 = vmatpush1.msra.mxu0 0.0
        %3169 = vmatprep.subr.mxu0 0.0
        %3170 = vmatpush1.msra.mxu0 0.0
        %3171 = vmatprep.subr.mxu0 0.0
        %3172 = vmatpush1.msra.mxu0 0.0
        %3173 = vmatprep.subr.mxu0 0.0
        %3174 = vmatpush1.msra.mxu0 0.0
        %3175 = vmatprep.subr.mxu0 0.0
        %3176 = vmatpush1.msra.mxu0 0.0
        %3177 = vmatprep.subr.mxu0 0.0
        %3178 = vmatpush1.msra.mxu0 0.0
        %3179 = vmatprep.subr.mxu0 0.0
        %3180 = vmatpush1.msra.mxu0 0.0
        %3181 = vmatprep.subr.mxu0 0.0
        %3182 = vmatpush1.msra.mxu0 0.0
        %3183 = vmatprep.subr.mxu0 0.0
        %3184 = vmatpush1.msra.mxu0 0.0
        %3185 = vmatprep.subr.mxu0 0.0
        %3186 = vmatpush1.msra.mxu0 0.0
        %3187 = vmatprep.subr.mxu0 0.0
        %3188 = vmatpush1.msra.mxu0 0.0
        %3189 = vmatprep.subr.mxu0 0.0
        %3190 = vmatpush1.msra.mxu0 0.0
        %3191 = vmatprep.subr.mxu0 0.0
        %3192 = vmatpush1.msra.mxu0 0.0
        %3193 = vmatprep.subr.mxu0 0.0
        %3194 = vmatpush1.msra.mxu0 0.0
        %3195 = vmatprep.subr.mxu0 0.0
        %3196 = vmatpush1.msra.mxu0 0.0
        %3197 = vmatprep.subr.mxu0 0.0
        %3198 = vmatpush1.msra.mxu0 0.0
        %3199 = vmatprep.subr.mxu0 0.0
        %3200 = vmatpush1.msra.mxu0 0.0
        %3201 = vmatprep.subr.mxu0 0.0
        %3202 = vmatpush1.msra.mxu0 0.0
        %3203 = vmatprep.subr.mxu0 0.0
        %3204 = vmatpush1.msra.mxu0 0.0
        %3205 = vmatprep.subr.mxu0 0.0
        %3206 = vmatpush1.msra.mxu0 0.0
        %3207 = vmatprep.subr.mxu0 0.0
        %3208 = vmatpush1.msra.mxu0 0.0
        %3209 = vmatprep.subr.mxu0 0.0
        %3210 = vmatpush1.msra.mxu0 0.0
        %3211 = vmatprep.subr.mxu0 0.0
        %3212 = vmatpush1.msra.mxu0 0.0
        %3213 = vmatprep.mubr.f32.mxu0 0.0
        %3214 = vmatmul.mubr.f32.gmra.mrb[0].mxu0 %v3144
        %v3215 = vpop.f32.mrb[0].mxu0
        %v3216 = vadd.f32 %v3136, %v3215
        %v3217 = vpop.f32.mrb[0].mxu0
        %v3218 = vadd.f32 %v3136, %v3217
        %3219 = vmatprep.mubr.f32.mxu0 0.0
        %3220 = vmatmul.mubr.f32.gmra.mrb[0].mxu0 %v3147
        %v3221 = vpop.f32.mrb[0].mxu0
        %v3222 = vadd.f32 %v3141, %v3221
        %v3223 = vpop.f32.mrb[0].mxu0
        %v3224 = vadd.f32 %v3141, %v3223
        %3225 = vdwg.mxu0
        %3226 = vmatprep.subr.mxu0 %v2657
        %3227 = vmatpush1.msra.mxu0 %v2655
        %3228 = vmatprep.subr.mxu0 %v2663
        %3229 = vmatpush1.msra.mxu0 %v2661
        %3230 = vmatprep.subr.mxu0 0.0
        %3231 = vmatpush1.msra.mxu0 0.0
        %3232 = vmatprep.subr.mxu0 0.0
        %3233 = vmatpush1.msra.mxu0 0.0
        %3234 = vmatprep.subr.mxu0 0.0
        %3235 = vmatpush1.msra.mxu0 0.0
        %3236 = vmatprep.subr.mxu0 0.0
        %3237 = vmatpush1.msra.mxu0 0.0
        %3238 = vmatprep.subr.mxu0 0.0
        %3239 = vmatpush1.msra.mxu0 0.0
        %3240 = vmatprep.subr.mxu0 0.0
        %3241 = vmatpush1.msra.mxu0 0.0
        %3242 = vmatprep.subr.mxu0 0.0
        %3243 = vmatpush1.msra.mxu0 0.0
        %3244 = vmatprep.subr.mxu0 0.0
        %3245 = vmatpush1.msra.mxu0 0.0
        %3246 = vmatprep.subr.mxu0 0.0
        %3247 = vmatpush1.msra.mxu0 0.0
        %3248 = vmatprep.subr.mxu0 0.0
        %3249 = vmatpush1.msra.mxu0 0.0
        %3250 = vmatprep.subr.mxu0 0.0
        %3251 = vmatpush1.msra.mxu0 0.0
        %3252 = vmatprep.subr.mxu0 0.0
        %3253 = vmatpush1.msra.mxu0 0.0
        %3254 = vmatprep.subr.mxu0 0.0
        %3255 = vmatpush1.msra.mxu0 0.0
        %3256 = vmatprep.subr.mxu0 0.0
        %3257 = vmatpush1.msra.mxu0 0.0
        %3258 = vmatprep.subr.mxu0 0.0
        %3259 = vmatpush1.msra.mxu0 0.0
        %3260 = vmatprep.subr.mxu0 0.0
        %3261 = vmatpush1.msra.mxu0 0.0
        %3262 = vmatprep.subr.mxu0 0.0
        %3263 = vmatpush1.msra.mxu0 0.0
        %3264 = vmatprep.subr.mxu0 0.0
        %3265 = vmatpush1.msra.mxu0 0.0
        %3266 = vmatprep.subr.mxu0 0.0
        %3267 = vmatpush1.msra.mxu0 0.0
        %3268 = vmatprep.subr.mxu0 0.0
        %3269 = vmatpush1.msra.mxu0 0.0
        %3270 = vmatprep.subr.mxu0 0.0
        %3271 = vmatpush1.msra.mxu0 0.0
        %3272 = vmatprep.subr.mxu0 0.0
        %3273 = vmatpush1.msra.mxu0 0.0
        %3274 = vmatprep.subr.mxu0 0.0
        %3275 = vmatpush1.msra.mxu0 0.0
        %3276 = vmatprep.subr.mxu0 0.0
        %3277 = vmatpush1.msra.mxu0 0.0
        %3278 = vmatprep.subr.mxu0 0.0
        %3279 = vmatpush1.msra.mxu0 0.0
        %3280 = vmatprep.subr.mxu0 0.0
        %3281 = vmatpush1.msra.mxu0 0.0
        %3282 = vmatprep.subr.mxu0 0.0
        %3283 = vmatpush1.msra.mxu0 0.0
        %3284 = vmatprep.subr.mxu0 0.0
        %3285 = vmatpush1.msra.mxu0 0.0
        %3286 = vmatprep.subr.mxu0 0.0
        %3287 = vmatpush1.msra.mxu0 0.0
        %3288 = vmatprep.subr.mxu0 0.0
        %3289 = vmatpush1.msra.mxu0 0.0
        %3290 = vmatprep.mubr.f32.mxu0 0.0
        %3291 = vmatmul.mubr.f32.gmra.mrb[0].mxu0 %v3144
        %v3292 = vpop.f32.mrb[0].mxu0
        %v3293 = vadd.f32 %v3136, %v3292
        %v3294 = vpop.f32.mrb[0].mxu0
        %v3295 = vadd.f32 %v3136, %v3294
        %3296 = vmatprep.mubr.f32.mxu0 0.0
        %3297 = vmatmul.mubr.f32.gmra.mrb[0].mxu0 %v3147
        %v3298 = vpop.f32.mrb[0].mxu0
        %v3299 = vadd.f32 %v3141, %v3298
        %v3300 = vpop.f32.mrb[0].mxu0
        %v3301 = vadd.f32 %v3141, %v3300
        %3302 = vdwg.mxu0
        %3303 = vmatprep.subr.mxu0 %v2734
        %3304 = vmatpush1.msra.mxu0 %v2732
        %3305 = vmatprep.subr.mxu0 %v2740
        %3306 = vmatpush1.msra.mxu0 %v2738
        %3307 = vmatprep.subr.mxu0 0.0
        %3308 = vmatpush1.msra.mxu0 0.0
        %3309 = vmatprep.subr.mxu0 0.0
        %3310 = vmatpush1.msra.mxu0 0.0
        %3311 = vmatprep.subr.mxu0 0.0
        %3312 = vmatpush1.msra.mxu0 0.0
        %3313 = vmatprep.subr.mxu0 0.0
        %3314 = vmatpush1.msra.mxu0 0.0
        %3315 = vmatprep.subr.mxu0 0.0
        %3316 = vmatpush1.msra.mxu0 0.0
        %3317 = vmatprep.subr.mxu0 0.0
        %3318 = vmatpush1.msra.mxu0 0.0
        %3319 = vmatprep.subr.mxu0 0.0
        %3320 = vmatpush1.msra.mxu0 0.0
        %3321 = vmatprep.subr.mxu0 0.0
        %3322 = vmatpush1.msra.mxu0 0.0
        %3323 = vmatprep.subr.mxu0 0.0
        %3324 = vmatpush1.msra.mxu0 0.0
        %3325 = vmatprep.subr.mxu0 0.0
        %3326 = vmatpush1.msra.mxu0 0.0
        %3327 = vmatprep.subr.mxu0 0.0
        %3328 = vmatpush1.msra.mxu0 0.0
        %3329 = vmatprep.subr.mxu0 0.0
        %3330 = vmatpush1.msra.mxu0 0.0
        %3331 = vmatprep.subr.mxu0 0.0
        %3332 = vmatpush1.msra.mxu0 0.0
        %3333 = vmatprep.subr.mxu0 0.0
        %3334 = vmatpush1.msra.mxu0 0.0
        %3335 = vmatprep.subr.mxu0 0.0
        %3336 = vmatpush1.msra.mxu0 0.0
        %3337 = vmatprep.subr.mxu0 0.0
        %3338 = vmatpush1.msra.mxu0 0.0
        %3339 = vmatprep.subr.mxu0 0.0
        %3340 = vmatpush1.msra.mxu0 0.0
        %3341 = vmatprep.subr.mxu0 0.0
        %3342 = vmatpush1.msra.mxu0 0.0
        %3343 = vmatprep.subr.mxu0 0.0
        %3344 = vmatpush1.msra.mxu0 0.0
        %3345 = vmatprep.subr.mxu0 0.0
        %3346 = vmatpush1.msra.mxu0 0.0
        %3347 = vmatprep.subr.mxu0 0.0
        %3348 = vmatpush1.msra.mxu0 0.0
        %3349 = vmatprep.subr.mxu0 0.0
        %3350 = vmatpush1.msra.mxu0 0.0
        %3351 = vmatprep.subr.mxu0 0.0
        %3352 = vmatpush1.msra.mxu0 0.0
        %3353 = vmatprep.subr.mxu0 0.0
        %3354 = vmatpush1.msra.mxu0 0.0
        %3355 = vmatprep.subr.mxu0 0.0
        %3356 = vmatpush1.msra.mxu0 0.0
        %3357 = vmatprep.subr.mxu0 0.0
        %3358 = vmatpush1.msra.mxu0 0.0
        %3359 = vmatprep.subr.mxu0 0.0
        %3360 = vmatpush1.msra.mxu0 0.0
        %3361 = vmatprep.subr.mxu0 0.0
        %3362 = vmatpush1.msra.mxu0 0.0
        %3363 = vmatprep.subr.mxu0 0.0
        %3364 = vmatpush1.msra.mxu0 0.0
        %3365 = vmatprep.subr.mxu0 0.0
        %3366 = vmatpush1.msra.mxu0 0.0
        %3367 = vmatprep.mubr.f32.mxu0 0.0
        %3368 = vmatmul.mubr.f32.gmra.mrb[0].mxu0 %v3144
        %v3369 = vpop.f32.mrb[0].mxu0
        %v3370 = vadd.f32 %v3136, %v3369
        %v3371 = vpop.f32.mrb[0].mxu0
        %v3372 = vadd.f32 %v3136, %v3371
        %3373 = vmatprep.mubr.f32.mxu0 0.0
        %3374 = vmatmul.mubr.f32.gmra.mrb[0].mxu0 %v3147
        %v3375 = vpop.f32.mrb[0].mxu0
        %v3376 = vadd.f32 %v3141, %v3375
        %v3377 = vpop.f32.mrb[0].mxu0
        %v3378 = vadd.f32 %v3141, %v3377
        %3379 = vdwg.mxu0
        %3380 = vmatprep.subr.mxu0 %v2811
        %3381 = vmatpush1.msra.mxu0 %v2809
        %3382 = vmatprep.subr.mxu0 %v2817
        %3383 = vmatpush1.msra.mxu0 %v2815
        %3384 = vmatprep.subr.mxu0 0.0
        %3385 = vmatpush1.msra.mxu0 0.0
        %3386 = vmatprep.subr.mxu0 0.0
        %3387 = vmatpush1.msra.mxu0 0.0
        %3388 = vmatprep.subr.mxu0 0.0
        %3389 = vmatpush1.msra.mxu0 0.0
        %3390 = vmatprep.subr.mxu0 0.0
        %3391 = vmatpush1.msra.mxu0 0.0
        %3392 = vmatprep.subr.mxu0 0.0
        %3393 = vmatpush1.msra.mxu0 0.0
        %3394 = vmatprep.subr.mxu0 0.0
        %3395 = vmatpush1.msra.mxu0 0.0
        %3396 = vmatprep.subr.mxu0 0.0
        %3397 = vmatpush1.msra.mxu0 0.0
        %3398 = vmatprep.subr.mxu0 0.0
        %3399 = vmatpush1.msra.mxu0 0.0
        %3400 = vmatprep.subr.mxu0 0.0
        %3401 = vmatpush1.msra.mxu0 0.0
        %3402 = vmatprep.subr.mxu0 0.0
        %3403 = vmatpush1.msra.mxu0 0.0
        %3404 = vmatprep.subr.mxu0 0.0
        %3405 = vmatpush1.msra.mxu0 0.0
        %3406 = vmatprep.subr.mxu0 0.0
        %3407 = vmatpush1.msra.mxu0 0.0
        %3408 = vmatprep.subr.mxu0 0.0
        %3409 = vmatpush1.msra.mxu0 0.0
        %3410 = vmatprep.subr.mxu0 0.0
        %3411 = vmatpush1.msra.mxu0 0.0
        %3412 = vmatprep.subr.mxu0 0.0
        %3413 = vmatpush1.msra.mxu0 0.0
        %3414 = vmatprep.subr.mxu0 0.0
        %3415 = vmatpush1.msra.mxu0 0.0
        %3416 = vmatprep.subr.mxu0 0.0
        %3417 = vmatpush1.msra.mxu0 0.0
        %3418 = vmatprep.subr.mxu0 0.0
        %3419 = vmatpush1.msra.mxu0 0.0
        %3420 = vmatprep.subr.mxu0 0.0
        %3421 = vmatpush1.msra.mxu0 0.0
        %3422 = vmatprep.subr.mxu0 0.0
        %3423 = vmatpush1.msra.mxu0 0.0
        %3424 = vmatprep.subr.mxu0 0.0
        %3425 = vmatpush1.msra.mxu0 0.0
        %3426 = vmatprep.subr.mxu0 0.0
        %3427 = vmatpush1.msra.mxu0 0.0
        %3428 = vmatprep.subr.mxu0 0.0
        %3429 = vmatpush1.msra.mxu0 0.0
        %3430 = vmatprep.subr.mxu0 0.0
        %3431 = vmatpush1.msra.mxu0 0.0
        %3432 = vmatprep.subr.mxu0 0.0
        %3433 = vmatpush1.msra.mxu0 0.0
        %3434 = vmatprep.subr.mxu0 0.0
        %3435 = vmatpush1.msra.mxu0 0.0
        %3436 = vmatprep.subr.mxu0 0.0
        %3437 = vmatpush1.msra.mxu0 0.0
        %3438 = vmatprep.subr.mxu0 0.0
        %3439 = vmatpush1.msra.mxu0 0.0
        %3440 = vmatprep.subr.mxu0 0.0
        %3441 = vmatpush1.msra.mxu0 0.0
        %3442 = vmatprep.subr.mxu0 0.0
        %3443 = vmatpush1.msra.mxu0 0.0
        %3444 = vmatprep.mubr.f32.mxu0 0.0
        %3445 = vmatmul.mubr.f32.gmra.mrb[0].mxu0 %v3144
        %v3446 = vpop.f32.mrb[0].mxu0
        %v3447 = vadd.f32 %v3136, %v3446
        %v3448 = vpop.f32.mrb[0].mxu0
        %v3449 = vadd.f32 %v3136, %v3448
        %3450 = vmatprep.mubr.f32.mxu0 0.0
        %3451 = vmatmul.mubr.f32.gmra.mrb[0].mxu0 %v3147
        %v3452 = vpop.f32.mrb[0].mxu0
        %v3453 = vadd.f32 %v3141, %v3452
        %v3454 = vpop.f32.mrb[0].mxu0
        %v3455 = vadd.f32 %v3141, %v3454
        %3456 = vdwg.mxu0
        %3457 = vmatprep.subr.mxu0 %v2888
        %3458 = vmatpush1.msra.mxu0 %v2886
        %3459 = vmatprep.subr.mxu0 %v2894
        %3460 = vmatpush1.msra.mxu0 %v2892
        %3461 = vmatprep.subr.mxu0 0.0
        %3462 = vmatpush1.msra.mxu0 0.0
        %3463 = vmatprep.subr.mxu0 0.0
        %3464 = vmatpush1.msra.mxu0 0.0
        %3465 = vmatprep.subr.mxu0 0.0
        %3466 = vmatpush1.msra.mxu0 0.0
        %3467 = vmatprep.subr.mxu0 0.0
        %3468 = vmatpush1.msra.mxu0 0.0
        %3469 = vmatprep.subr.mxu0 0.0
        %3470 = vmatpush1.msra.mxu0 0.0
        %3471 = vmatprep.subr.mxu0 0.0
        %3472 = vmatpush1.msra.mxu0 0.0
        %3473 = vmatprep.subr.mxu0 0.0
        %3474 = vmatpush1.msra.mxu0 0.0
        %3475 = vmatprep.subr.mxu0 0.0
        %3476 = vmatpush1.msra.mxu0 0.0
        %3477 = vmatprep.subr.mxu0 0.0
        %3478 = vmatpush1.msra.mxu0 0.0
        %3479 = vmatprep.subr.mxu0 0.0
        %3480 = vmatpush1.msra.mxu0 0.0
        %3481 = vmatprep.subr.mxu0 0.0
        %3482 = vmatpush1.msra.mxu0 0.0
        %3483 = vmatprep.subr.mxu0 0.0
        %3484 = vmatpush1.msra.mxu0 0.0
        %3485 = vmatprep.subr.mxu0 0.0
        %3486 = vmatpush1.msra.mxu0 0.0
        %3487 = vmatprep.subr.mxu0 0.0
        %3488 = vmatpush1.msra.mxu0 0.0
        %3489 = vmatprep.subr.mxu0 0.0
        %3490 = vmatpush1.msra.mxu0 0.0
        %3491 = vmatprep.subr.mxu0 0.0
        %3492 = vmatpush1.msra.mxu0 0.0
        %3493 = vmatprep.subr.mxu0 0.0
        %3494 = vmatpush1.msra.mxu0 0.0
        %3495 = vmatprep.subr.mxu0 0.0
        %3496 = vmatpush1.msra.mxu0 0.0
        %3497 = vmatprep.subr.mxu0 0.0
        %3498 = vmatpush1.msra.mxu0 0.0
        %3499 = vmatprep.subr.mxu0 0.0
        %3500 = vmatpush1.msra.mxu0 0.0
        %3501 = vmatprep.subr.mxu0 0.0
        %3502 = vmatpush1.msra.mxu0 0.0
        %3503 = vmatprep.subr.mxu0 0.0
        %3504 = vmatpush1.msra.mxu0 0.0
        %3505 = vmatprep.subr.mxu0 0.0
        %3506 = vmatpush1.msra.mxu0 0.0
        %3507 = vmatprep.subr.mxu0 0.0
        %3508 = vmatpush1.msra.mxu0 0.0
        %3509 = vmatprep.subr.mxu0 0.0
        %3510 = vmatpush1.msra.mxu0 0.0
        %3511 = vmatprep.subr.mxu0 0.0
        %3512 = vmatpush1.msra.mxu0 0.0
        %3513 = vmatprep.subr.mxu0 0.0
        %3514 = vmatpush1.msra.mxu0 0.0
        %3515 = vmatprep.subr.mxu0 0.0
        %3516 = vmatpush1.msra.mxu0 0.0
        %3517 = vmatprep.subr.mxu0 0.0
        %3518 = vmatpush1.msra.mxu0 0.0
        %3519 = vmatprep.subr.mxu0 0.0
        %3520 = vmatpush1.msra.mxu0 0.0
        %3521 = vmatprep.mubr.f32.mxu0 0.0
        %3522 = vmatmul.mubr.f32.gmra.mrb[0].mxu0 %v3144
        %v3523 = vpop.f32.mrb[0].mxu0
        %v3524 = vadd.f32 %v3136, %v3523
        %v3525 = vpop.f32.mrb[0].mxu0
        %v3526 = vadd.f32 %v3136, %v3525
        %3527 = vmatprep.mubr.f32.mxu0 0.0
        %3528 = vmatmul.mubr.f32.gmra.mrb[0].mxu0 %v3147
        %v3529 = vpop.f32.mrb[0].mxu0
        %v3530 = vadd.f32 %v3141, %v3529
        %v3531 = vpop.f32.mrb[0].mxu0
        %v3532 = vadd.f32 %v3141, %v3531
        %3533 = vdwg.mxu0
        %3534 = vmatprep.subr.mxu0 %v2965
        %3535 = vmatpush1.msra.mxu0 %v2963
        %3536 = vmatprep.subr.mxu0 %v2971
        %3537 = vmatpush1.msra.mxu0 %v2969
        %3538 = vmatprep.subr.mxu0 0.0
        %3539 = vmatpush1.msra.mxu0 0.0
        %3540 = vmatprep.subr.mxu0 0.0
        %3541 = vmatpush1.msra.mxu0 0.0
        %3542 = vmatprep.subr.mxu0 0.0
        %3543 = vmatpush1.msra.mxu0 0.0
        %3544 = vmatprep.subr.mxu0 0.0
        %3545 = vmatpush1.msra.mxu0 0.0
        %3546 = vmatprep.subr.mxu0 0.0
        %3547 = vmatpush1.msra.mxu0 0.0
        %3548 = vmatprep.subr.mxu0 0.0
        %3549 = vmatpush1.msra.mxu0 0.0
        %3550 = vmatprep.subr.mxu0 0.0
        %3551 = vmatpush1.msra.mxu0 0.0
        %3552 = vmatprep.subr.mxu0 0.0
        %3553 = vmatpush1.msra.mxu0 0.0
        %3554 = vmatprep.subr.mxu0 0.0
        %3555 = vmatpush1.msra.mxu0 0.0
        %3556 = vmatprep.subr.mxu0 0.0
        %3557 = vmatpush1.msra.mxu0 0.0
        %3558 = vmatprep.subr.mxu0 0.0
        %3559 = vmatpush1.msra.mxu0 0.0
        %3560 = vmatprep.subr.mxu0 0.0
        %3561 = vmatpush1.msra.mxu0 0.0
        %3562 = vmatprep.subr.mxu0 0.0
        %3563 = vmatpush1.msra.mxu0 0.0
        %3564 = vmatprep.subr.mxu0 0.0
        %3565 = vmatpush1.msra.mxu0 0.0
        %3566 = vmatprep.subr.mxu0 0.0
        %3567 = vmatpush1.msra.mxu0 0.0
        %3568 = vmatprep.subr.mxu0 0.0
        %3569 = vmatpush1.msra.mxu0 0.0
        %3570 = vmatprep.subr.mxu0 0.0
        %3571 = vmatpush1.msra.mxu0 0.0
        %3572 = vmatprep.subr.mxu0 0.0
        %3573 = vmatpush1.msra.mxu0 0.0
        %3574 = vmatprep.subr.mxu0 0.0
        %3575 = vmatpush1.msra.mxu0 0.0
        %3576 = vmatprep.subr.mxu0 0.0
        %3577 = vmatpush1.msra.mxu0 0.0
        %3578 = vmatprep.subr.mxu0 0.0
        %3579 = vmatpush1.msra.mxu0 0.0
        %3580 = vmatprep.subr.mxu0 0.0
        %3581 = vmatpush1.msra.mxu0 0.0
        %3582 = vmatprep.subr.mxu0 0.0
        %3583 = vmatpush1.msra.mxu0 0.0
        %3584 = vmatprep.subr.mxu0 0.0
        %3585 = vmatpush1.msra.mxu0 0.0
        %3586 = vmatprep.subr.mxu0 0.0
        %3587 = vmatpush1.msra.mxu0 0.0
        %3588 = vmatprep.subr.mxu0 0.0
        %3589 = vmatpush1.msra.mxu0 0.0
        %3590 = vmatprep.subr.mxu0 0.0
        %3591 = vmatpush1.msra.mxu0 0.0
        %3592 = vmatprep.subr.mxu0 0.0
        %3593 = vmatpush1.msra.mxu0 0.0
        %3594 = vmatprep.subr.mxu0 0.0
        %3595 = vmatpush1.msra.mxu0 0.0
        %3596 = vmatprep.subr.mxu0 0.0
        %3597 = vmatpush1.msra.mxu0 0.0
        %3598 = vmatprep.mubr.f32.mxu0 0.0
        %3599 = vmatmul.mubr.f32.gmra.mrb[0].mxu0 %v3144
        %v3600 = vpop.f32.mrb[0].mxu0
        %v3601 = vadd.f32 %v3136, %v3600
        %v3602 = vpop.f32.mrb[0].mxu0
        %v3603 = vadd.f32 %v3136, %v3602
        %3604 = vmatprep.mubr.f32.mxu0 0.0
        %3605 = vmatmul.mubr.f32.gmra.mrb[0].mxu0 %v3147
        %v3606 = vpop.f32.mrb[0].mxu0
        %v3607 = vadd.f32 %v3141, %v3606
        %v3608 = vpop.f32.mrb[0].mxu0
        %v3609 = vadd.f32 %v3141, %v3608
        %3610 = vdwg.mxu0
        %3611 = vmatprep.subr.mxu0 %v3042
        %3612 = vmatpush1.msra.mxu0 %v3040
        %3613 = vmatprep.subr.mxu0 %v3048
        %3614 = vmatpush1.msra.mxu0 %v3046
        %3615 = vmatprep.subr.mxu0 0.0
        %3616 = vmatpush1.msra.mxu0 0.0
        %3617 = vmatprep.subr.mxu0 0.0
        %3618 = vmatpush1.msra.mxu0 0.0
        %3619 = vmatprep.subr.mxu0 0.0
        %3620 = vmatpush1.msra.mxu0 0.0
        %3621 = vmatprep.subr.mxu0 0.0
        %3622 = vmatpush1.msra.mxu0 0.0
        %3623 = vmatprep.subr.mxu0 0.0
        %3624 = vmatpush1.msra.mxu0 0.0
        %3625 = vmatprep.subr.mxu0 0.0
        %3626 = vmatpush1.msra.mxu0 0.0
        %3627 = vmatprep.subr.mxu0 0.0
        %3628 = vmatpush1.msra.mxu0 0.0
        %3629 = vmatprep.subr.mxu0 0.0
        %3630 = vmatpush1.msra.mxu0 0.0
        %3631 = vmatprep.subr.mxu0 0.0
        %3632 = vmatpush1.msra.mxu0 0.0
        %3633 = vmatprep.subr.mxu0 0.0
        %3634 = vmatpush1.msra.mxu0 0.0
        %3635 = vmatprep.subr.mxu0 0.0
        %3636 = vmatpush1.msra.mxu0 0.0
        %3637 = vmatprep.subr.mxu0 0.0
        %3638 = vmatpush1.msra.mxu0 0.0
        %3639 = vmatprep.subr.mxu0 0.0
        %3640 = vmatpush1.msra.mxu0 0.0
        %3641 = vmatprep.subr.mxu0 0.0
        %3642 = vmatpush1.msra.mxu0 0.0
        %3643 = vmatprep.subr.mxu0 0.0
        %3644 = vmatpush1.msra.mxu0 0.0
        %3645 = vmatprep.subr.mxu0 0.0
        %3646 = vmatpush1.msra.mxu0 0.0
        %3647 = vmatprep.subr.mxu0 0.0
        %3648 = vmatpush1.msra.mxu0 0.0
        %3649 = vmatprep.subr.mxu0 0.0
        %3650 = vmatpush1.msra.mxu0 0.0
        %3651 = vmatprep.subr.mxu0 0.0
        %3652 = vmatpush1.msra.mxu0 0.0
        %3653 = vmatprep.subr.mxu0 0.0
        %3654 = vmatpush1.msra.mxu0 0.0
        %3655 = vmatprep.subr.mxu0 0.0
        %3656 = vmatpush1.msra.mxu0 0.0
        %3657 = vmatprep.subr.mxu0 0.0
        %3658 = vmatpush1.msra.mxu0 0.0
        %3659 = vmatprep.subr.mxu0 0.0
        %3660 = vmatpush1.msra.mxu0 0.0
        %3661 = vmatprep.subr.mxu0 0.0
        %3662 = vmatpush1.msra.mxu0 0.0
        %3663 = vmatprep.subr.mxu0 0.0
        %3664 = vmatpush1.msra.mxu0 0.0
        %3665 = vmatprep.subr.mxu0 0.0
        %3666 = vmatpush1.msra.mxu0 0.0
        %3667 = vmatprep.subr.mxu0 0.0
        %3668 = vmatpush1.msra.mxu0 0.0
        %3669 = vmatprep.subr.mxu0 0.0
        %3670 = vmatpush1.msra.mxu0 0.0
        %3671 = vmatprep.subr.mxu0 0.0
        %3672 = vmatpush1.msra.mxu0 0.0
        %3673 = vmatprep.subr.mxu0 0.0
        %3674 = vmatpush1.msra.mxu0 0.0
        %3675 = vmatprep.mubr.f32.mxu0 0.0
        %3676 = vmatmul.mubr.f32.gmra.mrb[0].mxu0 %v3144
        %v3677 = vpop.f32.mrb[0].mxu0
        %v3678 = vadd.f32 %v3136, %v3677
        %v3679 = vpop.f32.mrb[0].mxu0
        %v3680 = vadd.f32 %v3136, %v3679
        %3681 = vmatprep.mubr.f32.mxu0 0.0
        %3682 = vmatmul.mubr.f32.gmra.mrb[0].mxu0 %v3147
        %v3683 = vpop.f32.mrb[0].mxu0
        %v3684 = vadd.f32 %v3141, %v3683
        %v3685 = vpop.f32.mrb[0].mxu0
        %v3686 = vadd.f32 %v3141, %v3685
        %3687 = vdwg.mxu0
        %3688 = vmatprep.subr.mxu0 %v3119
        %3689 = vmatpush1.msra.mxu0 %v3117
        %3690 = vmatprep.subr.mxu0 %v3125
        %3691 = vmatpush1.msra.mxu0 %v3123
        %3692 = vmatprep.subr.mxu0 0.0
        %3693 = vmatpush1.msra.mxu0 0.0
        %3694 = vmatprep.subr.mxu0 0.0
        %3695 = vmatpush1.msra.mxu0 0.0
        %3696 = vmatprep.subr.mxu0 0.0
        %3697 = vmatpush1.msra.mxu0 0.0
        %3698 = vmatprep.subr.mxu0 0.0
        %3699 = vmatpush1.msra.mxu0 0.0
        %3700 = vmatprep.subr.mxu0 0.0
        %3701 = vmatpush1.msra.mxu0 0.0
        %3702 = vmatprep.subr.mxu0 0.0
        %3703 = vmatpush1.msra.mxu0 0.0
        %3704 = vmatprep.subr.mxu0 0.0
        %3705 = vmatpush1.msra.mxu0 0.0
        %3706 = vmatprep.subr.mxu0 0.0
        %3707 = vmatpush1.msra.mxu0 0.0
        %3708 = vmatprep.subr.mxu0 0.0
        %3709 = vmatpush1.msra.mxu0 0.0
        %3710 = vmatprep.subr.mxu0 0.0
        %3711 = vmatpush1.msra.mxu0 0.0
        %3712 = vmatprep.subr.mxu0 0.0
        %3713 = vmatpush1.msra.mxu0 0.0
        %3714 = vmatprep.subr.mxu0 0.0
        %3715 = vmatpush1.msra.mxu0 0.0
        %3716 = vmatprep.subr.mxu0 0.0
        %3717 = vmatpush1.msra.mxu0 0.0
        %3718 = vmatprep.subr.mxu0 0.0
        %3719 = vmatpush1.msra.mxu0 0.0
        %3720 = vmatprep.subr.mxu0 0.0
        %3721 = vmatpush1.msra.mxu0 0.0
        %3722 = vmatprep.subr.mxu0 0.0
        %3723 = vmatpush1.msra.mxu0 0.0
        %3724 = vmatprep.subr.mxu0 0.0
        %3725 = vmatpush1.msra.mxu0 0.0
        %3726 = vmatprep.subr.mxu0 0.0
        %3727 = vmatpush1.msra.mxu0 0.0
        %3728 = vmatprep.subr.mxu0 0.0
        %3729 = vmatpush1.msra.mxu0 0.0
        %3730 = vmatprep.subr.mxu0 0.0
        %3731 = vmatpush1.msra.mxu0 0.0
        %3732 = vmatprep.subr.mxu0 0.0
        %3733 = vmatpush1.msra.mxu0 0.0
        %3734 = vmatprep.subr.mxu0 0.0
        %3735 = vmatpush1.msra.mxu0 0.0
        %3736 = vmatprep.subr.mxu0 0.0
        %3737 = vmatpush1.msra.mxu0 0.0
        %3738 = vmatprep.subr.mxu0 0.0
        %3739 = vmatpush1.msra.mxu0 0.0
        %3740 = vmatprep.subr.mxu0 0.0
        %3741 = vmatpush1.msra.mxu0 0.0
        %3742 = vmatprep.subr.mxu0 0.0
        %3743 = vmatpush1.msra.mxu0 0.0
        %3744 = vmatprep.subr.mxu0 0.0
        %3745 = vmatpush1.msra.mxu0 0.0
        %3746 = vmatprep.subr.mxu0 0.0
        %3747 = vmatpush1.msra.mxu0 0.0
        %3748 = vmatprep.subr.mxu0 0.0
        %3749 = vmatpush1.msra.mxu0 0.0
        %3750 = vmatprep.subr.mxu0 0.0
        %3751 = vmatpush1.msra.mxu0 0.0
        %3752 = vmatprep.mubr.f32.mxu0 0.0
        %3753 = vmatmul.mubr.f32.gmra.mrb[0].mxu0 %v3144
        %v3754 = vpop.f32.mrb[0].mxu0
        %v3755 = vadd.f32 %v3136, %v3754
        %v3756 = vpop.f32.mrb[0].mxu0
        %v3757 = vadd.f32 %v3136, %v3756
        %3758 = vmatprep.mubr.f32.mxu0 0.0
        %3759 = vmatmul.mubr.f32.gmra.mrb[0].mxu0 %v3147
        %v3760 = vpop.f32.mrb[0].mxu0
        %v3761 = vadd.f32 %v3141, %v3760
        %v3762 = vpop.f32.mrb[0].mxu0
        %v3763 = vadd.f32 %v3141, %v3762
        %3764 = vdwg.mxu0
        %s3765 = scalar_lea.vmem %s3, 64
        %v3766 = vld [vmem:[%s3765] sm:$0xff]
        %v3767 = vld [vmem:[%s3765 + $0x8] sm:$0xff]
        %vm3768 = vcmp.ge.f32.partialorder %v3216, 0.0
        %vm3769 = vcmp.ge.f32.partialorder %v3218, 0.0
        %vm3770 = vcmp.ge.f32.partialorder %v3293, 0.0
        %vm3771 = vcmp.ge.f32.partialorder %v3295, 0.0
        %vm3772 = vcmp.ge.f32.partialorder %v3370, 0.0
        %vm3773 = vcmp.ge.f32.partialorder %v3372, 0.0
        %vm3774 = vcmp.ge.f32.partialorder %v3447, 0.0
        %vm3775 = vcmp.ge.f32.partialorder %v3449, 0.0
        %vm3776 = vcmp.ge.f32.partialorder %v3524, 0.0
        %vm3777 = vcmp.ge.f32.partialorder %v3526, 0.0
        %vm3778 = vcmp.ge.f32.partialorder %v3601, 0.0
        %vm3779 = vcmp.ge.f32.partialorder %v3603, 0.0
        %vm3780 = vcmp.ge.f32.partialorder %v3678, 0.0
        %vm3781 = vcmp.ge.f32.partialorder %v3680, 0.0
        %vm3782 = vcmp.ge.f32.partialorder %v3755, 0.0
        %vm3783 = vcmp.ge.f32.partialorder %v3757, 0.0
        %vm3784 = vcmp.ge.f32.partialorder %v3222, 0.0
        %vm3785 = vcmp.ge.f32.partialorder %v3224, 0.0
        %vm3786 = vcmp.ge.f32.partialorder %v3299, 0.0
        %vm3787 = vcmp.ge.f32.partialorder %v3301, 0.0
        %vm3788 = vcmp.ge.f32.partialorder %v3376, 0.0
        %vm3789 = vcmp.ge.f32.partialorder %v3378, 0.0
        %vm3790 = vcmp.ge.f32.partialorder %v3453, 0.0
        %vm3791 = vcmp.ge.f32.partialorder %v3455, 0.0
        %vm3792 = vcmp.ge.f32.partialorder %v3530, 0.0
        %vm3793 = vcmp.ge.f32.partialorder %v3532, 0.0
        %vm3794 = vcmp.ge.f32.partialorder %v3607, 0.0
        %vm3795 = vcmp.ge.f32.partialorder %v3609, 0.0
        %vm3796 = vcmp.ge.f32.partialorder %v3684, 0.0
        %vm3797 = vcmp.ge.f32.partialorder %v3686, 0.0
        %vm3798 = vcmp.ge.f32.partialorder %v3761, 0.0
        %vm3799 = vcmp.ge.f32.partialorder %v3763, 0.0
        %3801 = vset.pattern.permute.xlu0 0
        %3802 = vperm.xlu0 %3801, %v3766
        %v3803 = vpop.permute.xlu0 %3802
        %3806 = vset.pattern.permute.xlu0 0
        %3807 = vperm.xlu0 %3806, %v3767
        %v3808 = vpop.permute.xlu0 %3807
        %v3810 = vmul.f32 %v3803, %v3216
        %v3811 = vmul.f32 %v3803, %v3218
        %v3812 = vmul.f32 %v3803, %v3293
        %v3813 = vmul.f32 %v3803, %v3295
        %v3814 = vmul.f32 %v3803, %v3370
        %v3815 = vmul.f32 %v3803, %v3372
        %v3816 = vmul.f32 %v3803, %v3447
        %v3817 = vmul.f32 %v3803, %v3449
        %v3818 = vmul.f32 %v3803, %v3524
        %v3819 = vmul.f32 %v3803, %v3526
        %v3820 = vmul.f32 %v3803, %v3601
        %v3821 = vmul.f32 %v3803, %v3603
        %v3822 = vmul.f32 %v3803, %v3678
        %v3823 = vmul.f32 %v3803, %v3680
        %v3824 = vmul.f32 %v3803, %v3755
        %v3825 = vmul.f32 %v3803, %v3757
        %v3826 = vmul.f32 %v3808, %v3222
        %v3827 = vmul.f32 %v3808, %v3224
        %v3828 = vmul.f32 %v3808, %v3299
        %v3829 = vmul.f32 %v3808, %v3301
        %v3830 = vmul.f32 %v3808, %v3376
        %v3831 = vmul.f32 %v3808, %v3378
        %v3832 = vmul.f32 %v3808, %v3453
        %v3833 = vmul.f32 %v3808, %v3455
        %v3834 = vmul.f32 %v3808, %v3530
        %v3835 = vmul.f32 %v3808, %v3532
        %v3836 = vmul.f32 %v3808, %v3607
        %v3837 = vmul.f32 %v3808, %v3609
        %v3838 = vmul.f32 %v3808, %v3684
        %v3839 = vmul.f32 %v3808, %v3686
        %v3840 = vmul.f32 %v3808, %v3761
        %v3841 = vmul.f32 %v3808, %v3763
        %v3842 = vsel %vm3768, %v3216, %v3810
        %v3843 = vsel %vm3769, %v3218, %v3811
        %v3844 = vsel %vm3770, %v3293, %v3812
        %v3845 = vsel %vm3771, %v3295, %v3813
        %v3846 = vsel %vm3772, %v3370, %v3814
        %v3847 = vsel %vm3773, %v3372, %v3815
        %v3848 = vsel %vm3774, %v3447, %v3816
        %v3849 = vsel %vm3775, %v3449, %v3817
        %v3850 = vsel %vm3776, %v3524, %v3818
        %v3851 = vsel %vm3777, %v3526, %v3819
        %v3852 = vsel %vm3778, %v3601, %v3820
        %v3853 = vsel %vm3779, %v3603, %v3821
        %v3854 = vsel %vm3780, %v3678, %v3822
        %v3855 = vsel %vm3781, %v3680, %v3823
        %v3856 = vsel %vm3782, %v3755, %v3824
        %v3857 = vsel %vm3783, %v3757, %v3825
        %v3858 = vsel %vm3784, %v3222, %v3826
        %v3859 = vsel %vm3785, %v3224, %v3827
        %v3860 = vsel %vm3786, %v3299, %v3828
        %v3861 = vsel %vm3787, %v3301, %v3829
        %v3862 = vsel %vm3788, %v3376, %v3830
        %v3863 = vsel %vm3789, %v3378, %v3831
        %v3864 = vsel %vm3790, %v3453, %v3832
        %v3865 = vsel %vm3791, %v3455, %v3833
        %v3866 = vsel %vm3792, %v3530, %v3834
        %v3867 = vsel %vm3793, %v3532, %v3835
        %v3868 = vsel %vm3794, %v3607, %v3836
        %v3869 = vsel %vm3795, %v3609, %v3837
        %v3870 = vsel %vm3796, %v3684, %v3838
        %v3871 = vsel %vm3797, %v3686, %v3839
        %v3872 = vsel %vm3798, %v3761, %v3840
        %v3873 = vsel %vm3799, %v3763, %v3841
        %s3874 = scalar_lea.vmem %s1, 80
        %v3875 = vld [vmem:[%s3874] sm:$0xff]
        %v3876 = vld [vmem:[%s3874 + $0x8] sm:$0xff]
        %s3877 = scalar_lea.vmem %s2, 80
        %v3878 = vld [vmem:[%s3877] sm:$0xff]
        %v3879 = vld [vmem:[%s3877 + $0x8] sm:$0xff]
        %3881 = vset.pattern.permute.xlu0 0
        %3882 = vperm.xlu0 %3881, %v3878
        %v3883 = vpop.permute.xlu0 %3882
        %3886 = vset.pattern.permute.xlu0 0
        %3887 = vperm.xlu0 %3886, %v3879
        %v3888 = vpop.permute.xlu0 %3887
        %v3891 = vsel %vm264, %v3875, 0
        %v3894 = vsel %vm264, %v3876, 0
        %3896 = vmatprep.subr.mxu0 %v3843
        %3897 = vmatpush1.msra.mxu0 %v3842
        %3898 = vmatprep.subr.mxu0 %v3859
        %3899 = vmatpush1.msra.mxu0 %v3858
        %3900 = vmatprep.subr.mxu0 0.0
        %3901 = vmatpush1.msra.mxu0 0.0
        %3902 = vmatprep.subr.mxu0 0.0
        %3903 = vmatpush1.msra.mxu0 0.0
        %3904 = vmatprep.subr.mxu0 0.0
        %3905 = vmatpush1.msra.mxu0 0.0
        %3906 = vmatprep.subr.mxu0 0.0
        %3907 = vmatpush1.msra.mxu0 0.0
        %3908 = vmatprep.subr.mxu0 0.0
        %3909 = vmatpush1.msra.mxu0 0.0
        %3910 = vmatprep.subr.mxu0 0.0
        %3911 = vmatpush1.msra.mxu0 0.0
        %3912 = vmatprep.subr.mxu0 0.0
        %3913 = vmatpush1.msra.mxu0 0.0
        %3914 = vmatprep.subr.mxu0 0.0
        %3915 = vmatpush1.msra.mxu0 0.0
        %3916 = vmatprep.subr.mxu0 0.0
        %3917 = vmatpush1.msra.mxu0 0.0
        %3918 = vmatprep.subr.mxu0 0.0
        %3919 = vmatpush1.msra.mxu0 0.0
        %3920 = vmatprep.subr.mxu0 0.0
        %3921 = vmatpush1.msra.mxu0 0.0
        %3922 = vmatprep.subr.mxu0 0.0
        %3923 = vmatpush1.msra.mxu0 0.0
        %3924 = vmatprep.subr.mxu0 0.0
        %3925 = vmatpush1.msra.mxu0 0.0
        %3926 = vmatprep.subr.mxu0 0.0
        %3927 = vmatpush1.msra.mxu0 0.0
        %3928 = vmatprep.subr.mxu0 0.0
        %3929 = vmatpush1.msra.mxu0 0.0
        %3930 = vmatprep.subr.mxu0 0.0
        %3931 = vmatpush1.msra.mxu0 0.0
        %3932 = vmatprep.subr.mxu0 0.0
        %3933 = vmatpush1.msra.mxu0 0.0
        %3934 = vmatprep.subr.mxu0 0.0
        %3935 = vmatpush1.msra.mxu0 0.0
        %3936 = vmatprep.subr.mxu0 0.0
        %3937 = vmatpush1.msra.mxu0 0.0
        %3938 = vmatprep.subr.mxu0 0.0
        %3939 = vmatpush1.msra.mxu0 0.0
        %3940 = vmatprep.subr.mxu0 0.0
        %3941 = vmatpush1.msra.mxu0 0.0
        %3942 = vmatprep.subr.mxu0 0.0
        %3943 = vmatpush1.msra.mxu0 0.0
        %3944 = vmatprep.subr.mxu0 0.0
        %3945 = vmatpush1.msra.mxu0 0.0
        %3946 = vmatprep.subr.mxu0 0.0
        %3947 = vmatpush1.msra.mxu0 0.0
        %3948 = vmatprep.subr.mxu0 0.0
        %3949 = vmatpush1.msra.mxu0 0.0
        %3950 = vmatprep.subr.mxu0 0.0
        %3951 = vmatpush1.msra.mxu0 0.0
        %3952 = vmatprep.subr.mxu0 0.0
        %3953 = vmatpush1.msra.mxu0 0.0
        %3954 = vmatprep.subr.mxu0 0.0
        %3955 = vmatpush1.msra.mxu0 0.0
        %3956 = vmatprep.subr.mxu0 0.0
        %3957 = vmatpush1.msra.mxu0 0.0
        %3958 = vmatprep.subr.mxu0 0.0
        %3959 = vmatpush1.msra.mxu0 0.0
        %3960 = vmatprep.mubr.f32.mxu0 0.0
        %3961 = vmatmul.mubr.f32.gmra.mrb[0].mxu0 %v3891
        %v3962 = vpop.f32.mrb[0].mxu0
        %v3963 = vadd.f32 %v3883, %v3962
        %v3964 = vpop.f32.mrb[0].mxu0
        %v3965 = vadd.f32 %v3883, %v3964
        %3966 = vmatprep.mubr.f32.mxu0 0.0
        %3967 = vmatmul.mubr.f32.gmra.mrb[0].mxu0 %v3894
        %v3968 = vpop.f32.mrb[0].mxu0
        %v3969 = vadd.f32 %v3888, %v3968
        %v3970 = vpop.f32.mrb[0].mxu0
        %v3971 = vadd.f32 %v3888, %v3970
        %3972 = vdwg.mxu0
        %3973 = vmatprep.subr.mxu0 %v3845
        %3974 = vmatpush1.msra.mxu0 %v3844
        %3975 = vmatprep.subr.mxu0 %v3861
        %3976 = vmatpush1.msra.mxu0 %v3860
        %3977 = vmatprep.subr.mxu0 0.0
        %3978 = vmatpush1.msra.mxu0 0.0
        %3979 = vmatprep.subr.mxu0 0.0
        %3980 = vmatpush1.msra.mxu0 0.0
        %3981 = vmatprep.subr.mxu0 0.0
        %3982 = vmatpush1.msra.mxu0 0.0
        %3983 = vmatprep.subr.mxu0 0.0
        %3984 = vmatpush1.msra.mxu0 0.0
        %3985 = vmatprep.subr.mxu0 0.0
        %3986 = vmatpush1.msra.mxu0 0.0
        %3987 = vmatprep.subr.mxu0 0.0
        %3988 = vmatpush1.msra.mxu0 0.0
        %3989 = vmatprep.subr.mxu0 0.0
        %3990 = vmatpush1.msra.mxu0 0.0
        %3991 = vmatprep.subr.mxu0 0.0
        %3992 = vmatpush1.msra.mxu0 0.0
        %3993 = vmatprep.subr.mxu0 0.0
        %3994 = vmatpush1.msra.mxu0 0.0
        %3995 = vmatprep.subr.mxu0 0.0
        %3996 = vmatpush1.msra.mxu0 0.0
        %3997 = vmatprep.subr.mxu0 0.0
        %3998 = vmatpush1.msra.mxu0 0.0
        %3999 = vmatprep.subr.mxu0 0.0
        %4000 = vmatpush1.msra.mxu0 0.0
        %4001 = vmatprep.subr.mxu0 0.0
        %4002 = vmatpush1.msra.mxu0 0.0
        %4003 = vmatprep.subr.mxu0 0.0
        %4004 = vmatpush1.msra.mxu0 0.0
        %4005 = vmatprep.subr.mxu0 0.0
        %4006 = vmatpush1.msra.mxu0 0.0
        %4007 = vmatprep.subr.mxu0 0.0
        %4008 = vmatpush1.msra.mxu0 0.0
        %4009 = vmatprep.subr.mxu0 0.0
        %4010 = vmatpush1.msra.mxu0 0.0
        %4011 = vmatprep.subr.mxu0 0.0
        %4012 = vmatpush1.msra.mxu0 0.0
        %4013 = vmatprep.subr.mxu0 0.0
        %4014 = vmatpush1.msra.mxu0 0.0
        %4015 = vmatprep.subr.mxu0 0.0
        %4016 = vmatpush1.msra.mxu0 0.0
        %4017 = vmatprep.subr.mxu0 0.0
        %4018 = vmatpush1.msra.mxu0 0.0
        %4019 = vmatprep.subr.mxu0 0.0
        %4020 = vmatpush1.msra.mxu0 0.0
        %4021 = vmatprep.subr.mxu0 0.0
        %4022 = vmatpush1.msra.mxu0 0.0
        %4023 = vmatprep.subr.mxu0 0.0
        %4024 = vmatpush1.msra.mxu0 0.0
        %4025 = vmatprep.subr.mxu0 0.0
        %4026 = vmatpush1.msra.mxu0 0.0
        %4027 = vmatprep.subr.mxu0 0.0
        %4028 = vmatpush1.msra.mxu0 0.0
        %4029 = vmatprep.subr.mxu0 0.0
        %4030 = vmatpush1.msra.mxu0 0.0
        %4031 = vmatprep.subr.mxu0 0.0
        %4032 = vmatpush1.msra.mxu0 0.0
        %4033 = vmatprep.subr.mxu0 0.0
        %4034 = vmatpush1.msra.mxu0 0.0
        %4035 = vmatprep.subr.mxu0 0.0
        %4036 = vmatpush1.msra.mxu0 0.0
        %4037 = vmatprep.mubr.f32.mxu0 0.0
        %4038 = vmatmul.mubr.f32.gmra.mrb[0].mxu0 %v3891
        %v4039 = vpop.f32.mrb[0].mxu0
        %v4040 = vadd.f32 %v3883, %v4039
        %v4041 = vpop.f32.mrb[0].mxu0
        %v4042 = vadd.f32 %v3883, %v4041
        %4043 = vmatprep.mubr.f32.mxu0 0.0
        %4044 = vmatmul.mubr.f32.gmra.mrb[0].mxu0 %v3894
        %v4045 = vpop.f32.mrb[0].mxu0
        %v4046 = vadd.f32 %v3888, %v4045
        %v4047 = vpop.f32.mrb[0].mxu0
        %v4048 = vadd.f32 %v3888, %v4047
        %4049 = vdwg.mxu0
        %4050 = vmatprep.subr.mxu0 %v3847
        %4051 = vmatpush1.msra.mxu0 %v3846
        %4052 = vmatprep.subr.mxu0 %v3863
        %4053 = vmatpush1.msra.mxu0 %v3862
        %4054 = vmatprep.subr.mxu0 0.0
        %4055 = vmatpush1.msra.mxu0 0.0
        %4056 = vmatprep.subr.mxu0 0.0
        %4057 = vmatpush1.msra.mxu0 0.0
        %4058 = vmatprep.subr.mxu0 0.0
        %4059 = vmatpush1.msra.mxu0 0.0
        %4060 = vmatprep.subr.mxu0 0.0
        %4061 = vmatpush1.msra.mxu0 0.0
        %4062 = vmatprep.subr.mxu0 0.0
        %4063 = vmatpush1.msra.mxu0 0.0
        %4064 = vmatprep.subr.mxu0 0.0
        %4065 = vmatpush1.msra.mxu0 0.0
        %4066 = vmatprep.subr.mxu0 0.0
        %4067 = vmatpush1.msra.mxu0 0.0
        %4068 = vmatprep.subr.mxu0 0.0
        %4069 = vmatpush1.msra.mxu0 0.0
        %4070 = vmatprep.subr.mxu0 0.0
        %4071 = vmatpush1.msra.mxu0 0.0
        %4072 = vmatprep.subr.mxu0 0.0
        %4073 = vmatpush1.msra.mxu0 0.0
        %4074 = vmatprep.subr.mxu0 0.0
        %4075 = vmatpush1.msra.mxu0 0.0
        %4076 = vmatprep.subr.mxu0 0.0
        %4077 = vmatpush1.msra.mxu0 0.0
        %4078 = vmatprep.subr.mxu0 0.0
        %4079 = vmatpush1.msra.mxu0 0.0
        %4080 = vmatprep.subr.mxu0 0.0
        %4081 = vmatpush1.msra.mxu0 0.0
        %4082 = vmatprep.subr.mxu0 0.0
        %4083 = vmatpush1.msra.mxu0 0.0
        %4084 = vmatprep.subr.mxu0 0.0
        %4085 = vmatpush1.msra.mxu0 0.0
        %4086 = vmatprep.subr.mxu0 0.0
        %4087 = vmatpush1.msra.mxu0 0.0
        %4088 = vmatprep.subr.mxu0 0.0
        %4089 = vmatpush1.msra.mxu0 0.0
        %4090 = vmatprep.subr.mxu0 0.0
        %4091 = vmatpush1.msra.mxu0 0.0
        %4092 = vmatprep.subr.mxu0 0.0
        %4093 = vmatpush1.msra.mxu0 0.0
        %4094 = vmatprep.subr.mxu0 0.0
        %4095 = vmatpush1.msra.mxu0 0.0
        %4096 = vmatprep.subr.mxu0 0.0
        %4097 = vmatpush1.msra.mxu0 0.0
        %4098 = vmatprep.subr.mxu0 0.0
        %4099 = vmatpush1.msra.mxu0 0.0
        %4100 = vmatprep.subr.mxu0 0.0
        %4101 = vmatpush1.msra.mxu0 0.0
        %4102 = vmatprep.subr.mxu0 0.0
        %4103 = vmatpush1.msra.mxu0 0.0
        %4104 = vmatprep.subr.mxu0 0.0
        %4105 = vmatpush1.msra.mxu0 0.0
        %4106 = vmatprep.subr.mxu0 0.0
        %4107 = vmatpush1.msra.mxu0 0.0
        %4108 = vmatprep.subr.mxu0 0.0
        %4109 = vmatpush1.msra.mxu0 0.0
        %4110 = vmatprep.subr.mxu0 0.0
        %4111 = vmatpush1.msra.mxu0 0.0
        %4112 = vmatprep.subr.mxu0 0.0
        %4113 = vmatpush1.msra.mxu0 0.0
        %4114 = vmatprep.mubr.f32.mxu0 0.0
        %4115 = vmatmul.mubr.f32.gmra.mrb[0].mxu0 %v3891
        %v4116 = vpop.f32.mrb[0].mxu0
        %v4117 = vadd.f32 %v3883, %v4116
        %v4118 = vpop.f32.mrb[0].mxu0
        %v4119 = vadd.f32 %v3883, %v4118
        %4120 = vmatprep.mubr.f32.mxu0 0.0
        %4121 = vmatmul.mubr.f32.gmra.mrb[0].mxu0 %v3894
        %v4122 = vpop.f32.mrb[0].mxu0
        %v4123 = vadd.f32 %v3888, %v4122
        %v4124 = vpop.f32.mrb[0].mxu0
        %v4125 = vadd.f32 %v3888, %v4124
        %4126 = vdwg.mxu0
        %4127 = vmatprep.subr.mxu0 %v3849
        %4128 = vmatpush1.msra.mxu0 %v3848
        %4129 = vmatprep.subr.mxu0 %v3865
        %4130 = vmatpush1.msra.mxu0 %v3864
        %4131 = vmatprep.subr.mxu0 0.0
        %4132 = vmatpush1.msra.mxu0 0.0
        %4133 = vmatprep.subr.mxu0 0.0
        %4134 = vmatpush1.msra.mxu0 0.0
        %4135 = vmatprep.subr.mxu0 0.0
        %4136 = vmatpush1.msra.mxu0 0.0
        %4137 = vmatprep.subr.mxu0 0.0
        %4138 = vmatpush1.msra.mxu0 0.0
        %4139 = vmatprep.subr.mxu0 0.0
        %4140 = vmatpush1.msra.mxu0 0.0
        %4141 = vmatprep.subr.mxu0 0.0
        %4142 = vmatpush1.msra.mxu0 0.0
        %4143 = vmatprep.subr.mxu0 0.0
        %4144 = vmatpush1.msra.mxu0 0.0
        %4145 = vmatprep.subr.mxu0 0.0
        %4146 = vmatpush1.msra.mxu0 0.0
        %4147 = vmatprep.subr.mxu0 0.0
        %4148 = vmatpush1.msra.mxu0 0.0
        %4149 = vmatprep.subr.mxu0 0.0
        %4150 = vmatpush1.msra.mxu0 0.0
        %4151 = vmatprep.subr.mxu0 0.0
        %4152 = vmatpush1.msra.mxu0 0.0
        %4153 = vmatprep.subr.mxu0 0.0
        %4154 = vmatpush1.msra.mxu0 0.0
        %4155 = vmatprep.subr.mxu0 0.0
        %4156 = vmatpush1.msra.mxu0 0.0
        %4157 = vmatprep.subr.mxu0 0.0
        %4158 = vmatpush1.msra.mxu0 0.0
        %4159 = vmatprep.subr.mxu0 0.0
        %4160 = vmatpush1.msra.mxu0 0.0
        %4161 = vmatprep.subr.mxu0 0.0
        %4162 = vmatpush1.msra.mxu0 0.0
        %4163 = vmatprep.subr.mxu0 0.0
        %4164 = vmatpush1.msra.mxu0 0.0
        %4165 = vmatprep.subr.mxu0 0.0
        %4166 = vmatpush1.msra.mxu0 0.0
        %4167 = vmatprep.subr.mxu0 0.0
        %4168 = vmatpush1.msra.mxu0 0.0
        %4169 = vmatprep.subr.mxu0 0.0
        %4170 = vmatpush1.msra.mxu0 0.0
        %4171 = vmatprep.subr.mxu0 0.0
        %4172 = vmatpush1.msra.mxu0 0.0
        %4173 = vmatprep.subr.mxu0 0.0
        %4174 = vmatpush1.msra.mxu0 0.0
        %4175 = vmatprep.subr.mxu0 0.0
        %4176 = vmatpush1.msra.mxu0 0.0
        %4177 = vmatprep.subr.mxu0 0.0
        %4178 = vmatpush1.msra.mxu0 0.0
        %4179 = vmatprep.subr.mxu0 0.0
        %4180 = vmatpush1.msra.mxu0 0.0
        %4181 = vmatprep.subr.mxu0 0.0
        %4182 = vmatpush1.msra.mxu0 0.0
        %4183 = vmatprep.subr.mxu0 0.0
        %4184 = vmatpush1.msra.mxu0 0.0
        %4185 = vmatprep.subr.mxu0 0.0
        %4186 = vmatpush1.msra.mxu0 0.0
        %4187 = vmatprep.subr.mxu0 0.0
        %4188 = vmatpush1.msra.mxu0 0.0
        %4189 = vmatprep.subr.mxu0 0.0
        %4190 = vmatpush1.msra.mxu0 0.0
        %4191 = vmatprep.mubr.f32.mxu0 0.0
        %4192 = vmatmul.mubr.f32.gmra.mrb[0].mxu0 %v3891
        %v4193 = vpop.f32.mrb[0].mxu0
        %v4194 = vadd.f32 %v3883, %v4193
        %v4195 = vpop.f32.mrb[0].mxu0
        %v4196 = vadd.f32 %v3883, %v4195
        %4197 = vmatprep.mubr.f32.mxu0 0.0
        %4198 = vmatmul.mubr.f32.gmra.mrb[0].mxu0 %v3894
        %v4199 = vpop.f32.mrb[0].mxu0
        %v4200 = vadd.f32 %v3888, %v4199
        %v4201 = vpop.f32.mrb[0].mxu0
        %v4202 = vadd.f32 %v3888, %v4201
        %4203 = vdwg.mxu0
        %4204 = vmatprep.subr.mxu0 %v3851
        %4205 = vmatpush1.msra.mxu0 %v3850
        %4206 = vmatprep.subr.mxu0 %v3867
        %4207 = vmatpush1.msra.mxu0 %v3866
        %4208 = vmatprep.subr.mxu0 0.0
        %4209 = vmatpush1.msra.mxu0 0.0
        %4210 = vmatprep.subr.mxu0 0.0
        %4211 = vmatpush1.msra.mxu0 0.0
        %4212 = vmatprep.subr.mxu0 0.0
        %4213 = vmatpush1.msra.mxu0 0.0
        %4214 = vmatprep.subr.mxu0 0.0
        %4215 = vmatpush1.msra.mxu0 0.0
        %4216 = vmatprep.subr.mxu0 0.0
        %4217 = vmatpush1.msra.mxu0 0.0
        %4218 = vmatprep.subr.mxu0 0.0
        %4219 = vmatpush1.msra.mxu0 0.0
        %4220 = vmatprep.subr.mxu0 0.0
        %4221 = vmatpush1.msra.mxu0 0.0
        %4222 = vmatprep.subr.mxu0 0.0
        %4223 = vmatpush1.msra.mxu0 0.0
        %4224 = vmatprep.subr.mxu0 0.0
        %4225 = vmatpush1.msra.mxu0 0.0
        %4226 = vmatprep.subr.mxu0 0.0
        %4227 = vmatpush1.msra.mxu0 0.0
        %4228 = vmatprep.subr.mxu0 0.0
        %4229 = vmatpush1.msra.mxu0 0.0
        %4230 = vmatprep.subr.mxu0 0.0
        %4231 = vmatpush1.msra.mxu0 0.0
        %4232 = vmatprep.subr.mxu0 0.0
        %4233 = vmatpush1.msra.mxu0 0.0
        %4234 = vmatprep.subr.mxu0 0.0
        %4235 = vmatpush1.msra.mxu0 0.0
        %4236 = vmatprep.subr.mxu0 0.0
        %4237 = vmatpush1.msra.mxu0 0.0
        %4238 = vmatprep.subr.mxu0 0.0
        %4239 = vmatpush1.msra.mxu0 0.0
        %4240 = vmatprep.subr.mxu0 0.0
        %4241 = vmatpush1.msra.mxu0 0.0
        %4242 = vmatprep.subr.mxu0 0.0
        %4243 = vmatpush1.msra.mxu0 0.0
        %4244 = vmatprep.subr.mxu0 0.0
        %4245 = vmatpush1.msra.mxu0 0.0
        %4246 = vmatprep.subr.mxu0 0.0
        %4247 = vmatpush1.msra.mxu0 0.0
        %4248 = vmatprep.subr.mxu0 0.0
        %4249 = vmatpush1.msra.mxu0 0.0
        %4250 = vmatprep.subr.mxu0 0.0
        %4251 = vmatpush1.msra.mxu0 0.0
        %4252 = vmatprep.subr.mxu0 0.0
        %4253 = vmatpush1.msra.mxu0 0.0
        %4254 = vmatprep.subr.mxu0 0.0
        %4255 = vmatpush1.msra.mxu0 0.0
        %4256 = vmatprep.subr.mxu0 0.0
        %4257 = vmatpush1.msra.mxu0 0.0
        %4258 = vmatprep.subr.mxu0 0.0
        %4259 = vmatpush1.msra.mxu0 0.0
        %4260 = vmatprep.subr.mxu0 0.0
        %4261 = vmatpush1.msra.mxu0 0.0
        %4262 = vmatprep.subr.mxu0 0.0
        %4263 = vmatpush1.msra.mxu0 0.0
        %4264 = vmatprep.subr.mxu0 0.0
        %4265 = vmatpush1.msra.mxu0 0.0
        %4266 = vmatprep.subr.mxu0 0.0
        %4267 = vmatpush1.msra.mxu0 0.0
        %4268 = vmatprep.mubr.f32.mxu0 0.0
        %4269 = vmatmul.mubr.f32.gmra.mrb[0].mxu0 %v3891
        %v4270 = vpop.f32.mrb[0].mxu0
        %v4271 = vadd.f32 %v3883, %v4270
        %v4272 = vpop.f32.mrb[0].mxu0
        %v4273 = vadd.f32 %v3883, %v4272
        %4274 = vmatprep.mubr.f32.mxu0 0.0
        %4275 = vmatmul.mubr.f32.gmra.mrb[0].mxu0 %v3894
        %v4276 = vpop.f32.mrb[0].mxu0
        %v4277 = vadd.f32 %v3888, %v4276
        %v4278 = vpop.f32.mrb[0].mxu0
        %v4279 = vadd.f32 %v3888, %v4278
        %4280 = vdwg.mxu0
        %4281 = vmatprep.subr.mxu0 %v3853
        %4282 = vmatpush1.msra.mxu0 %v3852
        %4283 = vmatprep.subr.mxu0 %v3869
        %4284 = vmatpush1.msra.mxu0 %v3868
        %4285 = vmatprep.subr.mxu0 0.0
        %4286 = vmatpush1.msra.mxu0 0.0
        %4287 = vmatprep.subr.mxu0 0.0
        %4288 = vmatpush1.msra.mxu0 0.0
        %4289 = vmatprep.subr.mxu0 0.0
        %4290 = vmatpush1.msra.mxu0 0.0
        %4291 = vmatprep.subr.mxu0 0.0
        %4292 = vmatpush1.msra.mxu0 0.0
        %4293 = vmatprep.subr.mxu0 0.0
        %4294 = vmatpush1.msra.mxu0 0.0
        %4295 = vmatprep.subr.mxu0 0.0
        %4296 = vmatpush1.msra.mxu0 0.0
        %4297 = vmatprep.subr.mxu0 0.0
        %4298 = vmatpush1.msra.mxu0 0.0
        %4299 = vmatprep.subr.mxu0 0.0
        %4300 = vmatpush1.msra.mxu0 0.0
        %4301 = vmatprep.subr.mxu0 0.0
        %4302 = vmatpush1.msra.mxu0 0.0
        %4303 = vmatprep.subr.mxu0 0.0
        %4304 = vmatpush1.msra.mxu0 0.0
        %4305 = vmatprep.subr.mxu0 0.0
        %4306 = vmatpush1.msra.mxu0 0.0
        %4307 = vmatprep.subr.mxu0 0.0
        %4308 = vmatpush1.msra.mxu0 0.0
        %4309 = vmatprep.subr.mxu0 0.0
        %4310 = vmatpush1.msra.mxu0 0.0
        %4311 = vmatprep.subr.mxu0 0.0
        %4312 = vmatpush1.msra.mxu0 0.0
        %4313 = vmatprep.subr.mxu0 0.0
        %4314 = vmatpush1.msra.mxu0 0.0
        %4315 = vmatprep.subr.mxu0 0.0
        %4316 = vmatpush1.msra.mxu0 0.0
        %4317 = vmatprep.subr.mxu0 0.0
        %4318 = vmatpush1.msra.mxu0 0.0
        %4319 = vmatprep.subr.mxu0 0.0
        %4320 = vmatpush1.msra.mxu0 0.0
        %4321 = vmatprep.subr.mxu0 0.0
        %4322 = vmatpush1.msra.mxu0 0.0
        %4323 = vmatprep.subr.mxu0 0.0
        %4324 = vmatpush1.msra.mxu0 0.0
        %4325 = vmatprep.subr.mxu0 0.0
        %4326 = vmatpush1.msra.mxu0 0.0
        %4327 = vmatprep.subr.mxu0 0.0
        %4328 = vmatpush1.msra.mxu0 0.0
        %4329 = vmatprep.subr.mxu0 0.0
        %4330 = vmatpush1.msra.mxu0 0.0
        %4331 = vmatprep.subr.mxu0 0.0
        %4332 = vmatpush1.msra.mxu0 0.0
        %4333 = vmatprep.subr.mxu0 0.0
        %4334 = vmatpush1.msra.mxu0 0.0
        %4335 = vmatprep.subr.mxu0 0.0
        %4336 = vmatpush1.msra.mxu0 0.0
        %4337 = vmatprep.subr.mxu0 0.0
        %4338 = vmatpush1.msra.mxu0 0.0
        %4339 = vmatprep.subr.mxu0 0.0
        %4340 = vmatpush1.msra.mxu0 0.0
        %4341 = vmatprep.subr.mxu0 0.0
        %4342 = vmatpush1.msra.mxu0 0.0
        %4343 = vmatprep.subr.mxu0 0.0
        %4344 = vmatpush1.msra.mxu0 0.0
        %4345 = vmatprep.mubr.f32.mxu0 0.0
        %4346 = vmatmul.mubr.f32.gmra.mrb[0].mxu0 %v3891
        %v4347 = vpop.f32.mrb[0].mxu0
        %v4348 = vadd.f32 %v3883, %v4347
        %v4349 = vpop.f32.mrb[0].mxu0
        %v4350 = vadd.f32 %v3883, %v4349
        %4351 = vmatprep.mubr.f32.mxu0 0.0
        %4352 = vmatmul.mubr.f32.gmra.mrb[0].mxu0 %v3894
        %v4353 = vpop.f32.mrb[0].mxu0
        %v4354 = vadd.f32 %v3888, %v4353
        %v4355 = vpop.f32.mrb[0].mxu0
        %v4356 = vadd.f32 %v3888, %v4355
        %4357 = vdwg.mxu0
        %4358 = vmatprep.subr.mxu0 %v3855
        %4359 = vmatpush1.msra.mxu0 %v3854
        %4360 = vmatprep.subr.mxu0 %v3871
        %4361 = vmatpush1.msra.mxu0 %v3870
        %4362 = vmatprep.subr.mxu0 0.0
        %4363 = vmatpush1.msra.mxu0 0.0
        %4364 = vmatprep.subr.mxu0 0.0
        %4365 = vmatpush1.msra.mxu0 0.0
        %4366 = vmatprep.subr.mxu0 0.0
        %4367 = vmatpush1.msra.mxu0 0.0
        %4368 = vmatprep.subr.mxu0 0.0
        %4369 = vmatpush1.msra.mxu0 0.0
        %4370 = vmatprep.subr.mxu0 0.0
        %4371 = vmatpush1.msra.mxu0 0.0
        %4372 = vmatprep.subr.mxu0 0.0
        %4373 = vmatpush1.msra.mxu0 0.0
        %4374 = vmatprep.subr.mxu0 0.0
        %4375 = vmatpush1.msra.mxu0 0.0
        %4376 = vmatprep.subr.mxu0 0.0
        %4377 = vmatpush1.msra.mxu0 0.0
        %4378 = vmatprep.subr.mxu0 0.0
        %4379 = vmatpush1.msra.mxu0 0.0
        %4380 = vmatprep.subr.mxu0 0.0
        %4381 = vmatpush1.msra.mxu0 0.0
        %4382 = vmatprep.subr.mxu0 0.0
        %4383 = vmatpush1.msra.mxu0 0.0
        %4384 = vmatprep.subr.mxu0 0.0
        %4385 = vmatpush1.msra.mxu0 0.0
        %4386 = vmatprep.subr.mxu0 0.0
        %4387 = vmatpush1.msra.mxu0 0.0
        %4388 = vmatprep.subr.mxu0 0.0
        %4389 = vmatpush1.msra.mxu0 0.0
        %4390 = vmatprep.subr.mxu0 0.0
        %4391 = vmatpush1.msra.mxu0 0.0
        %4392 = vmatprep.subr.mxu0 0.0
        %4393 = vmatpush1.msra.mxu0 0.0
        %4394 = vmatprep.subr.mxu0 0.0
        %4395 = vmatpush1.msra.mxu0 0.0
        %4396 = vmatprep.subr.mxu0 0.0
        %4397 = vmatpush1.msra.mxu0 0.0
        %4398 = vmatprep.subr.mxu0 0.0
        %4399 = vmatpush1.msra.mxu0 0.0
        %4400 = vmatprep.subr.mxu0 0.0
        %4401 = vmatpush1.msra.mxu0 0.0
        %4402 = vmatprep.subr.mxu0 0.0
        %4403 = vmatpush1.msra.mxu0 0.0
        %4404 = vmatprep.subr.mxu0 0.0
        %4405 = vmatpush1.msra.mxu0 0.0
        %4406 = vmatprep.subr.mxu0 0.0
        %4407 = vmatpush1.msra.mxu0 0.0
        %4408 = vmatprep.subr.mxu0 0.0
        %4409 = vmatpush1.msra.mxu0 0.0
        %4410 = vmatprep.subr.mxu0 0.0
        %4411 = vmatpush1.msra.mxu0 0.0
        %4412 = vmatprep.subr.mxu0 0.0
        %4413 = vmatpush1.msra.mxu0 0.0
        %4414 = vmatprep.subr.mxu0 0.0
        %4415 = vmatpush1.msra.mxu0 0.0
        %4416 = vmatprep.subr.mxu0 0.0
        %4417 = vmatpush1.msra.mxu0 0.0
        %4418 = vmatprep.subr.mxu0 0.0
        %4419 = vmatpush1.msra.mxu0 0.0
        %4420 = vmatprep.subr.mxu0 0.0
        %4421 = vmatpush1.msra.mxu0 0.0
        %4422 = vmatprep.mubr.f32.mxu0 0.0
        %4423 = vmatmul.mubr.f32.gmra.mrb[0].mxu0 %v3891
        %v4424 = vpop.f32.mrb[0].mxu0
        %v4425 = vadd.f32 %v3883, %v4424
        %v4426 = vpop.f32.mrb[0].mxu0
        %v4427 = vadd.f32 %v3883, %v4426
        %4428 = vmatprep.mubr.f32.mxu0 0.0
        %4429 = vmatmul.mubr.f32.gmra.mrb[0].mxu0 %v3894
        %v4430 = vpop.f32.mrb[0].mxu0
        %v4431 = vadd.f32 %v3888, %v4430
        %v4432 = vpop.f32.mrb[0].mxu0
        %v4433 = vadd.f32 %v3888, %v4432
        %4434 = vdwg.mxu0
        %4435 = vmatprep.subr.mxu0 %v3857
        %4436 = vmatpush1.msra.mxu0 %v3856
        %4437 = vmatprep.subr.mxu0 %v3873
        %4438 = vmatpush1.msra.mxu0 %v3872
        %4439 = vmatprep.subr.mxu0 0.0
        %4440 = vmatpush1.msra.mxu0 0.0
        %4441 = vmatprep.subr.mxu0 0.0
        %4442 = vmatpush1.msra.mxu0 0.0
        %4443 = vmatprep.subr.mxu0 0.0
        %4444 = vmatpush1.msra.mxu0 0.0
        %4445 = vmatprep.subr.mxu0 0.0
        %4446 = vmatpush1.msra.mxu0 0.0
        %4447 = vmatprep.subr.mxu0 0.0
        %4448 = vmatpush1.msra.mxu0 0.0
        %4449 = vmatprep.subr.mxu0 0.0
        %4450 = vmatpush1.msra.mxu0 0.0
        %4451 = vmatprep.subr.mxu0 0.0
        %4452 = vmatpush1.msra.mxu0 0.0
        %4453 = vmatprep.subr.mxu0 0.0
        %4454 = vmatpush1.msra.mxu0 0.0
        %4455 = vmatprep.subr.mxu0 0.0
        %4456 = vmatpush1.msra.mxu0 0.0
        %4457 = vmatprep.subr.mxu0 0.0
        %4458 = vmatpush1.msra.mxu0 0.0
        %4459 = vmatprep.subr.mxu0 0.0
        %4460 = vmatpush1.msra.mxu0 0.0
        %4461 = vmatprep.subr.mxu0 0.0
        %4462 = vmatpush1.msra.mxu0 0.0
        %4463 = vmatprep.subr.mxu0 0.0
        %4464 = vmatpush1.msra.mxu0 0.0
        %4465 = vmatprep.subr.mxu0 0.0
        %4466 = vmatpush1.msra.mxu0 0.0
        %4467 = vmatprep.subr.mxu0 0.0
        %4468 = vmatpush1.msra.mxu0 0.0
        %4469 = vmatprep.subr.mxu0 0.0
        %4470 = vmatpush1.msra.mxu0 0.0
        %4471 = vmatprep.subr.mxu0 0.0
        %4472 = vmatpush1.msra.mxu0 0.0
        %4473 = vmatprep.subr.mxu0 0.0
        %4474 = vmatpush1.msra.mxu0 0.0
        %4475 = vmatprep.subr.mxu0 0.0
        %4476 = vmatpush1.msra.mxu0 0.0
        %4477 = vmatprep.subr.mxu0 0.0
        %4478 = vmatpush1.msra.mxu0 0.0
        %4479 = vmatprep.subr.mxu0 0.0
        %4480 = vmatpush1.msra.mxu0 0.0
        %4481 = vmatprep.subr.mxu0 0.0
        %4482 = vmatpush1.msra.mxu0 0.0
        %4483 = vmatprep.subr.mxu0 0.0
        %4484 = vmatpush1.msra.mxu0 0.0
        %4485 = vmatprep.subr.mxu0 0.0
        %4486 = vmatpush1.msra.mxu0 0.0
        %4487 = vmatprep.subr.mxu0 0.0
        %4488 = vmatpush1.msra.mxu0 0.0
        %4489 = vmatprep.subr.mxu0 0.0
        %4490 = vmatpush1.msra.mxu0 0.0
        %4491 = vmatprep.subr.mxu0 0.0
        %4492 = vmatpush1.msra.mxu0 0.0
        %4493 = vmatprep.subr.mxu0 0.0
        %4494 = vmatpush1.msra.mxu0 0.0
        %4495 = vmatprep.subr.mxu0 0.0
        %4496 = vmatpush1.msra.mxu0 0.0
        %4497 = vmatprep.subr.mxu0 0.0
        %4498 = vmatpush1.msra.mxu0 0.0
        %4499 = vmatprep.mubr.f32.mxu0 0.0
        %4500 = vmatmul.mubr.f32.gmra.mrb[0].mxu0 %v3891
        %v4501 = vpop.f32.mrb[0].mxu0
        %v4502 = vadd.f32 %v3883, %v4501
        %v4503 = vpop.f32.mrb[0].mxu0
        %v4504 = vadd.f32 %v3883, %v4503
        %4505 = vmatprep.mubr.f32.mxu0 0.0
        %4506 = vmatmul.mubr.f32.gmra.mrb[0].mxu0 %v3894
        %v4507 = vpop.f32.mrb[0].mxu0
        %v4508 = vadd.f32 %v3888, %v4507
        %v4509 = vpop.f32.mrb[0].mxu0
        %v4510 = vadd.f32 %v3888, %v4509
        %4511 = vdwg.mxu0
        %s4512 = scalar_lea.vmem %s3, 80
        %v4513 = vld [vmem:[%s4512] sm:$0xff]
        %v4514 = vld [vmem:[%s4512 + $0x8] sm:$0xff]
        %vm4515 = vcmp.ge.f32.partialorder %v3963, 0.0
        %vm4516 = vcmp.ge.f32.partialorder %v3965, 0.0
        %vm4517 = vcmp.ge.f32.partialorder %v4040, 0.0
        %vm4518 = vcmp.ge.f32.partialorder %v4042, 0.0
        %vm4519 = vcmp.ge.f32.partialorder %v4117, 0.0
        %vm4520 = vcmp.ge.f32.partialorder %v4119, 0.0
        %vm4521 = vcmp.ge.f32.partialorder %v4194, 0.0
        %vm4522 = vcmp.ge.f32.partialorder %v4196, 0.0
        %vm4523 = vcmp.ge.f32.partialorder %v4271, 0.0
        %vm4524 = vcmp.ge.f32.partialorder %v4273, 0.0
        %vm4525 = vcmp.ge.f32.partialorder %v4348, 0.0
        %vm4526 = vcmp.ge.f32.partialorder %v4350, 0.0
        %vm4527 = vcmp.ge.f32.partialorder %v4425, 0.0
        %vm4528 = vcmp.ge.f32.partialorder %v4427, 0.0
        %vm4529 = vcmp.ge.f32.partialorder %v4502, 0.0
        %vm4530 = vcmp.ge.f32.partialorder %v4504, 0.0
        %vm4531 = vcmp.ge.f32.partialorder %v3969, 0.0
        %vm4532 = vcmp.ge.f32.partialorder %v3971, 0.0
        %vm4533 = vcmp.ge.f32.partialorder %v4046, 0.0
        %vm4534 = vcmp.ge.f32.partialorder %v4048, 0.0
        %vm4535 = vcmp.ge.f32.partialorder %v4123, 0.0
        %vm4536 = vcmp.ge.f32.partialorder %v4125, 0.0
        %vm4537 = vcmp.ge.f32.partialorder %v4200, 0.0
        %vm4538 = vcmp.ge.f32.partialorder %v4202, 0.0
        %vm4539 = vcmp.ge.f32.partialorder %v4277, 0.0
        %vm4540 = vcmp.ge.f32.partialorder %v4279, 0.0
        %vm4541 = vcmp.ge.f32.partialorder %v4354, 0.0
        %vm4542 = vcmp.ge.f32.partialorder %v4356, 0.0
        %vm4543 = vcmp.ge.f32.partialorder %v4431, 0.0
        %vm4544 = vcmp.ge.f32.partialorder %v4433, 0.0
        %vm4545 = vcmp.ge.f32.partialorder %v4508, 0.0
        %vm4546 = vcmp.ge.f32.partialorder %v4510, 0.0
        %4548 = vset.pattern.permute.xlu0 0
        %4549 = vperm.xlu0 %4548, %v4513
        %v4550 = vpop.permute.xlu0 %4549
        %4553 = vset.pattern.permute.xlu0 0
        %4554 = vperm.xlu0 %4553, %v4514
        %v4555 = vpop.permute.xlu0 %4554
        %v4557 = vmul.f32 %v4550, %v3963
        %v4558 = vmul.f32 %v4550, %v3965
        %v4559 = vmul.f32 %v4550, %v4040
        %v4560 = vmul.f32 %v4550, %v4042
        %v4561 = vmul.f32 %v4550, %v4117
        %v4562 = vmul.f32 %v4550, %v4119
        %v4563 = vmul.f32 %v4550, %v4194
        %v4564 = vmul.f32 %v4550, %v4196
        %v4565 = vmul.f32 %v4550, %v4271
        %v4566 = vmul.f32 %v4550, %v4273
        %v4567 = vmul.f32 %v4550, %v4348
        %v4568 = vmul.f32 %v4550, %v4350
        %v4569 = vmul.f32 %v4550, %v4425
        %v4570 = vmul.f32 %v4550, %v4427
        %v4571 = vmul.f32 %v4550, %v4502
        %v4572 = vmul.f32 %v4550, %v4504
        %v4573 = vmul.f32 %v4555, %v3969
        %v4574 = vmul.f32 %v4555, %v3971
        %v4575 = vmul.f32 %v4555, %v4046
        %v4576 = vmul.f32 %v4555, %v4048
        %v4577 = vmul.f32 %v4555, %v4123
        %v4578 = vmul.f32 %v4555, %v4125
        %v4579 = vmul.f32 %v4555, %v4200
        %v4580 = vmul.f32 %v4555, %v4202
        %v4581 = vmul.f32 %v4555, %v4277
        %v4582 = vmul.f32 %v4555, %v4279
        %v4583 = vmul.f32 %v4555, %v4354
        %v4584 = vmul.f32 %v4555, %v4356
        %v4585 = vmul.f32 %v4555, %v4431
        %v4586 = vmul.f32 %v4555, %v4433
        %v4587 = vmul.f32 %v4555, %v4508
        %v4588 = vmul.f32 %v4555, %v4510
        %v4589 = vsel %vm4515, %v3963, %v4557
        %v4590 = vsel %vm4516, %v3965, %v4558
        %v4591 = vsel %vm4517, %v4040, %v4559
        %v4592 = vsel %vm4518, %v4042, %v4560
        %v4593 = vsel %vm4519, %v4117, %v4561
        %v4594 = vsel %vm4520, %v4119, %v4562
        %v4595 = vsel %vm4521, %v4194, %v4563
        %v4596 = vsel %vm4522, %v4196, %v4564
        %v4597 = vsel %vm4523, %v4271, %v4565
        %v4598 = vsel %vm4524, %v4273, %v4566
        %v4599 = vsel %vm4525, %v4348, %v4567
        %v4600 = vsel %vm4526, %v4350, %v4568
        %v4601 = vsel %vm4527, %v4425, %v4569
        %v4602 = vsel %vm4528, %v4427, %v4570
        %v4603 = vsel %vm4529, %v4502, %v4571
        %v4604 = vsel %vm4530, %v4504, %v4572
        %v4605 = vsel %vm4531, %v3969, %v4573
        %v4606 = vsel %vm4532, %v3971, %v4574
        %v4607 = vsel %vm4533, %v4046, %v4575
        %v4608 = vsel %vm4534, %v4048, %v4576
        %v4609 = vsel %vm4535, %v4123, %v4577
        %v4610 = vsel %vm4536, %v4125, %v4578
        %v4611 = vsel %vm4537, %v4200, %v4579
        %v4612 = vsel %vm4538, %v4202, %v4580
        %v4613 = vsel %vm4539, %v4277, %v4581
        %v4614 = vsel %vm4540, %v4279, %v4582
        %v4615 = vsel %vm4541, %v4354, %v4583
        %v4616 = vsel %vm4542, %v4356, %v4584
        %v4617 = vsel %vm4543, %v4431, %v4585
        %v4618 = vsel %vm4544, %v4433, %v4586
        %v4619 = vsel %vm4545, %v4508, %v4587
        %v4620 = vsel %vm4546, %v4510, %v4588
        %s4621 = scalar_lea.vmem %s1, 96
        %v4622 = vld [vmem:[%s4621] sm:$0xff]
        %v4623 = vld [vmem:[%s4621 + $0x8] sm:$0xff]
        %s4624 = scalar_lea.vmem %s2, 96
        %v4625 = vld [vmem:[%s4624] sm:$0xff]
        %v4626 = vld [vmem:[%s4624 + $0x8] sm:$0xff]
        %4628 = vset.pattern.permute.xlu0 0
        %4629 = vperm.xlu0 %4628, %v4625
        %v4630 = vpop.permute.xlu0 %4629
        %4633 = vset.pattern.permute.xlu0 0
        %4634 = vperm.xlu0 %4633, %v4626
        %v4635 = vpop.permute.xlu0 %4634
        %v4638 = vsel %vm264, %v4622, 0
        %v4641 = vsel %vm264, %v4623, 0
        %4643 = vmatprep.subr.mxu0 %v4590
        %4644 = vmatpush1.msra.mxu0 %v4589
        %4645 = vmatprep.subr.mxu0 %v4606
        %4646 = vmatpush1.msra.mxu0 %v4605
        %4647 = vmatprep.subr.mxu0 0.0
        %4648 = vmatpush1.msra.mxu0 0.0
        %4649 = vmatprep.subr.mxu0 0.0
        %4650 = vmatpush1.msra.mxu0 0.0
        %4651 = vmatprep.subr.mxu0 0.0
        %4652 = vmatpush1.msra.mxu0 0.0
        %4653 = vmatprep.subr.mxu0 0.0
        %4654 = vmatpush1.msra.mxu0 0.0
        %4655 = vmatprep.subr.mxu0 0.0
        %4656 = vmatpush1.msra.mxu0 0.0
        %4657 = vmatprep.subr.mxu0 0.0
        %4658 = vmatpush1.msra.mxu0 0.0
        %4659 = vmatprep.subr.mxu0 0.0
        %4660 = vmatpush1.msra.mxu0 0.0
        %4661 = vmatprep.subr.mxu0 0.0
        %4662 = vmatpush1.msra.mxu0 0.0
        %4663 = vmatprep.subr.mxu0 0.0
        %4664 = vmatpush1.msra.mxu0 0.0
        %4665 = vmatprep.subr.mxu0 0.0
        %4666 = vmatpush1.msra.mxu0 0.0
        %4667 = vmatprep.subr.mxu0 0.0
        %4668 = vmatpush1.msra.mxu0 0.0
        %4669 = vmatprep.subr.mxu0 0.0
        %4670 = vmatpush1.msra.mxu0 0.0
        %4671 = vmatprep.subr.mxu0 0.0
        %4672 = vmatpush1.msra.mxu0 0.0
        %4673 = vmatprep.subr.mxu0 0.0
        %4674 = vmatpush1.msra.mxu0 0.0
        %4675 = vmatprep.subr.mxu0 0.0
        %4676 = vmatpush1.msra.mxu0 0.0
        %4677 = vmatprep.subr.mxu0 0.0
        %4678 = vmatpush1.msra.mxu0 0.0
        %4679 = vmatprep.subr.mxu0 0.0
        %4680 = vmatpush1.msra.mxu0 0.0
        %4681 = vmatprep.subr.mxu0 0.0
        %4682 = vmatpush1.msra.mxu0 0.0
        %4683 = vmatprep.subr.mxu0 0.0
        %4684 = vmatpush1.msra.mxu0 0.0
        %4685 = vmatprep.subr.mxu0 0.0
        %4686 = vmatpush1.msra.mxu0 0.0
        %4687 = vmatprep.subr.mxu0 0.0
        %4688 = vmatpush1.msra.mxu0 0.0
        %4689 = vmatprep.subr.mxu0 0.0
        %4690 = vmatpush1.msra.mxu0 0.0
        %4691 = vmatprep.subr.mxu0 0.0
        %4692 = vmatpush1.msra.mxu0 0.0
        %4693 = vmatprep.subr.mxu0 0.0
        %4694 = vmatpush1.msra.mxu0 0.0
        %4695 = vmatprep.subr.mxu0 0.0
        %4696 = vmatpush1.msra.mxu0 0.0
        %4697 = vmatprep.subr.mxu0 0.0
        %4698 = vmatpush1.msra.mxu0 0.0
        %4699 = vmatprep.subr.mxu0 0.0
        %4700 = vmatpush1.msra.mxu0 0.0
        %4701 = vmatprep.subr.mxu0 0.0
        %4702 = vmatpush1.msra.mxu0 0.0
        %4703 = vmatprep.subr.mxu0 0.0
        %4704 = vmatpush1.msra.mxu0 0.0
        %4705 = vmatprep.subr.mxu0 0.0
        %4706 = vmatpush1.msra.mxu0 0.0
        %4707 = vmatprep.mubr.f32.mxu0 0.0
        %4708 = vmatmul.mubr.f32.gmra.mrb[0].mxu0 %v4638
        %v4709 = vpop.f32.mrb[0].mxu0
        %v4710 = vadd.f32 %v4630, %v4709
        %v4711 = vpop.f32.mrb[0].mxu0
        %v4712 = vadd.f32 %v4630, %v4711
        %4713 = vmatprep.mubr.f32.mxu0 0.0
        %4714 = vmatmul.mubr.f32.gmra.mrb[0].mxu0 %v4641
        %v4715 = vpop.f32.mrb[0].mxu0
        %v4716 = vadd.f32 %v4635, %v4715
        %v4717 = vpop.f32.mrb[0].mxu0
        %v4718 = vadd.f32 %v4635, %v4717
        %4719 = vdwg.mxu0
        %4720 = vmatprep.subr.mxu0 %v4592
        %4721 = vmatpush1.msra.mxu0 %v4591
        %4722 = vmatprep.subr.mxu0 %v4608
        %4723 = vmatpush1.msra.mxu0 %v4607
        %4724 = vmatprep.subr.mxu0 0.0
        %4725 = vmatpush1.msra.mxu0 0.0
        %4726 = vmatprep.subr.mxu0 0.0
        %4727 = vmatpush1.msra.mxu0 0.0
        %4728 = vmatprep.subr.mxu0 0.0
        %4729 = vmatpush1.msra.mxu0 0.0
        %4730 = vmatprep.subr.mxu0 0.0
        %4731 = vmatpush1.msra.mxu0 0.0
        %4732 = vmatprep.subr.mxu0 0.0
        %4733 = vmatpush1.msra.mxu0 0.0
        %4734 = vmatprep.subr.mxu0 0.0
        %4735 = vmatpush1.msra.mxu0 0.0
        %4736 = vmatprep.subr.mxu0 0.0
        %4737 = vmatpush1.msra.mxu0 0.0
        %4738 = vmatprep.subr.mxu0 0.0
        %4739 = vmatpush1.msra.mxu0 0.0
        %4740 = vmatprep.subr.mxu0 0.0
        %4741 = vmatpush1.msra.mxu0 0.0
        %4742 = vmatprep.subr.mxu0 0.0
        %4743 = vmatpush1.msra.mxu0 0.0
        %4744 = vmatprep.subr.mxu0 0.0
        %4745 = vmatpush1.msra.mxu0 0.0
        %4746 = vmatprep.subr.mxu0 0.0
        %4747 = vmatpush1.msra.mxu0 0.0
        %4748 = vmatprep.subr.mxu0 0.0
        %4749 = vmatpush1.msra.mxu0 0.0
        %4750 = vmatprep.subr.mxu0 0.0
        %4751 = vmatpush1.msra.mxu0 0.0
        %4752 = vmatprep.subr.mxu0 0.0
        %4753 = vmatpush1.msra.mxu0 0.0
        %4754 = vmatprep.subr.mxu0 0.0
        %4755 = vmatpush1.msra.mxu0 0.0
        %4756 = vmatprep.subr.mxu0 0.0
        %4757 = vmatpush1.msra.mxu0 0.0
        %4758 = vmatprep.subr.mxu0 0.0
        %4759 = vmatpush1.msra.mxu0 0.0
        %4760 = vmatprep.subr.mxu0 0.0
        %4761 = vmatpush1.msra.mxu0 0.0
        %4762 = vmatprep.subr.mxu0 0.0
        %4763 = vmatpush1.msra.mxu0 0.0
        %4764 = vmatprep.subr.mxu0 0.0
        %4765 = vmatpush1.msra.mxu0 0.0
        %4766 = vmatprep.subr.mxu0 0.0
        %4767 = vmatpush1.msra.mxu0 0.0
        %4768 = vmatprep.subr.mxu0 0.0
        %4769 = vmatpush1.msra.mxu0 0.0
        %4770 = vmatprep.subr.mxu0 0.0
        %4771 = vmatpush1.msra.mxu0 0.0
        %4772 = vmatprep.subr.mxu0 0.0
        %4773 = vmatpush1.msra.mxu0 0.0
        %4774 = vmatprep.subr.mxu0 0.0
        %4775 = vmatpush1.msra.mxu0 0.0
        %4776 = vmatprep.subr.mxu0 0.0
        %4777 = vmatpush1.msra.mxu0 0.0
        %4778 = vmatprep.subr.mxu0 0.0
        %4779 = vmatpush1.msra.mxu0 0.0
        %4780 = vmatprep.subr.mxu0 0.0
        %4781 = vmatpush1.msra.mxu0 0.0
        %4782 = vmatprep.subr.mxu0 0.0
        %4783 = vmatpush1.msra.mxu0 0.0
        %4784 = vmatprep.mubr.f32.mxu0 0.0
        %4785 = vmatmul.mubr.f32.gmra.mrb[0].mxu0 %v4638
        %v4786 = vpop.f32.mrb[0].mxu0
        %v4787 = vadd.f32 %v4630, %v4786
        %v4788 = vpop.f32.mrb[0].mxu0
        %v4789 = vadd.f32 %v4630, %v4788
        %4790 = vmatprep.mubr.f32.mxu0 0.0
        %4791 = vmatmul.mubr.f32.gmra.mrb[0].mxu0 %v4641
        %v4792 = vpop.f32.mrb[0].mxu0
        %v4793 = vadd.f32 %v4635, %v4792
        %v4794 = vpop.f32.mrb[0].mxu0
        %v4795 = vadd.f32 %v4635, %v4794
        %4796 = vdwg.mxu0
        %4797 = vmatprep.subr.mxu0 %v4594
        %4798 = vmatpush1.msra.mxu0 %v4593
        %4799 = vmatprep.subr.mxu0 %v4610
        %4800 = vmatpush1.msra.mxu0 %v4609
        %4801 = vmatprep.subr.mxu0 0.0
        %4802 = vmatpush1.msra.mxu0 0.0
        %4803 = vmatprep.subr.mxu0 0.0
        %4804 = vmatpush1.msra.mxu0 0.0
        %4805 = vmatprep.subr.mxu0 0.0
        %4806 = vmatpush1.msra.mxu0 0.0
        %4807 = vmatprep.subr.mxu0 0.0
        %4808 = vmatpush1.msra.mxu0 0.0
        %4809 = vmatprep.subr.mxu0 0.0
        %4810 = vmatpush1.msra.mxu0 0.0
        %4811 = vmatprep.subr.mxu0 0.0
        %4812 = vmatpush1.msra.mxu0 0.0
        %4813 = vmatprep.subr.mxu0 0.0
        %4814 = vmatpush1.msra.mxu0 0.0
        %4815 = vmatprep.subr.mxu0 0.0
        %4816 = vmatpush1.msra.mxu0 0.0
        %4817 = vmatprep.subr.mxu0 0.0
        %4818 = vmatpush1.msra.mxu0 0.0
        %4819 = vmatprep.subr.mxu0 0.0
        %4820 = vmatpush1.msra.mxu0 0.0
        %4821 = vmatprep.subr.mxu0 0.0
        %4822 = vmatpush1.msra.mxu0 0.0
        %4823 = vmatprep.subr.mxu0 0.0
        %4824 = vmatpush1.msra.mxu0 0.0
        %4825 = vmatprep.subr.mxu0 0.0
        %4826 = vmatpush1.msra.mxu0 0.0
        %4827 = vmatprep.subr.mxu0 0.0
        %4828 = vmatpush1.msra.mxu0 0.0
        %4829 = vmatprep.subr.mxu0 0.0
        %4830 = vmatpush1.msra.mxu0 0.0
        %4831 = vmatprep.subr.mxu0 0.0
        %4832 = vmatpush1.msra.mxu0 0.0
        %4833 = vmatprep.subr.mxu0 0.0
        %4834 = vmatpush1.msra.mxu0 0.0
        %4835 = vmatprep.subr.mxu0 0.0
        %4836 = vmatpush1.msra.mxu0 0.0
        %4837 = vmatprep.subr.mxu0 0.0
        %4838 = vmatpush1.msra.mxu0 0.0
        %4839 = vmatprep.subr.mxu0 0.0
        %4840 = vmatpush1.msra.mxu0 0.0
        %4841 = vmatprep.subr.mxu0 0.0
        %4842 = vmatpush1.msra.mxu0 0.0
        %4843 = vmatprep.subr.mxu0 0.0
        %4844 = vmatpush1.msra.mxu0 0.0
        %4845 = vmatprep.subr.mxu0 0.0
        %4846 = vmatpush1.msra.mxu0 0.0
        %4847 = vmatprep.subr.mxu0 0.0
        %4848 = vmatpush1.msra.mxu0 0.0
        %4849 = vmatprep.subr.mxu0 0.0
        %4850 = vmatpush1.msra.mxu0 0.0
        %4851 = vmatprep.subr.mxu0 0.0
        %4852 = vmatpush1.msra.mxu0 0.0
        %4853 = vmatprep.subr.mxu0 0.0
        %4854 = vmatpush1.msra.mxu0 0.0
        %4855 = vmatprep.subr.mxu0 0.0
        %4856 = vmatpush1.msra.mxu0 0.0
        %4857 = vmatprep.subr.mxu0 0.0
        %4858 = vmatpush1.msra.mxu0 0.0
        %4859 = vmatprep.subr.mxu0 0.0
        %4860 = vmatpush1.msra.mxu0 0.0
        %4861 = vmatprep.mubr.f32.mxu0 0.0
        %4862 = vmatmul.mubr.f32.gmra.mrb[0].mxu0 %v4638
        %v4863 = vpop.f32.mrb[0].mxu0
        %v4864 = vadd.f32 %v4630, %v4863
        %v4865 = vpop.f32.mrb[0].mxu0
        %v4866 = vadd.f32 %v4630, %v4865
        %4867 = vmatprep.mubr.f32.mxu0 0.0
        %4868 = vmatmul.mubr.f32.gmra.mrb[0].mxu0 %v4641
        %v4869 = vpop.f32.mrb[0].mxu0
        %v4870 = vadd.f32 %v4635, %v4869
        %v4871 = vpop.f32.mrb[0].mxu0
        %v4872 = vadd.f32 %v4635, %v4871
        %4873 = vdwg.mxu0
        %4874 = vmatprep.subr.mxu0 %v4596
        %4875 = vmatpush1.msra.mxu0 %v4595
        %4876 = vmatprep.subr.mxu0 %v4612
        %4877 = vmatpush1.msra.mxu0 %v4611
        %4878 = vmatprep.subr.mxu0 0.0
        %4879 = vmatpush1.msra.mxu0 0.0
        %4880 = vmatprep.subr.mxu0 0.0
        %4881 = vmatpush1.msra.mxu0 0.0
        %4882 = vmatprep.subr.mxu0 0.0
        %4883 = vmatpush1.msra.mxu0 0.0
        %4884 = vmatprep.subr.mxu0 0.0
        %4885 = vmatpush1.msra.mxu0 0.0
        %4886 = vmatprep.subr.mxu0 0.0
        %4887 = vmatpush1.msra.mxu0 0.0
        %4888 = vmatprep.subr.mxu0 0.0
        %4889 = vmatpush1.msra.mxu0 0.0
        %4890 = vmatprep.subr.mxu0 0.0
        %4891 = vmatpush1.msra.mxu0 0.0
        %4892 = vmatprep.subr.mxu0 0.0
        %4893 = vmatpush1.msra.mxu0 0.0
        %4894 = vmatprep.subr.mxu0 0.0
        %4895 = vmatpush1.msra.mxu0 0.0
        %4896 = vmatprep.subr.mxu0 0.0
        %4897 = vmatpush1.msra.mxu0 0.0
        %4898 = vmatprep.subr.mxu0 0.0
        %4899 = vmatpush1.msra.mxu0 0.0
        %4900 = vmatprep.subr.mxu0 0.0
        %4901 = vmatpush1.msra.mxu0 0.0
        %4902 = vmatprep.subr.mxu0 0.0
        %4903 = vmatpush1.msra.mxu0 0.0
        %4904 = vmatprep.subr.mxu0 0.0
        %4905 = vmatpush1.msra.mxu0 0.0
        %4906 = vmatprep.subr.mxu0 0.0
        %4907 = vmatpush1.msra.mxu0 0.0
        %4908 = vmatprep.subr.mxu0 0.0
        %4909 = vmatpush1.msra.mxu0 0.0
        %4910 = vmatprep.subr.mxu0 0.0
        %4911 = vmatpush1.msra.mxu0 0.0
        %4912 = vmatprep.subr.mxu0 0.0
        %4913 = vmatpush1.msra.mxu0 0.0
        %4914 = vmatprep.subr.mxu0 0.0
        %4915 = vmatpush1.msra.mxu0 0.0
        %4916 = vmatprep.subr.mxu0 0.0
        %4917 = vmatpush1.msra.mxu0 0.0
        %4918 = vmatprep.subr.mxu0 0.0
        %4919 = vmatpush1.msra.mxu0 0.0
        %4920 = vmatprep.subr.mxu0 0.0
        %4921 = vmatpush1.msra.mxu0 0.0
        %4922 = vmatprep.subr.mxu0 0.0
        %4923 = vmatpush1.msra.mxu0 0.0
        %4924 = vmatprep.subr.mxu0 0.0
        %4925 = vmatpush1.msra.mxu0 0.0
        %4926 = vmatprep.subr.mxu0 0.0
        %4927 = vmatpush1.msra.mxu0 0.0
        %4928 = vmatprep.subr.mxu0 0.0
        %4929 = vmatpush1.msra.mxu0 0.0
        %4930 = vmatprep.subr.mxu0 0.0
        %4931 = vmatpush1.msra.mxu0 0.0
        %4932 = vmatprep.subr.mxu0 0.0
        %4933 = vmatpush1.msra.mxu0 0.0
        %4934 = vmatprep.subr.mxu0 0.0
        %4935 = vmatpush1.msra.mxu0 0.0
        %4936 = vmatprep.subr.mxu0 0.0
        %4937 = vmatpush1.msra.mxu0 0.0
        %4938 = vmatprep.mubr.f32.mxu0 0.0
        %4939 = vmatmul.mubr.f32.gmra.mrb[0].mxu0 %v4638
        %v4940 = vpop.f32.mrb[0].mxu0
        %v4941 = vadd.f32 %v4630, %v4940
        %v4942 = vpop.f32.mrb[0].mxu0
        %v4943 = vadd.f32 %v4630, %v4942
        %4944 = vmatprep.mubr.f32.mxu0 0.0
        %4945 = vmatmul.mubr.f32.gmra.mrb[0].mxu0 %v4641
        %v4946 = vpop.f32.mrb[0].mxu0
        %v4947 = vadd.f32 %v4635, %v4946
        %v4948 = vpop.f32.mrb[0].mxu0
        %v4949 = vadd.f32 %v4635, %v4948
        %4950 = vdwg.mxu0
        %4951 = vmatprep.subr.mxu0 %v4598
        %4952 = vmatpush1.msra.mxu0 %v4597
        %4953 = vmatprep.subr.mxu0 %v4614
        %4954 = vmatpush1.msra.mxu0 %v4613
        %4955 = vmatprep.subr.mxu0 0.0
        %4956 = vmatpush1.msra.mxu0 0.0
        %4957 = vmatprep.subr.mxu0 0.0
        %4958 = vmatpush1.msra.mxu0 0.0
        %4959 = vmatprep.subr.mxu0 0.0
        %4960 = vmatpush1.msra.mxu0 0.0
        %4961 = vmatprep.subr.mxu0 0.0
        %4962 = vmatpush1.msra.mxu0 0.0
        %4963 = vmatprep.subr.mxu0 0.0
        %4964 = vmatpush1.msra.mxu0 0.0
        %4965 = vmatprep.subr.mxu0 0.0
        %4966 = vmatpush1.msra.mxu0 0.0
        %4967 = vmatprep.subr.mxu0 0.0
        %4968 = vmatpush1.msra.mxu0 0.0
        %4969 = vmatprep.subr.mxu0 0.0
        %4970 = vmatpush1.msra.mxu0 0.0
        %4971 = vmatprep.subr.mxu0 0.0
        %4972 = vmatpush1.msra.mxu0 0.0
        %4973 = vmatprep.subr.mxu0 0.0
        %4974 = vmatpush1.msra.mxu0 0.0
        %4975 = vmatprep.subr.mxu0 0.0
        %4976 = vmatpush1.msra.mxu0 0.0
        %4977 = vmatprep.subr.mxu0 0.0
        %4978 = vmatpush1.msra.mxu0 0.0
        %4979 = vmatprep.subr.mxu0 0.0
        %4980 = vmatpush1.msra.mxu0 0.0
        %4981 = vmatprep.subr.mxu0 0.0
        %4982 = vmatpush1.msra.mxu0 0.0
        %4983 = vmatprep.subr.mxu0 0.0
        %4984 = vmatpush1.msra.mxu0 0.0
        %4985 = vmatprep.subr.mxu0 0.0
        %4986 = vmatpush1.msra.mxu0 0.0
        %4987 = vmatprep.subr.mxu0 0.0
        %4988 = vmatpush1.msra.mxu0 0.0
        %4989 = vmatprep.subr.mxu0 0.0
        %4990 = vmatpush1.msra.mxu0 0.0
        %4991 = vmatprep.subr.mxu0 0.0
        %4992 = vmatpush1.msra.mxu0 0.0
        %4993 = vmatprep.subr.mxu0 0.0
        %4994 = vmatpush1.msra.mxu0 0.0
        %4995 = vmatprep.subr.mxu0 0.0
        %4996 = vmatpush1.msra.mxu0 0.0
        %4997 = vmatprep.subr.mxu0 0.0
        %4998 = vmatpush1.msra.mxu0 0.0
        %4999 = vmatprep.subr.mxu0 0.0
        %5000 = vmatpush1.msra.mxu0 0.0
        %5001 = vmatprep.subr.mxu0 0.0
        %5002 = vmatpush1.msra.mxu0 0.0
        %5003 = vmatprep.subr.mxu0 0.0
        %5004 = vmatpush1.msra.mxu0 0.0
        %5005 = vmatprep.subr.mxu0 0.0
        %5006 = vmatpush1.msra.mxu0 0.0
        %5007 = vmatprep.subr.mxu0 0.0
        %5008 = vmatpush1.msra.mxu0 0.0
        %5009 = vmatprep.subr.mxu0 0.0
        %5010 = vmatpush1.msra.mxu0 0.0
        %5011 = vmatprep.subr.mxu0 0.0
        %5012 = vmatpush1.msra.mxu0 0.0
        %5013 = vmatprep.subr.mxu0 0.0
        %5014 = vmatpush1.msra.mxu0 0.0
        %5015 = vmatprep.mubr.f32.mxu0 0.0
        %5016 = vmatmul.mubr.f32.gmra.mrb[0].mxu0 %v4638
        %v5017 = vpop.f32.mrb[0].mxu0
        %v5018 = vadd.f32 %v4630, %v5017
        %v5019 = vpop.f32.mrb[0].mxu0
        %v5020 = vadd.f32 %v4630, %v5019
        %5021 = vmatprep.mubr.f32.mxu0 0.0
        %5022 = vmatmul.mubr.f32.gmra.mrb[0].mxu0 %v4641
        %v5023 = vpop.f32.mrb[0].mxu0
        %v5024 = vadd.f32 %v4635, %v5023
        %v5025 = vpop.f32.mrb[0].mxu0
        %v5026 = vadd.f32 %v4635, %v5025
        %5027 = vdwg.mxu0
        %5028 = vmatprep.subr.mxu0 %v4600
        %5029 = vmatpush1.msra.mxu0 %v4599
        %5030 = vmatprep.subr.mxu0 %v4616
        %5031 = vmatpush1.msra.mxu0 %v4615
        %5032 = vmatprep.subr.mxu0 0.0
        %5033 = vmatpush1.msra.mxu0 0.0
        %5034 = vmatprep.subr.mxu0 0.0
        %5035 = vmatpush1.msra.mxu0 0.0
        %5036 = vmatprep.subr.mxu0 0.0
        %5037 = vmatpush1.msra.mxu0 0.0
        %5038 = vmatprep.subr.mxu0 0.0
        %5039 = vmatpush1.msra.mxu0 0.0
        %5040 = vmatprep.subr.mxu0 0.0
        %5041 = vmatpush1.msra.mxu0 0.0
        %5042 = vmatprep.subr.mxu0 0.0
        %5043 = vmatpush1.msra.mxu0 0.0
        %5044 = vmatprep.subr.mxu0 0.0
        %5045 = vmatpush1.msra.mxu0 0.0
        %5046 = vmatprep.subr.mxu0 0.0
        %5047 = vmatpush1.msra.mxu0 0.0
        %5048 = vmatprep.subr.mxu0 0.0
        %5049 = vmatpush1.msra.mxu0 0.0
        %5050 = vmatprep.subr.mxu0 0.0
        %5051 = vmatpush1.msra.mxu0 0.0
        %5052 = vmatprep.subr.mxu0 0.0
        %5053 = vmatpush1.msra.mxu0 0.0
        %5054 = vmatprep.subr.mxu0 0.0
        %5055 = vmatpush1.msra.mxu0 0.0
        %5056 = vmatprep.subr.mxu0 0.0
        %5057 = vmatpush1.msra.mxu0 0.0
        %5058 = vmatprep.subr.mxu0 0.0
        %5059 = vmatpush1.msra.mxu0 0.0
        %5060 = vmatprep.subr.mxu0 0.0
        %5061 = vmatpush1.msra.mxu0 0.0
        %5062 = vmatprep.subr.mxu0 0.0
        %5063 = vmatpush1.msra.mxu0 0.0
        %5064 = vmatprep.subr.mxu0 0.0
        %5065 = vmatpush1.msra.mxu0 0.0
        %5066 = vmatprep.subr.mxu0 0.0
        %5067 = vmatpush1.msra.mxu0 0.0
        %5068 = vmatprep.subr.mxu0 0.0
        %5069 = vmatpush1.msra.mxu0 0.0
        %5070 = vmatprep.subr.mxu0 0.0
        %5071 = vmatpush1.msra.mxu0 0.0
        %5072 = vmatprep.subr.mxu0 0.0
        %5073 = vmatpush1.msra.mxu0 0.0
        %5074 = vmatprep.subr.mxu0 0.0
        %5075 = vmatpush1.msra.mxu0 0.0
        %5076 = vmatprep.subr.mxu0 0.0
        %5077 = vmatpush1.msra.mxu0 0.0
        %5078 = vmatprep.subr.mxu0 0.0
        %5079 = vmatpush1.msra.mxu0 0.0
        %5080 = vmatprep.subr.mxu0 0.0
        %5081 = vmatpush1.msra.mxu0 0.0
        %5082 = vmatprep.subr.mxu0 0.0
        %5083 = vmatpush1.msra.mxu0 0.0
        %5084 = vmatprep.subr.mxu0 0.0
        %5085 = vmatpush1.msra.mxu0 0.0
        %5086 = vmatprep.subr.mxu0 0.0
        %5087 = vmatpush1.msra.mxu0 0.0
        %5088 = vmatprep.subr.mxu0 0.0
        %5089 = vmatpush1.msra.mxu0 0.0
        %5090 = vmatprep.subr.mxu0 0.0
        %5091 = vmatpush1.msra.mxu0 0.0
        %5092 = vmatprep.mubr.f32.mxu0 0.0
        %5093 = vmatmul.mubr.f32.gmra.mrb[0].mxu0 %v4638
        %v5094 = vpop.f32.mrb[0].mxu0
        %v5095 = vadd.f32 %v4630, %v5094
        %v5096 = vpop.f32.mrb[0].mxu0
        %v5097 = vadd.f32 %v4630, %v5096
        %5098 = vmatprep.mubr.f32.mxu0 0.0
        %5099 = vmatmul.mubr.f32.gmra.mrb[0].mxu0 %v4641
        %v5100 = vpop.f32.mrb[0].mxu0
        %v5101 = vadd.f32 %v4635, %v5100
        %v5102 = vpop.f32.mrb[0].mxu0
        %v5103 = vadd.f32 %v4635, %v5102
        %5104 = vdwg.mxu0
        %5105 = vmatprep.subr.mxu0 %v4602
        %5106 = vmatpush1.msra.mxu0 %v4601
        %5107 = vmatprep.subr.mxu0 %v4618
        %5108 = vmatpush1.msra.mxu0 %v4617
        %5109 = vmatprep.subr.mxu0 0.0
        %5110 = vmatpush1.msra.mxu0 0.0
        %5111 = vmatprep.subr.mxu0 0.0
        %5112 = vmatpush1.msra.mxu0 0.0
        %5113 = vmatprep.subr.mxu0 0.0
        %5114 = vmatpush1.msra.mxu0 0.0
        %5115 = vmatprep.subr.mxu0 0.0
        %5116 = vmatpush1.msra.mxu0 0.0
        %5117 = vmatprep.subr.mxu0 0.0
        %5118 = vmatpush1.msra.mxu0 0.0
        %5119 = vmatprep.subr.mxu0 0.0
        %5120 = vmatpush1.msra.mxu0 0.0
        %5121 = vmatprep.subr.mxu0 0.0
        %5122 = vmatpush1.msra.mxu0 0.0
        %5123 = vmatprep.subr.mxu0 0.0
        %5124 = vmatpush1.msra.mxu0 0.0
        %5125 = vmatprep.subr.mxu0 0.0
        %5126 = vmatpush1.msra.mxu0 0.0
        %5127 = vmatprep.subr.mxu0 0.0
        %5128 = vmatpush1.msra.mxu0 0.0
        %5129 = vmatprep.subr.mxu0 0.0
        %5130 = vmatpush1.msra.mxu0 0.0
        %5131 = vmatprep.subr.mxu0 0.0
        %5132 = vmatpush1.msra.mxu0 0.0
        %5133 = vmatprep.subr.mxu0 0.0
        %5134 = vmatpush1.msra.mxu0 0.0
        %5135 = vmatprep.subr.mxu0 0.0
        %5136 = vmatpush1.msra.mxu0 0.0
        %5137 = vmatprep.subr.mxu0 0.0
        %5138 = vmatpush1.msra.mxu0 0.0
        %5139 = vmatprep.subr.mxu0 0.0
        %5140 = vmatpush1.msra.mxu0 0.0
        %5141 = vmatprep.subr.mxu0 0.0
        %5142 = vmatpush1.msra.mxu0 0.0
        %5143 = vmatprep.subr.mxu0 0.0
        %5144 = vmatpush1.msra.mxu0 0.0
        %5145 = vmatprep.subr.mxu0 0.0
        %5146 = vmatpush1.msra.mxu0 0.0
        %5147 = vmatprep.subr.mxu0 0.0
        %5148 = vmatpush1.msra.mxu0 0.0
        %5149 = vmatprep.subr.mxu0 0.0
        %5150 = vmatpush1.msra.mxu0 0.0
        %5151 = vmatprep.subr.mxu0 0.0
        %5152 = vmatpush1.msra.mxu0 0.0
        %5153 = vmatprep.subr.mxu0 0.0
        %5154 = vmatpush1.msra.mxu0 0.0
        %5155 = vmatprep.subr.mxu0 0.0
        %5156 = vmatpush1.msra.mxu0 0.0
        %5157 = vmatprep.subr.mxu0 0.0
        %5158 = vmatpush1.msra.mxu0 0.0
        %5159 = vmatprep.subr.mxu0 0.0
        %5160 = vmatpush1.msra.mxu0 0.0
        %5161 = vmatprep.subr.mxu0 0.0
        %5162 = vmatpush1.msra.mxu0 0.0
        %5163 = vmatprep.subr.mxu0 0.0
        %5164 = vmatpush1.msra.mxu0 0.0
        %5165 = vmatprep.subr.mxu0 0.0
        %5166 = vmatpush1.msra.mxu0 0.0
        %5167 = vmatprep.subr.mxu0 0.0
        %5168 = vmatpush1.msra.mxu0 0.0
        %5169 = vmatprep.mubr.f32.mxu0 0.0
        %5170 = vmatmul.mubr.f32.gmra.mrb[0].mxu0 %v4638
        %v5171 = vpop.f32.mrb[0].mxu0
        %v5172 = vadd.f32 %v4630, %v5171
        %v5173 = vpop.f32.mrb[0].mxu0
        %v5174 = vadd.f32 %v4630, %v5173
        %5175 = vmatprep.mubr.f32.mxu0 0.0
        %5176 = vmatmul.mubr.f32.gmra.mrb[0].mxu0 %v4641
        %v5177 = vpop.f32.mrb[0].mxu0
        %v5178 = vadd.f32 %v4635, %v5177
        %v5179 = vpop.f32.mrb[0].mxu0
        %v5180 = vadd.f32 %v4635, %v5179
        %5181 = vdwg.mxu0
        %5182 = vmatprep.subr.mxu0 %v4604
        %5183 = vmatpush1.msra.mxu0 %v4603
        %5184 = vmatprep.subr.mxu0 %v4620
        %5185 = vmatpush1.msra.mxu0 %v4619
        %5186 = vmatprep.subr.mxu0 0.0
        %5187 = vmatpush1.msra.mxu0 0.0
        %5188 = vmatprep.subr.mxu0 0.0
        %5189 = vmatpush1.msra.mxu0 0.0
        %5190 = vmatprep.subr.mxu0 0.0
        %5191 = vmatpush1.msra.mxu0 0.0
        %5192 = vmatprep.subr.mxu0 0.0
        %5193 = vmatpush1.msra.mxu0 0.0
        %5194 = vmatprep.subr.mxu0 0.0
        %5195 = vmatpush1.msra.mxu0 0.0
        %5196 = vmatprep.subr.mxu0 0.0
        %5197 = vmatpush1.msra.mxu0 0.0
        %5198 = vmatprep.subr.mxu0 0.0
        %5199 = vmatpush1.msra.mxu0 0.0
        %5200 = vmatprep.subr.mxu0 0.0
        %5201 = vmatpush1.msra.mxu0 0.0
        %5202 = vmatprep.subr.mxu0 0.0
        %5203 = vmatpush1.msra.mxu0 0.0
        %5204 = vmatprep.subr.mxu0 0.0
        %5205 = vmatpush1.msra.mxu0 0.0
        %5206 = vmatprep.subr.mxu0 0.0
        %5207 = vmatpush1.msra.mxu0 0.0
        %5208 = vmatprep.subr.mxu0 0.0
        %5209 = vmatpush1.msra.mxu0 0.0
        %5210 = vmatprep.subr.mxu0 0.0
        %5211 = vmatpush1.msra.mxu0 0.0
        %5212 = vmatprep.subr.mxu0 0.0
        %5213 = vmatpush1.msra.mxu0 0.0
        %5214 = vmatprep.subr.mxu0 0.0
        %5215 = vmatpush1.msra.mxu0 0.0
        %5216 = vmatprep.subr.mxu0 0.0
        %5217 = vmatpush1.msra.mxu0 0.0
        %5218 = vmatprep.subr.mxu0 0.0
        %5219 = vmatpush1.msra.mxu0 0.0
        %5220 = vmatprep.subr.mxu0 0.0
        %5221 = vmatpush1.msra.mxu0 0.0
        %5222 = vmatprep.subr.mxu0 0.0
        %5223 = vmatpush1.msra.mxu0 0.0
        %5224 = vmatprep.subr.mxu0 0.0
        %5225 = vmatpush1.msra.mxu0 0.0
        %5226 = vmatprep.subr.mxu0 0.0
        %5227 = vmatpush1.msra.mxu0 0.0
        %5228 = vmatprep.subr.mxu0 0.0
        %5229 = vmatpush1.msra.mxu0 0.0
        %5230 = vmatprep.subr.mxu0 0.0
        %5231 = vmatpush1.msra.mxu0 0.0
        %5232 = vmatprep.subr.mxu0 0.0
        %5233 = vmatpush1.msra.mxu0 0.0
        %5234 = vmatprep.subr.mxu0 0.0
        %5235 = vmatpush1.msra.mxu0 0.0
        %5236 = vmatprep.subr.mxu0 0.0
        %5237 = vmatpush1.msra.mxu0 0.0
        %5238 = vmatprep.subr.mxu0 0.0
        %5239 = vmatpush1.msra.mxu0 0.0
        %5240 = vmatprep.subr.mxu0 0.0
        %5241 = vmatpush1.msra.mxu0 0.0
        %5242 = vmatprep.subr.mxu0 0.0
        %5243 = vmatpush1.msra.mxu0 0.0
        %5244 = vmatprep.subr.mxu0 0.0
        %5245 = vmatpush1.msra.mxu0 0.0
        %5246 = vmatprep.mubr.f32.mxu0 0.0
        %5247 = vmatmul.mubr.f32.gmra.mrb[0].mxu0 %v4638
        %v5248 = vpop.f32.mrb[0].mxu0
        %v5249 = vadd.f32 %v4630, %v5248
        %v5250 = vpop.f32.mrb[0].mxu0
        %v5251 = vadd.f32 %v4630, %v5250
        %5252 = vmatprep.mubr.f32.mxu0 0.0
        %5253 = vmatmul.mubr.f32.gmra.mrb[0].mxu0 %v4641
        %v5254 = vpop.f32.mrb[0].mxu0
        %v5255 = vadd.f32 %v4635, %v5254
        %v5256 = vpop.f32.mrb[0].mxu0
        %v5257 = vadd.f32 %v4635, %v5256
        %5258 = vdwg.mxu0
        %s5259 = scalar_lea.vmem %s3, 96
        %v5260 = vld [vmem:[%s5259] sm:$0xff]
        %v5261 = vld [vmem:[%s5259 + $0x8] sm:$0xff]
        %vm5262 = vcmp.ge.f32.partialorder %v4710, 0.0
        %vm5263 = vcmp.ge.f32.partialorder %v4712, 0.0
        %vm5264 = vcmp.ge.f32.partialorder %v4787, 0.0
        %vm5265 = vcmp.ge.f32.partialorder %v4789, 0.0
        %vm5266 = vcmp.ge.f32.partialorder %v4864, 0.0
        %vm5267 = vcmp.ge.f32.partialorder %v4866, 0.0
        %vm5268 = vcmp.ge.f32.partialorder %v4941, 0.0
        %vm5269 = vcmp.ge.f32.partialorder %v4943, 0.0
        %vm5270 = vcmp.ge.f32.partialorder %v5018, 0.0
        %vm5271 = vcmp.ge.f32.partialorder %v5020, 0.0
        %vm5272 = vcmp.ge.f32.partialorder %v5095, 0.0
        %vm5273 = vcmp.ge.f32.partialorder %v5097, 0.0
        %vm5274 = vcmp.ge.f32.partialorder %v5172, 0.0
        %vm5275 = vcmp.ge.f32.partialorder %v5174, 0.0
        %vm5276 = vcmp.ge.f32.partialorder %v5249, 0.0
        %vm5277 = vcmp.ge.f32.partialorder %v5251, 0.0
        %vm5278 = vcmp.ge.f32.partialorder %v4716, 0.0
        %vm5279 = vcmp.ge.f32.partialorder %v4718, 0.0
        %vm5280 = vcmp.ge.f32.partialorder %v4793, 0.0
        %vm5281 = vcmp.ge.f32.partialorder %v4795, 0.0
        %vm5282 = vcmp.ge.f32.partialorder %v4870, 0.0
        %vm5283 = vcmp.ge.f32.partialorder %v4872, 0.0
        %vm5284 = vcmp.ge.f32.partialorder %v4947, 0.0
        %vm5285 = vcmp.ge.f32.partialorder %v4949, 0.0
        %vm5286 = vcmp.ge.f32.partialorder %v5024, 0.0
        %vm5287 = vcmp.ge.f32.partialorder %v5026, 0.0
        %vm5288 = vcmp.ge.f32.partialorder %v5101, 0.0
        %vm5289 = vcmp.ge.f32.partialorder %v5103, 0.0
        %vm5290 = vcmp.ge.f32.partialorder %v5178, 0.0
        %vm5291 = vcmp.ge.f32.partialorder %v5180, 0.0
        %vm5292 = vcmp.ge.f32.partialorder %v5255, 0.0
        %vm5293 = vcmp.ge.f32.partialorder %v5257, 0.0
        %5295 = vset.pattern.permute.xlu0 0
        %5296 = vperm.xlu0 %5295, %v5260
        %v5297 = vpop.permute.xlu0 %5296
        %5300 = vset.pattern.permute.xlu0 0
        %5301 = vperm.xlu0 %5300, %v5261
        %v5302 = vpop.permute.xlu0 %5301
        %v5304 = vmul.f32 %v5297, %v4710
        %v5305 = vmul.f32 %v5297, %v4712
        %v5306 = vmul.f32 %v5297, %v4787
        %v5307 = vmul.f32 %v5297, %v4789
        %v5308 = vmul.f32 %v5297, %v4864
        %v5309 = vmul.f32 %v5297, %v4866
        %v5310 = vmul.f32 %v5297, %v4941
        %v5311 = vmul.f32 %v5297, %v4943
        %v5312 = vmul.f32 %v5297, %v5018
        %v5313 = vmul.f32 %v5297, %v5020
        %v5314 = vmul.f32 %v5297, %v5095
        %v5315 = vmul.f32 %v5297, %v5097
        %v5316 = vmul.f32 %v5297, %v5172
        %v5317 = vmul.f32 %v5297, %v5174
        %v5318 = vmul.f32 %v5297, %v5249
        %v5319 = vmul.f32 %v5297, %v5251
        %v5320 = vmul.f32 %v5302, %v4716
        %v5321 = vmul.f32 %v5302, %v4718
        %v5322 = vmul.f32 %v5302, %v4793
        %v5323 = vmul.f32 %v5302, %v4795
        %v5324 = vmul.f32 %v5302, %v4870
        %v5325 = vmul.f32 %v5302, %v4872
        %v5326 = vmul.f32 %v5302, %v4947
        %v5327 = vmul.f32 %v5302, %v4949
        %v5328 = vmul.f32 %v5302, %v5024
        %v5329 = vmul.f32 %v5302, %v5026
        %v5330 = vmul.f32 %v5302, %v5101
        %v5331 = vmul.f32 %v5302, %v5103
        %v5332 = vmul.f32 %v5302, %v5178
        %v5333 = vmul.f32 %v5302, %v5180
        %v5334 = vmul.f32 %v5302, %v5255
        %v5335 = vmul.f32 %v5302, %v5257
        %v5336 = vsel %vm5262, %v4710, %v5304
        %v5337 = vsel %vm5263, %v4712, %v5305
        %v5338 = vsel %vm5264, %v4787, %v5306
        %v5339 = vsel %vm5265, %v4789, %v5307
        %v5340 = vsel %vm5266, %v4864, %v5308
        %v5341 = vsel %vm5267, %v4866, %v5309
        %v5342 = vsel %vm5268, %v4941, %v5310
        %v5343 = vsel %vm5269, %v4943, %v5311
        %v5344 = vsel %vm5270, %v5018, %v5312
        %v5345 = vsel %vm5271, %v5020, %v5313
        %v5346 = vsel %vm5272, %v5095, %v5314
        %v5347 = vsel %vm5273, %v5097, %v5315
        %v5348 = vsel %vm5274, %v5172, %v5316
        %v5349 = vsel %vm5275, %v5174, %v5317
        %v5350 = vsel %vm5276, %v5249, %v5318
        %v5351 = vsel %vm5277, %v5251, %v5319
        %v5352 = vsel %vm5278, %v4716, %v5320
        %v5353 = vsel %vm5279, %v4718, %v5321
        %v5354 = vsel %vm5280, %v4793, %v5322
        %v5355 = vsel %vm5281, %v4795, %v5323
        %v5356 = vsel %vm5282, %v4870, %v5324
        %v5357 = vsel %vm5283, %v4872, %v5325
        %v5358 = vsel %vm5284, %v4947, %v5326
        %v5359 = vsel %vm5285, %v4949, %v5327
        %v5360 = vsel %vm5286, %v5024, %v5328
        %v5361 = vsel %vm5287, %v5026, %v5329
        %v5362 = vsel %vm5288, %v5101, %v5330
        %v5363 = vsel %vm5289, %v5103, %v5331
        %v5364 = vsel %vm5290, %v5178, %v5332
        %v5365 = vsel %vm5291, %v5180, %v5333
        %v5366 = vsel %vm5292, %v5255, %v5334
        %v5367 = vsel %vm5293, %v5257, %v5335
        %s5368 = scalar_lea.vmem %s1, 112
        %v5369 = vld [vmem:[%s5368] sm:$0xff]
        %v5370 = vld [vmem:[%s5368 + $0x8] sm:$0xff]
        %s5371 = scalar_lea.vmem %s2, 112
        %v5372 = vld [vmem:[%s5371] sm:$0xff]
        %v5373 = vld [vmem:[%s5371 + $0x8] sm:$0xff]
        %5375 = vset.pattern.permute.xlu0 0
        %5376 = vperm.xlu0 %5375, %v5372
        %v5377 = vpop.permute.xlu0 %5376
        %5380 = vset.pattern.permute.xlu0 0
        %5381 = vperm.xlu0 %5380, %v5373
        %v5382 = vpop.permute.xlu0 %5381
        %v5385 = vsel %vm264, %v5369, 0
        %v5388 = vsel %vm264, %v5370, 0
        %5390 = vmatprep.subr.mxu0 %v5337
        %5391 = vmatpush1.msra.mxu0 %v5336
        %5392 = vmatprep.subr.mxu0 %v5353
        %5393 = vmatpush1.msra.mxu0 %v5352
        %5394 = vmatprep.subr.mxu0 0.0
        %5395 = vmatpush1.msra.mxu0 0.0
        %5396 = vmatprep.subr.mxu0 0.0
        %5397 = vmatpush1.msra.mxu0 0.0
        %5398 = vmatprep.subr.mxu0 0.0
        %5399 = vmatpush1.msra.mxu0 0.0
        %5400 = vmatprep.subr.mxu0 0.0
        %5401 = vmatpush1.msra.mxu0 0.0
        %5402 = vmatprep.subr.mxu0 0.0
        %5403 = vmatpush1.msra.mxu0 0.0
        %5404 = vmatprep.subr.mxu0 0.0
        %5405 = vmatpush1.msra.mxu0 0.0
        %5406 = vmatprep.subr.mxu0 0.0
        %5407 = vmatpush1.msra.mxu0 0.0
        %5408 = vmatprep.subr.mxu0 0.0
        %5409 = vmatpush1.msra.mxu0 0.0
        %5410 = vmatprep.subr.mxu0 0.0
        %5411 = vmatpush1.msra.mxu0 0.0
        %5412 = vmatprep.subr.mxu0 0.0
        %5413 = vmatpush1.msra.mxu0 0.0
        %5414 = vmatprep.subr.mxu0 0.0
        %5415 = vmatpush1.msra.mxu0 0.0
        %5416 = vmatprep.subr.mxu0 0.0
        %5417 = vmatpush1.msra.mxu0 0.0
        %5418 = vmatprep.subr.mxu0 0.0
        %5419 = vmatpush1.msra.mxu0 0.0
        %5420 = vmatprep.subr.mxu0 0.0
        %5421 = vmatpush1.msra.mxu0 0.0
        %5422 = vmatprep.subr.mxu0 0.0
        %5423 = vmatpush1.msra.mxu0 0.0
        %5424 = vmatprep.subr.mxu0 0.0
        %5425 = vmatpush1.msra.mxu0 0.0
        %5426 = vmatprep.subr.mxu0 0.0
        %5427 = vmatpush1.msra.mxu0 0.0
        %5428 = vmatprep.subr.mxu0 0.0
        %5429 = vmatpush1.msra.mxu0 0.0
        %5430 = vmatprep.subr.mxu0 0.0
        %5431 = vmatpush1.msra.mxu0 0.0
        %5432 = vmatprep.subr.mxu0 0.0
        %5433 = vmatpush1.msra.mxu0 0.0
        %5434 = vmatprep.subr.mxu0 0.0
        %5435 = vmatpush1.msra.mxu0 0.0
        %5436 = vmatprep.subr.mxu0 0.0
        %5437 = vmatpush1.msra.mxu0 0.0
        %5438 = vmatprep.subr.mxu0 0.0
        %5439 = vmatpush1.msra.mxu0 0.0
        %5440 = vmatprep.subr.mxu0 0.0
        %5441 = vmatpush1.msra.mxu0 0.0
        %5442 = vmatprep.subr.mxu0 0.0
        %5443 = vmatpush1.msra.mxu0 0.0
        %5444 = vmatprep.subr.mxu0 0.0
        %5445 = vmatpush1.msra.mxu0 0.0
        %5446 = vmatprep.subr.mxu0 0.0
        %5447 = vmatpush1.msra.mxu0 0.0
        %5448 = vmatprep.subr.mxu0 0.0
        %5449 = vmatpush1.msra.mxu0 0.0
        %5450 = vmatprep.subr.mxu0 0.0
        %5451 = vmatpush1.msra.mxu0 0.0
        %5452 = vmatprep.subr.mxu0 0.0
        %5453 = vmatpush1.msra.mxu0 0.0
        %5454 = vmatprep.mubr.f32.mxu0 0.0
        %5455 = vmatmul.mubr.f32.gmra.mrb[0].mxu0 %v5385
        %v5456 = vpop.f32.mrb[0].mxu0
        %v5457 = vadd.f32 %v5377, %v5456
        %v5458 = vpop.f32.mrb[0].mxu0
        %v5459 = vadd.f32 %v5377, %v5458
        %5460 = vmatprep.mubr.f32.mxu0 0.0
        %5461 = vmatmul.mubr.f32.gmra.mrb[0].mxu0 %v5388
        %v5462 = vpop.f32.mrb[0].mxu0
        %v5463 = vadd.f32 %v5382, %v5462
        %v5464 = vpop.f32.mrb[0].mxu0
        %v5465 = vadd.f32 %v5382, %v5464
        %5466 = vdwg.mxu0
        %5467 = vmatprep.subr.mxu0 %v5339
        %5468 = vmatpush1.msra.mxu0 %v5338
        %5469 = vmatprep.subr.mxu0 %v5355
        %5470 = vmatpush1.msra.mxu0 %v5354
        %5471 = vmatprep.subr.mxu0 0.0
        %5472 = vmatpush1.msra.mxu0 0.0
        %5473 = vmatprep.subr.mxu0 0.0
        %5474 = vmatpush1.msra.mxu0 0.0
        %5475 = vmatprep.subr.mxu0 0.0
        %5476 = vmatpush1.msra.mxu0 0.0
        %5477 = vmatprep.subr.mxu0 0.0
        %5478 = vmatpush1.msra.mxu0 0.0
        %5479 = vmatprep.subr.mxu0 0.0
        %5480 = vmatpush1.msra.mxu0 0.0
        %5481 = vmatprep.subr.mxu0 0.0
        %5482 = vmatpush1.msra.mxu0 0.0
        %5483 = vmatprep.subr.mxu0 0.0
        %5484 = vmatpush1.msra.mxu0 0.0
        %5485 = vmatprep.subr.mxu0 0.0
        %5486 = vmatpush1.msra.mxu0 0.0
        %5487 = vmatprep.subr.mxu0 0.0
        %5488 = vmatpush1.msra.mxu0 0.0
        %5489 = vmatprep.subr.mxu0 0.0
        %5490 = vmatpush1.msra.mxu0 0.0
        %5491 = vmatprep.subr.mxu0 0.0
        %5492 = vmatpush1.msra.mxu0 0.0
        %5493 = vmatprep.subr.mxu0 0.0
        %5494 = vmatpush1.msra.mxu0 0.0
        %5495 = vmatprep.subr.mxu0 0.0
        %5496 = vmatpush1.msra.mxu0 0.0
        %5497 = vmatprep.subr.mxu0 0.0
        %5498 = vmatpush1.msra.mxu0 0.0
        %5499 = vmatprep.subr.mxu0 0.0
        %5500 = vmatpush1.msra.mxu0 0.0
        %5501 = vmatprep.subr.mxu0 0.0
        %5502 = vmatpush1.msra.mxu0 0.0
        %5503 = vmatprep.subr.mxu0 0.0
        %5504 = vmatpush1.msra.mxu0 0.0
        %5505 = vmatprep.subr.mxu0 0.0
        %5506 = vmatpush1.msra.mxu0 0.0
        %5507 = vmatprep.subr.mxu0 0.0
        %5508 = vmatpush1.msra.mxu0 0.0
        %5509 = vmatprep.subr.mxu0 0.0
        %5510 = vmatpush1.msra.mxu0 0.0
        %5511 = vmatprep.subr.mxu0 0.0
        %5512 = vmatpush1.msra.mxu0 0.0
        %5513 = vmatprep.subr.mxu0 0.0
        %5514 = vmatpush1.msra.mxu0 0.0
        %5515 = vmatprep.subr.mxu0 0.0
        %5516 = vmatpush1.msra.mxu0 0.0
        %5517 = vmatprep.subr.mxu0 0.0
        %5518 = vmatpush1.msra.mxu0 0.0
        %5519 = vmatprep.subr.mxu0 0.0
        %5520 = vmatpush1.msra.mxu0 0.0
        %5521 = vmatprep.subr.mxu0 0.0
        %5522 = vmatpush1.msra.mxu0 0.0
        %5523 = vmatprep.subr.mxu0 0.0
        %5524 = vmatpush1.msra.mxu0 0.0
        %5525 = vmatprep.subr.mxu0 0.0
        %5526 = vmatpush1.msra.mxu0 0.0
        %5527 = vmatprep.subr.mxu0 0.0
        %5528 = vmatpush1.msra.mxu0 0.0
        %5529 = vmatprep.subr.mxu0 0.0
        %5530 = vmatpush1.msra.mxu0 0.0
        %5531 = vmatprep.mubr.f32.mxu0 0.0
        %5532 = vmatmul.mubr.f32.gmra.mrb[0].mxu0 %v5385
        %v5533 = vpop.f32.mrb[0].mxu0
        %v5534 = vadd.f32 %v5377, %v5533
        %v5535 = vpop.f32.mrb[0].mxu0
        %v5536 = vadd.f32 %v5377, %v5535
        %5537 = vmatprep.mubr.f32.mxu0 0.0
        %5538 = vmatmul.mubr.f32.gmra.mrb[0].mxu0 %v5388
        %v5539 = vpop.f32.mrb[0].mxu0
        %v5540 = vadd.f32 %v5382, %v5539
        %v5541 = vpop.f32.mrb[0].mxu0
        %v5542 = vadd.f32 %v5382, %v5541
        %5543 = vdwg.mxu0
        %5544 = vmatprep.subr.mxu0 %v5341
        %5545 = vmatpush1.msra.mxu0 %v5340
        %5546 = vmatprep.subr.mxu0 %v5357
        %5547 = vmatpush1.msra.mxu0 %v5356
        %5548 = vmatprep.subr.mxu0 0.0
        %5549 = vmatpush1.msra.mxu0 0.0
        %5550 = vmatprep.subr.mxu0 0.0
        %5551 = vmatpush1.msra.mxu0 0.0
        %5552 = vmatprep.subr.mxu0 0.0
        %5553 = vmatpush1.msra.mxu0 0.0
        %5554 = vmatprep.subr.mxu0 0.0
        %5555 = vmatpush1.msra.mxu0 0.0
        %5556 = vmatprep.subr.mxu0 0.0
        %5557 = vmatpush1.msra.mxu0 0.0
        %5558 = vmatprep.subr.mxu0 0.0
        %5559 = vmatpush1.msra.mxu0 0.0
        %5560 = vmatprep.subr.mxu0 0.0
        %5561 = vmatpush1.msra.mxu0 0.0
        %5562 = vmatprep.subr.mxu0 0.0
        %5563 = vmatpush1.msra.mxu0 0.0
        %5564 = vmatprep.subr.mxu0 0.0
        %5565 = vmatpush1.msra.mxu0 0.0
        %5566 = vmatprep.subr.mxu0 0.0
        %5567 = vmatpush1.msra.mxu0 0.0
        %5568 = vmatprep.subr.mxu0 0.0
        %5569 = vmatpush1.msra.mxu0 0.0
        %5570 = vmatprep.subr.mxu0 0.0
        %5571 = vmatpush1.msra.mxu0 0.0
        %5572 = vmatprep.subr.mxu0 0.0
        %5573 = vmatpush1.msra.mxu0 0.0
        %5574 = vmatprep.subr.mxu0 0.0
        %5575 = vmatpush1.msra.mxu0 0.0
        %5576 = vmatprep.subr.mxu0 0.0
        %5577 = vmatpush1.msra.mxu0 0.0
        %5578 = vmatprep.subr.mxu0 0.0
        %5579 = vmatpush1.msra.mxu0 0.0
        %5580 = vmatprep.subr.mxu0 0.0
        %5581 = vmatpush1.msra.mxu0 0.0
        %5582 = vmatprep.subr.mxu0 0.0
        %5583 = vmatpush1.msra.mxu0 0.0
        %5584 = vmatprep.subr.mxu0 0.0
        %5585 = vmatpush1.msra.mxu0 0.0
        %5586 = vmatprep.subr.mxu0 0.0
        %5587 = vmatpush1.msra.mxu0 0.0
        %5588 = vmatprep.subr.mxu0 0.0
        %5589 = vmatpush1.msra.mxu0 0.0
        %5590 = vmatprep.subr.mxu0 0.0
        %5591 = vmatpush1.msra.mxu0 0.0
        %5592 = vmatprep.subr.mxu0 0.0
        %5593 = vmatpush1.msra.mxu0 0.0
        %5594 = vmatprep.subr.mxu0 0.0
        %5595 = vmatpush1.msra.mxu0 0.0
        %5596 = vmatprep.subr.mxu0 0.0
        %5597 = vmatpush1.msra.mxu0 0.0
        %5598 = vmatprep.subr.mxu0 0.0
        %5599 = vmatpush1.msra.mxu0 0.0
        %5600 = vmatprep.subr.mxu0 0.0
        %5601 = vmatpush1.msra.mxu0 0.0
        %5602 = vmatprep.subr.mxu0 0.0
        %5603 = vmatpush1.msra.mxu0 0.0
        %5604 = vmatprep.subr.mxu0 0.0
        %5605 = vmatpush1.msra.mxu0 0.0
        %5606 = vmatprep.subr.mxu0 0.0
        %5607 = vmatpush1.msra.mxu0 0.0
        %5608 = vmatprep.mubr.f32.mxu0 0.0
        %5609 = vmatmul.mubr.f32.gmra.mrb[0].mxu0 %v5385
        %v5610 = vpop.f32.mrb[0].mxu0
        %v5611 = vadd.f32 %v5377, %v5610
        %v5612 = vpop.f32.mrb[0].mxu0
        %v5613 = vadd.f32 %v5377, %v5612
        %5614 = vmatprep.mubr.f32.mxu0 0.0
        %5615 = vmatmul.mubr.f32.gmra.mrb[0].mxu0 %v5388
        %v5616 = vpop.f32.mrb[0].mxu0
        %v5617 = vadd.f32 %v5382, %v5616
        %v5618 = vpop.f32.mrb[0].mxu0
        %v5619 = vadd.f32 %v5382, %v5618
        %5620 = vdwg.mxu0
        %5621 = vmatprep.subr.mxu0 %v5343
        %5622 = vmatpush1.msra.mxu0 %v5342
        %5623 = vmatprep.subr.mxu0 %v5359
        %5624 = vmatpush1.msra.mxu0 %v5358
        %5625 = vmatprep.subr.mxu0 0.0
        %5626 = vmatpush1.msra.mxu0 0.0
        %5627 = vmatprep.subr.mxu0 0.0
        %5628 = vmatpush1.msra.mxu0 0.0
        %5629 = vmatprep.subr.mxu0 0.0
        %5630 = vmatpush1.msra.mxu0 0.0
        %5631 = vmatprep.subr.mxu0 0.0
        %5632 = vmatpush1.msra.mxu0 0.0
        %5633 = vmatprep.subr.mxu0 0.0
        %5634 = vmatpush1.msra.mxu0 0.0
        %5635 = vmatprep.subr.mxu0 0.0
        %5636 = vmatpush1.msra.mxu0 0.0
        %5637 = vmatprep.subr.mxu0 0.0
        %5638 = vmatpush1.msra.mxu0 0.0
        %5639 = vmatprep.subr.mxu0 0.0
        %5640 = vmatpush1.msra.mxu0 0.0
        %5641 = vmatprep.subr.mxu0 0.0
        %5642 = vmatpush1.msra.mxu0 0.0
        %5643 = vmatprep.subr.mxu0 0.0
        %5644 = vmatpush1.msra.mxu0 0.0
        %5645 = vmatprep.subr.mxu0 0.0
        %5646 = vmatpush1.msra.mxu0 0.0
        %5647 = vmatprep.subr.mxu0 0.0
        %5648 = vmatpush1.msra.mxu0 0.0
        %5649 = vmatprep.subr.mxu0 0.0
        %5650 = vmatpush1.msra.mxu0 0.0
        %5651 = vmatprep.subr.mxu0 0.0
        %5652 = vmatpush1.msra.mxu0 0.0
        %5653 = vmatprep.subr.mxu0 0.0
        %5654 = vmatpush1.msra.mxu0 0.0
        %5655 = vmatprep.subr.mxu0 0.0
        %5656 = vmatpush1.msra.mxu0 0.0
        %5657 = vmatprep.subr.mxu0 0.0
        %5658 = vmatpush1.msra.mxu0 0.0
        %5659 = vmatprep.subr.mxu0 0.0
        %5660 = vmatpush1.msra.mxu0 0.0
        %5661 = vmatprep.subr.mxu0 0.0
        %5662 = vmatpush1.msra.mxu0 0.0
        %5663 = vmatprep.subr.mxu0 0.0
        %5664 = vmatpush1.msra.mxu0 0.0
        %5665 = vmatprep.subr.mxu0 0.0
        %5666 = vmatpush1.msra.mxu0 0.0
        %5667 = vmatprep.subr.mxu0 0.0
        %5668 = vmatpush1.msra.mxu0 0.0
        %5669 = vmatprep.subr.mxu0 0.0
        %5670 = vmatpush1.msra.mxu0 0.0
        %5671 = vmatprep.subr.mxu0 0.0
        %5672 = vmatpush1.msra.mxu0 0.0
        %5673 = vmatprep.subr.mxu0 0.0
        %5674 = vmatpush1.msra.mxu0 0.0
        %5675 = vmatprep.subr.mxu0 0.0
        %5676 = vmatpush1.msra.mxu0 0.0
        %5677 = vmatprep.subr.mxu0 0.0
        %5678 = vmatpush1.msra.mxu0 0.0
        %5679 = vmatprep.subr.mxu0 0.0
        %5680 = vmatpush1.msra.mxu0 0.0
        %5681 = vmatprep.subr.mxu0 0.0
        %5682 = vmatpush1.msra.mxu0 0.0
        %5683 = vmatprep.subr.mxu0 0.0
        %5684 = vmatpush1.msra.mxu0 0.0
        %5685 = vmatprep.mubr.f32.mxu0 0.0
        %5686 = vmatmul.mubr.f32.gmra.mrb[0].mxu0 %v5385
        %v5687 = vpop.f32.mrb[0].mxu0
        %v5688 = vadd.f32 %v5377, %v5687
        %v5689 = vpop.f32.mrb[0].mxu0
        %v5690 = vadd.f32 %v5377, %v5689
        %5691 = vmatprep.mubr.f32.mxu0 0.0
        %5692 = vmatmul.mubr.f32.gmra.mrb[0].mxu0 %v5388
        %v5693 = vpop.f32.mrb[0].mxu0
        %v5694 = vadd.f32 %v5382, %v5693
        %v5695 = vpop.f32.mrb[0].mxu0
        %v5696 = vadd.f32 %v5382, %v5695
        %5697 = vdwg.mxu0
        %5698 = vmatprep.subr.mxu0 %v5345
        %5699 = vmatpush1.msra.mxu0 %v5344
        %5700 = vmatprep.subr.mxu0 %v5361
        %5701 = vmatpush1.msra.mxu0 %v5360
        %5702 = vmatprep.subr.mxu0 0.0
        %5703 = vmatpush1.msra.mxu0 0.0
        %5704 = vmatprep.subr.mxu0 0.0
        %5705 = vmatpush1.msra.mxu0 0.0
        %5706 = vmatprep.subr.mxu0 0.0
        %5707 = vmatpush1.msra.mxu0 0.0
        %5708 = vmatprep.subr.mxu0 0.0
        %5709 = vmatpush1.msra.mxu0 0.0
        %5710 = vmatprep.subr.mxu0 0.0
        %5711 = vmatpush1.msra.mxu0 0.0
        %5712 = vmatprep.subr.mxu0 0.0
        %5713 = vmatpush1.msra.mxu0 0.0
        %5714 = vmatprep.subr.mxu0 0.0
        %5715 = vmatpush1.msra.mxu0 0.0
        %5716 = vmatprep.subr.mxu0 0.0
        %5717 = vmatpush1.msra.mxu0 0.0
        %5718 = vmatprep.subr.mxu0 0.0
        %5719 = vmatpush1.msra.mxu0 0.0
        %5720 = vmatprep.subr.mxu0 0.0
        %5721 = vmatpush1.msra.mxu0 0.0
        %5722 = vmatprep.subr.mxu0 0.0
        %5723 = vmatpush1.msra.mxu0 0.0
        %5724 = vmatprep.subr.mxu0 0.0
        %5725 = vmatpush1.msra.mxu0 0.0
        %5726 = vmatprep.subr.mxu0 0.0
        %5727 = vmatpush1.msra.mxu0 0.0
        %5728 = vmatprep.subr.mxu0 0.0
        %5729 = vmatpush1.msra.mxu0 0.0
        %5730 = vmatprep.subr.mxu0 0.0
        %5731 = vmatpush1.msra.mxu0 0.0
        %5732 = vmatprep.subr.mxu0 0.0
        %5733 = vmatpush1.msra.mxu0 0.0
        %5734 = vmatprep.subr.mxu0 0.0
        %5735 = vmatpush1.msra.mxu0 0.0
        %5736 = vmatprep.subr.mxu0 0.0
        %5737 = vmatpush1.msra.mxu0 0.0
        %5738 = vmatprep.subr.mxu0 0.0
        %5739 = vmatpush1.msra.mxu0 0.0
        %5740 = vmatprep.subr.mxu0 0.0
        %5741 = vmatpush1.msra.mxu0 0.0
        %5742 = vmatprep.subr.mxu0 0.0
        %5743 = vmatpush1.msra.mxu0 0.0
        %5744 = vmatprep.subr.mxu0 0.0
        %5745 = vmatpush1.msra.mxu0 0.0
        %5746 = vmatprep.subr.mxu0 0.0
        %5747 = vmatpush1.msra.mxu0 0.0
        %5748 = vmatprep.subr.mxu0 0.0
        %5749 = vmatpush1.msra.mxu0 0.0
        %5750 = vmatprep.subr.mxu0 0.0
        %5751 = vmatpush1.msra.mxu0 0.0
        %5752 = vmatprep.subr.mxu0 0.0
        %5753 = vmatpush1.msra.mxu0 0.0
        %5754 = vmatprep.subr.mxu0 0.0
        %5755 = vmatpush1.msra.mxu0 0.0
        %5756 = vmatprep.subr.mxu0 0.0
        %5757 = vmatpush1.msra.mxu0 0.0
        %5758 = vmatprep.subr.mxu0 0.0
        %5759 = vmatpush1.msra.mxu0 0.0
        %5760 = vmatprep.subr.mxu0 0.0
        %5761 = vmatpush1.msra.mxu0 0.0
        %5762 = vmatprep.mubr.f32.mxu0 0.0
        %5763 = vmatmul.mubr.f32.gmra.mrb[0].mxu0 %v5385
        %v5764 = vpop.f32.mrb[0].mxu0
        %v5765 = vadd.f32 %v5377, %v5764
        %v5766 = vpop.f32.mrb[0].mxu0
        %v5767 = vadd.f32 %v5377, %v5766
        %5768 = vmatprep.mubr.f32.mxu0 0.0
        %5769 = vmatmul.mubr.f32.gmra.mrb[0].mxu0 %v5388
        %v5770 = vpop.f32.mrb[0].mxu0
        %v5771 = vadd.f32 %v5382, %v5770
        %v5772 = vpop.f32.mrb[0].mxu0
        %v5773 = vadd.f32 %v5382, %v5772
        %5774 = vdwg.mxu0
        %5775 = vmatprep.subr.mxu0 %v5347
        %5776 = vmatpush1.msra.mxu0 %v5346
        %5777 = vmatprep.subr.mxu0 %v5363
        %5778 = vmatpush1.msra.mxu0 %v5362
        %5779 = vmatprep.subr.mxu0 0.0
        %5780 = vmatpush1.msra.mxu0 0.0
        %5781 = vmatprep.subr.mxu0 0.0
        %5782 = vmatpush1.msra.mxu0 0.0
        %5783 = vmatprep.subr.mxu0 0.0
        %5784 = vmatpush1.msra.mxu0 0.0
        %5785 = vmatprep.subr.mxu0 0.0
        %5786 = vmatpush1.msra.mxu0 0.0
        %5787 = vmatprep.subr.mxu0 0.0
        %5788 = vmatpush1.msra.mxu0 0.0
        %5789 = vmatprep.subr.mxu0 0.0
        %5790 = vmatpush1.msra.mxu0 0.0
        %5791 = vmatprep.subr.mxu0 0.0
        %5792 = vmatpush1.msra.mxu0 0.0
        %5793 = vmatprep.subr.mxu0 0.0
        %5794 = vmatpush1.msra.mxu0 0.0
        %5795 = vmatprep.subr.mxu0 0.0
        %5796 = vmatpush1.msra.mxu0 0.0
        %5797 = vmatprep.subr.mxu0 0.0
        %5798 = vmatpush1.msra.mxu0 0.0
        %5799 = vmatprep.subr.mxu0 0.0
        %5800 = vmatpush1.msra.mxu0 0.0
        %5801 = vmatprep.subr.mxu0 0.0
        %5802 = vmatpush1.msra.mxu0 0.0
        %5803 = vmatprep.subr.mxu0 0.0
        %5804 = vmatpush1.msra.mxu0 0.0
        %5805 = vmatprep.subr.mxu0 0.0
        %5806 = vmatpush1.msra.mxu0 0.0
        %5807 = vmatprep.subr.mxu0 0.0
        %5808 = vmatpush1.msra.mxu0 0.0
        %5809 = vmatprep.subr.mxu0 0.0
        %5810 = vmatpush1.msra.mxu0 0.0
        %5811 = vmatprep.subr.mxu0 0.0
        %5812 = vmatpush1.msra.mxu0 0.0
        %5813 = vmatprep.subr.mxu0 0.0
        %5814 = vmatpush1.msra.mxu0 0.0
        %5815 = vmatprep.subr.mxu0 0.0
        %5816 = vmatpush1.msra.mxu0 0.0
        %5817 = vmatprep.subr.mxu0 0.0
        %5818 = vmatpush1.msra.mxu0 0.0
        %5819 = vmatprep.subr.mxu0 0.0
        %5820 = vmatpush1.msra.mxu0 0.0
        %5821 = vmatprep.subr.mxu0 0.0
        %5822 = vmatpush1.msra.mxu0 0.0
        %5823 = vmatprep.subr.mxu0 0.0
        %5824 = vmatpush1.msra.mxu0 0.0
        %5825 = vmatprep.subr.mxu0 0.0
        %5826 = vmatpush1.msra.mxu0 0.0
        %5827 = vmatprep.subr.mxu0 0.0
        %5828 = vmatpush1.msra.mxu0 0.0
        %5829 = vmatprep.subr.mxu0 0.0
        %5830 = vmatpush1.msra.mxu0 0.0
        %5831 = vmatprep.subr.mxu0 0.0
        %5832 = vmatpush1.msra.mxu0 0.0
        %5833 = vmatprep.subr.mxu0 0.0
        %5834 = vmatpush1.msra.mxu0 0.0
        %5835 = vmatprep.subr.mxu0 0.0
        %5836 = vmatpush1.msra.mxu0 0.0
        %5837 = vmatprep.subr.mxu0 0.0
        %5838 = vmatpush1.msra.mxu0 0.0
        %5839 = vmatprep.mubr.f32.mxu0 0.0
        %5840 = vmatmul.mubr.f32.gmra.mrb[0].mxu0 %v5385
        %v5841 = vpop.f32.mrb[0].mxu0
        %v5842 = vadd.f32 %v5377, %v5841
        %v5843 = vpop.f32.mrb[0].mxu0
        %v5844 = vadd.f32 %v5377, %v5843
        %5845 = vmatprep.mubr.f32.mxu0 0.0
        %5846 = vmatmul.mubr.f32.gmra.mrb[0].mxu0 %v5388
        %v5847 = vpop.f32.mrb[0].mxu0
        %v5848 = vadd.f32 %v5382, %v5847
        %v5849 = vpop.f32.mrb[0].mxu0
        %v5850 = vadd.f32 %v5382, %v5849
        %5851 = vdwg.mxu0
        %5852 = vmatprep.subr.mxu0 %v5349
        %5853 = vmatpush1.msra.mxu0 %v5348
        %5854 = vmatprep.subr.mxu0 %v5365
        %5855 = vmatpush1.msra.mxu0 %v5364
        %5856 = vmatprep.subr.mxu0 0.0
        %5857 = vmatpush1.msra.mxu0 0.0
        %5858 = vmatprep.subr.mxu0 0.0
        %5859 = vmatpush1.msra.mxu0 0.0
        %5860 = vmatprep.subr.mxu0 0.0
        %5861 = vmatpush1.msra.mxu0 0.0
        %5862 = vmatprep.subr.mxu0 0.0
        %5863 = vmatpush1.msra.mxu0 0.0
        %5864 = vmatprep.subr.mxu0 0.0
        %5865 = vmatpush1.msra.mxu0 0.0
        %5866 = vmatprep.subr.mxu0 0.0
        %5867 = vmatpush1.msra.mxu0 0.0
        %5868 = vmatprep.subr.mxu0 0.0
        %5869 = vmatpush1.msra.mxu0 0.0
        %5870 = vmatprep.subr.mxu0 0.0
        %5871 = vmatpush1.msra.mxu0 0.0
        %5872 = vmatprep.subr.mxu0 0.0
        %5873 = vmatpush1.msra.mxu0 0.0
        %5874 = vmatprep.subr.mxu0 0.0
        %5875 = vmatpush1.msra.mxu0 0.0
        %5876 = vmatprep.subr.mxu0 0.0
        %5877 = vmatpush1.msra.mxu0 0.0
        %5878 = vmatprep.subr.mxu0 0.0
        %5879 = vmatpush1.msra.mxu0 0.0
        %5880 = vmatprep.subr.mxu0 0.0
        %5881 = vmatpush1.msra.mxu0 0.0
        %5882 = vmatprep.subr.mxu0 0.0
        %5883 = vmatpush1.msra.mxu0 0.0
        %5884 = vmatprep.subr.mxu0 0.0
        %5885 = vmatpush1.msra.mxu0 0.0
        %5886 = vmatprep.subr.mxu0 0.0
        %5887 = vmatpush1.msra.mxu0 0.0
        %5888 = vmatprep.subr.mxu0 0.0
        %5889 = vmatpush1.msra.mxu0 0.0
        %5890 = vmatprep.subr.mxu0 0.0
        %5891 = vmatpush1.msra.mxu0 0.0
        %5892 = vmatprep.subr.mxu0 0.0
        %5893 = vmatpush1.msra.mxu0 0.0
        %5894 = vmatprep.subr.mxu0 0.0
        %5895 = vmatpush1.msra.mxu0 0.0
        %5896 = vmatprep.subr.mxu0 0.0
        %5897 = vmatpush1.msra.mxu0 0.0
        %5898 = vmatprep.subr.mxu0 0.0
        %5899 = vmatpush1.msra.mxu0 0.0
        %5900 = vmatprep.subr.mxu0 0.0
        %5901 = vmatpush1.msra.mxu0 0.0
        %5902 = vmatprep.subr.mxu0 0.0
        %5903 = vmatpush1.msra.mxu0 0.0
        %5904 = vmatprep.subr.mxu0 0.0
        %5905 = vmatpush1.msra.mxu0 0.0
        %5906 = vmatprep.subr.mxu0 0.0
        %5907 = vmatpush1.msra.mxu0 0.0
        %5908 = vmatprep.subr.mxu0 0.0
        %5909 = vmatpush1.msra.mxu0 0.0
        %5910 = vmatprep.subr.mxu0 0.0
        %5911 = vmatpush1.msra.mxu0 0.0
        %5912 = vmatprep.subr.mxu0 0.0
        %5913 = vmatpush1.msra.mxu0 0.0
        %5914 = vmatprep.subr.mxu0 0.0
        %5915 = vmatpush1.msra.mxu0 0.0
        %5916 = vmatprep.mubr.f32.mxu0 0.0
        %5917 = vmatmul.mubr.f32.gmra.mrb[0].mxu0 %v5385
        %v5918 = vpop.f32.mrb[0].mxu0
        %v5919 = vadd.f32 %v5377, %v5918
        %v5920 = vpop.f32.mrb[0].mxu0
        %v5921 = vadd.f32 %v5377, %v5920
        %5922 = vmatprep.mubr.f32.mxu0 0.0
        %5923 = vmatmul.mubr.f32.gmra.mrb[0].mxu0 %v5388
        %v5924 = vpop.f32.mrb[0].mxu0
        %v5925 = vadd.f32 %v5382, %v5924
        %v5926 = vpop.f32.mrb[0].mxu0
        %v5927 = vadd.f32 %v5382, %v5926
        %5928 = vdwg.mxu0
        %5929 = vmatprep.subr.mxu0 %v5351
        %5930 = vmatpush1.msra.mxu0 %v5350
        %5931 = vmatprep.subr.mxu0 %v5367
        %5932 = vmatpush1.msra.mxu0 %v5366
        %5933 = vmatprep.subr.mxu0 0.0
        %5934 = vmatpush1.msra.mxu0 0.0
        %5935 = vmatprep.subr.mxu0 0.0
        %5936 = vmatpush1.msra.mxu0 0.0
        %5937 = vmatprep.subr.mxu0 0.0
        %5938 = vmatpush1.msra.mxu0 0.0
        %5939 = vmatprep.subr.mxu0 0.0
        %5940 = vmatpush1.msra.mxu0 0.0
        %5941 = vmatprep.subr.mxu0 0.0
        %5942 = vmatpush1.msra.mxu0 0.0
        %5943 = vmatprep.subr.mxu0 0.0
        %5944 = vmatpush1.msra.mxu0 0.0
        %5945 = vmatprep.subr.mxu0 0.0
        %5946 = vmatpush1.msra.mxu0 0.0
        %5947 = vmatprep.subr.mxu0 0.0
        %5948 = vmatpush1.msra.mxu0 0.0
        %5949 = vmatprep.subr.mxu0 0.0
        %5950 = vmatpush1.msra.mxu0 0.0
        %5951 = vmatprep.subr.mxu0 0.0
        %5952 = vmatpush1.msra.mxu0 0.0
        %5953 = vmatprep.subr.mxu0 0.0
        %5954 = vmatpush1.msra.mxu0 0.0
        %5955 = vmatprep.subr.mxu0 0.0
        %5956 = vmatpush1.msra.mxu0 0.0
        %5957 = vmatprep.subr.mxu0 0.0
        %5958 = vmatpush1.msra.mxu0 0.0
        %5959 = vmatprep.subr.mxu0 0.0
        %5960 = vmatpush1.msra.mxu0 0.0
        %5961 = vmatprep.subr.mxu0 0.0
        %5962 = vmatpush1.msra.mxu0 0.0
        %5963 = vmatprep.subr.mxu0 0.0
        %5964 = vmatpush1.msra.mxu0 0.0
        %5965 = vmatprep.subr.mxu0 0.0
        %5966 = vmatpush1.msra.mxu0 0.0
        %5967 = vmatprep.subr.mxu0 0.0
        %5968 = vmatpush1.msra.mxu0 0.0
        %5969 = vmatprep.subr.mxu0 0.0
        %5970 = vmatpush1.msra.mxu0 0.0
        %5971 = vmatprep.subr.mxu0 0.0
        %5972 = vmatpush1.msra.mxu0 0.0
        %5973 = vmatprep.subr.mxu0 0.0
        %5974 = vmatpush1.msra.mxu0 0.0
        %5975 = vmatprep.subr.mxu0 0.0
        %5976 = vmatpush1.msra.mxu0 0.0
        %5977 = vmatprep.subr.mxu0 0.0
        %5978 = vmatpush1.msra.mxu0 0.0
        %5979 = vmatprep.subr.mxu0 0.0
        %5980 = vmatpush1.msra.mxu0 0.0
        %5981 = vmatprep.subr.mxu0 0.0
        %5982 = vmatpush1.msra.mxu0 0.0
        %5983 = vmatprep.subr.mxu0 0.0
        %5984 = vmatpush1.msra.mxu0 0.0
        %5985 = vmatprep.subr.mxu0 0.0
        %5986 = vmatpush1.msra.mxu0 0.0
        %5987 = vmatprep.subr.mxu0 0.0
        %5988 = vmatpush1.msra.mxu0 0.0
        %5989 = vmatprep.subr.mxu0 0.0
        %5990 = vmatpush1.msra.mxu0 0.0
        %5991 = vmatprep.subr.mxu0 0.0
        %5992 = vmatpush1.msra.mxu0 0.0
        %5993 = vmatprep.mubr.f32.mxu0 0.0
        %5994 = vmatmul.mubr.f32.gmra.mrb[0].mxu0 %v5385
        %v5995 = vpop.f32.mrb[0].mxu0
        %v5996 = vadd.f32 %v5377, %v5995
        %v5997 = vpop.f32.mrb[0].mxu0
        %v5998 = vadd.f32 %v5377, %v5997
        %5999 = vmatprep.mubr.f32.mxu0 0.0
        %6000 = vmatmul.mubr.f32.gmra.mrb[0].mxu0 %v5388
        %v6001 = vpop.f32.mrb[0].mxu0
        %v6002 = vadd.f32 %v5382, %v6001
        %v6003 = vpop.f32.mrb[0].mxu0
        %v6004 = vadd.f32 %v5382, %v6003
        %6005 = vdwg.mxu0
        %6006 = vst [vmem:[%s215] sm:$0xff] %v5457
        %6007 = vst [vmem:[%s215 + $0x8] sm:$0xff] %v5459
        %6008 = vst [vmem:[%s215 + $0x10] sm:$0xff] %v5534
        %6009 = vst [vmem:[%s215 + $0x18] sm:$0xff] %v5536
        %6010 = vst [vmem:[%s215 + $0x20] sm:$0xff] %v5611
        %6011 = vst [vmem:[%s215 + $0x28] sm:$0xff] %v5613
        %6012 = vst [vmem:[%s215 + $0x30] sm:$0xff] %v5688
        %6013 = vst [vmem:[%s215 + $0x38] sm:$0xff] %v5690
        %6014 = vst [vmem:[%s215 + $0x40] sm:$0xff] %v5765
        %6015 = vst [vmem:[%s215 + $0x48] sm:$0xff] %v5767
        %6016 = vst [vmem:[%s215 + $0x50] sm:$0xff] %v5842
        %6017 = vst [vmem:[%s215 + $0x58] sm:$0xff] %v5844
        %6018 = vst [vmem:[%s215 + $0x60] sm:$0xff] %v5919
        %6019 = vst [vmem:[%s215 + $0x68] sm:$0xff] %v5921
        %6020 = vst [vmem:[%s215 + $0x70] sm:$0xff] %v5996
        %6021 = vst [vmem:[%s215 + $0x78] sm:$0xff] %v5998
        %6022 = vst [vmem:[%s215 + $0x80] sm:$0xf] %v5463
        %6023 = vst [vmem:[%s215 + $0x88] sm:$0xf] %v5465
        %6024 = vst [vmem:[%s215 + $0x90] sm:$0xf] %v5540
        %6025 = vst [vmem:[%s215 + $0x98] sm:$0xf] %v5542
        %6026 = vst [vmem:[%s215 + $0xa0] sm:$0xf] %v5617
        %6027 = vst [vmem:[%s215 + $0xa8] sm:$0xf] %v5619
        %6028 = vst [vmem:[%s215 + $0xb0] sm:$0xf] %v5694
        %6029 = vst [vmem:[%s215 + $0xb8] sm:$0xf] %v5696
        %6030 = vst [vmem:[%s215 + $0xc0] sm:$0xf] %v5771
        %6031 = vst [vmem:[%s215 + $0xc8] sm:$0xf] %v5773
        %6032 = vst [vmem:[%s215 + $0xd0] sm:$0xf] %v5848
        %6033 = vst [vmem:[%s215 + $0xd8] sm:$0xf] %v5850
        %6034 = vst [vmem:[%s215 + $0xe0] sm:$0xf] %v5925
        %6035 = vst [vmem:[%s215 + $0xe8] sm:$0xf] %v5927
        %6036 = vst [vmem:[%s215 + $0xf0] sm:$0xf] %v6002
        %6037 = vst [vmem:[%s215 + $0xf8] sm:$0xf] %v6004
        %s6038 = sand.u32 %s118, 1
        %s6039 = scalar_lea.sflag [#allocation4], %s6038
        %s6040 = sand.u32 %s118, 1
        %s6041 = smul.addr %s6040, 256
        %s6042 = scalar_lea.vmem [#allocation5], %s6041
        // Predicated region
        $region41: #{tpu_custom_call.1} parent=35 // pred_check
          %p6043 = pneg %p128
        $region42: #{tpu_custom_call.1} parent=35 // pred_check_branch
          %6045 = sbr.rel (%p6043) target = $region44
        $region43: #{tpu_custom_call.1} parent=35 // pred_region
          %s6046 = smul.u32 16, %s21
          %s6048 = ssub.s32 4096, 4096
          %6049 = vsyncadd %s6039, %s6048
          %s6050 = smul.addr %s6046, 128
          %s6051 = scalar_lea.hbm %s4, %s6050
          %s6052 = sshll.u32 %s6042, 4
          %s6053 = int_to_ptr.vmem [resolvable:$true] %s6052
          %6058 = dma.vmem_to_hbm [thread:$0]  %s6053, 4096, %s6051, %s6039, 2048, 4096, 128
        $region44: #{tpu_custom_call.1} parent=35 // pred_fallthru
          _
      $region36: #{tpu_custom_call.1} parent=5 // pred_fallthru
        _
      %p6059 = scmp.le.s32.totalorder 2, %s16
      // Predicated region
      $region45: #{tpu_custom_call.1} parent=5 // pred_check
        %p6060 = pneg %p6059
      $region46: #{tpu_custom_call.1} parent=5 // pred_check_branch
        %6062 = sbr.rel (%p6060) target = $region48
      $region47: #{tpu_custom_call.1} parent=5 // pred_region
        %s6063 = ssub.s32 %s16, 2
        // Predicated region
        $region49: #{tpu_custom_call.1} parent=47 // pred_check
          %p6064 = pneg %p134
        $region50: #{tpu_custom_call.1} parent=47 // pred_check_branch
          %6066 = sbr.rel (%p6064) target = $region52
        $region51: #{tpu_custom_call.1} parent=47 // pred_region
          %s6067 = sand.u32 %s119, 1
          %s6068 = scalar_lea.sflag [#allocation4], %s6067
          %s6069 = sand.u32 %s119, 1
          %s6070 = smul.addr %s6069, 256
          %s6071 = scalar_lea.vmem [#allocation5], %s6070
          %6072 = dma.done %s6068, 4096
        $region52: #{tpu_custom_call.1} parent=47 // pred_fallthru
          _
      $region48: #{tpu_custom_call.1} parent=5 // pred_fallthru
        _
    $region6: #{tpu_custom_call.1} parent=1 // loop_footer
      %s20 = sadd.s32 1, %s16
    $region7: #{tpu_custom_call.1} parent=1 // loop_footer_branch
      %15 = sbr.rel target = $region3
    $region8: #{tpu_custom_call.1} parent=1 // loop_exit
      _
    %6073 = vsyncpa [#allocation3], 1
    %s6074 = scalar_lea.sflag [#allocation3], 1
    %6075 = vsyncpa %s6074, 1
    %6076 = vsyncpa [#allocation4], 1
    %s6077 = scalar_lea.sflag [#allocation4], 1
    %6078 = vsyncpa %s6077, 1

</llo_original>
